<compile_context>
chip_gen: v7x
topology: tpu7x:2x2x1
jax: 0.10.0
libtpu: 0.0.40
codegen_flags: <defaults>
</compile_context>

<pallas_src>
import functools

import jax
import jax.numpy as jnp
from jax.experimental import pallas as pl
from jax.experimental.pallas import tpu as pltpu

EPS = 1e-5


# ----------------------------------------------------------------------------- kernels
def _conv1x1_stats_kernel(x_ref, w_ref, scale_ref, shift_ref, y_ref, st_ref,
                          *, in_relu, compute_dtype):
    """[BN(+ReLU) of input via scale/shift] -> 1x1 conv -> raw out tile + partial stats."""
    TB, W, Cin = x_ref.shape
    Cout = w_ref.shape[-1]
    x = x_ref[...].astype(jnp.float32) * scale_ref[...] + shift_ref[...]
    if in_relu:
        x = jnp.maximum(x, 0.0)
    xc = x.astype(compute_dtype).reshape(TB * W, Cin)
    y = jnp.dot(xc, w_ref[...], preferred_element_type=jnp.float32)       # (TB*W, Cout)
    y_q = y.astype(y_ref.dtype)                                           # storage rounding
    y_ref[...] = y_q.reshape(TB, W, Cout)
    ys = y_q.astype(jnp.float32)
    st_ref[...] = jnp.concatenate(
        [jnp.sum(ys, axis=0, keepdims=True),
         jnp.sum(ys * ys, axis=0, keepdims=True)], axis=0)[None]          # (1, 2, Cout)


def _conv3x3_stats_kernel(xp_ref, xc_ref, xn_ref, w_ref, scale_ref, shift_ref,
                          y_ref, st_ref, *, in_relu, compute_dtype, blocks_per_image):
    """[BN(+ReLU) of input] -> 3x3 conv (fused im2col: 9 accumulated dots) -> raw + stats.

    The 1-row halo comes from the neighbouring row blocks (xp/xn); halo rows are
    zeroed at image borders (spatial zero padding applies to the post-BN input).
    """
    TB, W, Cin = xc_ref.shape
    Cout = w_ref.shape[-1]
    i = pl.program_id(0)
    blk = i % blocks_per_image
    top_ok = blk != 0
    bot_ok = blk != (blocks_per_image - 1)

    scale = scale_ref[...]
    shift = shift_ref[...]
    top = xp_ref[TB - 1:TB, :, :].astype(jnp.float32) * scale + shift
    mid = xc_ref[...].astype(jnp.float32) * scale + shift
    bot = xn_ref[0:1, :, :].astype(jnp.float32) * scale + shift
    top = jnp.where(top_ok, top, 0.0)
    bot = jnp.where(bot_ok, bot, 0.0)
    slab = jnp.concatenate([top, mid, bot], axis=0)                       # (TB+2, W, Cin)
    if in_relu:
        slab = jnp.maximum(slab, 0.0)
    slab = slab.astype(compute_dtype)
    zcol = jnp.zeros((TB + 2, 1, Cin), compute_dtype)
    slab = jnp.concatenate([zcol, slab, zcol], axis=1)                    # (TB+2, W+2, Cin)

    acc = jnp.zeros((TB * W, Cout), jnp.float32)
    for dy in range(3):
        for dx in range(3):
            tap = slab[dy:dy + TB, dx:dx + W, :].reshape(TB * W, Cin)
            acc = acc + jnp.dot(tap, w_ref[dy * 3 + dx],
                                preferred_element_type=jnp.float32)
    y_q = acc.astype(y_ref.dtype)
    y_ref[...] = y_q.reshape(TB, W, Cout)
    ys = y_q.astype(jnp.float32)
    st_ref[...] = jnp.concatenate(
        [jnp.sum(ys, axis=0, keepdims=True),
         jnp.sum(ys * ys, axis=0, keepdims=True)], axis=0)[None]


def _bn_add_relu_kernel(y_ref, id_ref, sy_ref, by_ref, si_ref, bi_ref, o_ref):
    """bn3 + shortcut-BN + residual add + ReLU, fully fused / elementwise."""
    y = y_ref[...].astype(jnp.float32) * sy_ref[...] + by_ref[...]
    r = id_ref[...].astype(jnp.float32) * si_ref[...] + bi_ref[...]
    o_ref[...] = jnp.maximum(y + r, 0.0)


# ----------------------------------------------------------------------------- wrappers
_PARALLEL = pltpu.CompilerParams(dimension_semantics=("parallel",))


def _row_spec(tb, w, c):
    return pl.BlockSpec((tb, w, c), lambda i: (i, 0, 0))


def _const_spec(shape):
    n = len(shape)
    return pl.BlockSpec(shape, lambda i: (0,) * n)


def conv1x1_stats(x, w_mat, scale, shift, *, in_relu, out_dtype, block_rows):
    R, W, Cin = x.shape
    Cout = w_mat.shape[-1]
    TB = block_rows
    nb = R // TB
    kernel = functools.partial(_conv1x1_stats_kernel, in_relu=in_relu,
                               compute_dtype=w_mat.dtype)
    esize = jnp.dtype(out_dtype).itemsize
    cost = pl.CostEstimate(
        flops=2 * R * W * Cin * Cout, transcendentals=0,
        bytes_accessed=int(x.size * x.dtype.itemsize + w_mat.size * w_mat.dtype.itemsize
                           + R * W * Cout * esize + nb * 2 * Cout * 4))
    return pl.pallas_call(
        kernel,
        out_shape=(jax.ShapeDtypeStruct((R, W, Cout), out_dtype),
                   jax.ShapeDtypeStruct((nb, 2, Cout), jnp.float32)),
        grid=(nb,),
        in_specs=[_row_spec(TB, W, Cin),
                  _const_spec((Cin, Cout)),
                  _const_spec((1, 1, Cin)),
                  _const_spec((1, 1, Cin))],
        out_specs=(_row_spec(TB, W, Cout),
                   pl.BlockSpec((1, 2, Cout), lambda i: (i, 0, 0))),
        compiler_params=_PARALLEL,
        cost_estimate=cost,
    )(x, w_mat, scale, shift)


def conv3x3_stats(x, w_taps, scale, shift, *, in_relu, out_dtype, block_rows,
                  blocks_per_image):
    R, W, Cin = x.shape
    Cout = w_taps.shape[-1]
    TB = block_rows
    nb = R // TB
    kernel = functools.partial(_conv3x3_stats_kernel, in_relu=in_relu,
                               compute_dtype=w_taps.dtype,
                               blocks_per_image=blocks_per_image)
    esize = jnp.dtype(out_dtype).itemsize
    cost = pl.CostEstimate(
        flops=2 * 9 * R * W * Cin * Cout, transcendentals=0,
        bytes_accessed=int(3 * x.size * x.dtype.itemsize
                           + w_taps.size * w_taps.dtype.itemsize
                           + R * W * Cout * esize + nb * 2 * Cout * 4))
    prev_spec = pl.BlockSpec((TB, W, Cin), lambda i: (jnp.maximum(i - 1, 0), 0, 0))
    next_spec = pl.BlockSpec((TB, W, Cin), lambda i: (jnp.minimum(i + 1, nb - 1), 0, 0))
    return pl.pallas_call(
        kernel,
        out_shape=(jax.ShapeDtypeStruct((R, W, Cout), out_dtype),
                   jax.ShapeDtypeStruct((nb, 2, Cout), jnp.float32)),
        grid=(nb,),
        in_specs=[prev_spec,
                  _row_spec(TB, W, Cin),
                  next_spec,
                  _const_spec((9, Cin, Cout)),
                  _const_spec((1, 1, Cin)),
                  _const_spec((1, 1, Cin))],
        out_specs=(_row_spec(TB, W, Cout),
                   pl.BlockSpec((1, 2, Cout), lambda i: (i, 0, 0))),
        compiler_params=_PARALLEL,
        cost_estimate=cost,
    )(x, x, x, w_taps, scale, shift)


def bn_add_relu(y, sy, by, idn, si, bi, *, block_rows):
    R, W, C = y.shape
    TB = block_rows
    nb = R // TB
    cost = pl.CostEstimate(
        flops=6 * R * W * C, transcendentals=0,
        bytes_accessed=int(y.size * y.dtype.itemsize + idn.size * idn.dtype.itemsize
                           + R * W * C * 4))
    return pl.pallas_call(
        _bn_add_relu_kernel,
        out_shape=jax.ShapeDtypeStruct((R, W, C), jnp.float32),
        grid=(nb,),
        in_specs=[_row_spec(TB, W, C),
                  _row_spec(TB, W, C),
                  _const_spec((1, 1, C)),
                  _const_spec((1, 1, C)),
                  _const_spec((1, 1, C)),
                  _const_spec((1, 1, C))],
        out_specs=_row_spec(TB, W, C),
        compiler_params=_PARALLEL,
        cost_estimate=cost,
    )(y, idn, sy, by, si, bi)


# ----------------------------------------------------------------------------- JAX glue
def _w1x1(w, dtype):             # (Cout, Cin, 1, 1) -> (Cin, Cout)
    return jnp.transpose(w[:, :, 0, 0], (1, 0)).astype(dtype)


def _w3x3(w, dtype):             # (Cout, Cin, 3, 3) -> (9, Cin, Cout), tap = kh*3+kw
    cout, cin = w.shape[0], w.shape[1]
    return jnp.transpose(w, (2, 3, 1, 0)).reshape(9, cin, cout).astype(dtype)


def _finalize_stats(st, count, gamma, beta, group=1):
    """(num_tiles, 2, Craw) partial sums -> fused BN (scale, shift) of shape (1,1,C)."""
    tot = jnp.sum(st, axis=0)                       # (2, Craw)
    s, ss = tot[0], tot[1]
    if group > 1:                                   # PixelShuffle: fold r*r raw channels
        s = s.reshape(-1, group).sum(axis=-1)
        ss = ss.reshape(-1, group).sum(axis=-1)
    mean = s / count
    var = ss / count - mean * mean                  # biased (train-mode BN)
    scale = gamma.astype(jnp.float32) * jax.lax.rsqrt(var + EPS)
    shift = beta.astype(jnp.float32) - mean * scale
    c = scale.shape[0]
    return scale.reshape(1, 1, c), shift.reshape(1, 1, c)


def _pixel_shuffle_rows(y, N, H, W, C):
    # (N*H, W, 4*C) -> (N*2H, 2W, C), PyTorch PixelShuffle(2) channel ordering.
    t = y.reshape(N, H, W, C, 2, 2)
    t = jnp.transpose(t, (0, 1, 4, 2, 5, 3))
    return t.reshape(N * 2 * H, 2 * W, C)


def _auto_block_rows(H, W):
    tb = 1
    for cand in range(1, H + 1):
        if H % cand == 0 and cand * W <= 4096:      # conservative VMEM tile budget
            tb = cand
    return tb


# ----------------------------------------------------------------------------- forward
def bottleneck_decoder_forward(x_nchw, p, upscale, *, compute_dtype=jnp.float32,
                               block_rows=None):
    """Pallas implementation of BottleneckDecoder.forward (training-mode BN)."""
    f32 = jnp.float32
    cdt = compute_dtype
    x = jnp.transpose(x_nchw, (0, 2, 3, 1)).astype(f32)                  # NHWC
    N, H, W, cin = x.shape
    cout = p["conv3"].shape[0]
    TB = block_rows if block_rows is not None else _auto_block_rows(H, W)
    assert H % TB == 0, "block_rows must divide H"

    x0 = x.astype(cdt).reshape(N * H, W, cin)
    one_in = jnp.ones((1, 1, cin), f32)
    zero_in = jnp.zeros((1, 1, cin), f32)

    if upscale:
        # shortcut: 1x1 conv -> PixelShuffle(2) -> BN (applied inside the final kernel)
        ysc, st_sc = conv1x1_stats(x0, _w1x1(p["sc_conv"], cdt), one_in, zero_in,
                                   in_relu=False, out_dtype=cdt, block_rows=TB)
        identity = _pixel_shuffle_rows(ysc, N, H, W, cout)
        s_id, b_id = _finalize_stats(st_sc, 4 * N * H * W,
                                     p["sc_bn_g"], p["sc_bn_b"], group=4)
        # upsample: 3x3 conv -> PixelShuffle(2) -> BN+ReLU (fused into conv1)
        yu, st_u = conv3x3_stats(x0, _w3x3(p["up_conv"], cdt), one_in, zero_in,
                                 in_relu=False, out_dtype=cdt, block_rows=TB,
                                 blocks_per_image=H // TB)
        cur = _pixel_shuffle_rows(yu, N, H, W, cin)
        s_in, b_in = _finalize_stats(st_u, 4 * N * H * W,
                                     p["up_bn_g"], p["up_bn_b"], group=4)
        pre_relu = True
        curH, curW = 2 * H, 2 * W
    elif "sc_conv" in p:
        ysc, st_sc = conv1x1_stats(x0, _w1x1(p["sc_conv"], cdt), one_in, zero_in,
                                   in_relu=False, out_dtype=cdt, block_rows=TB)
        identity = ysc
        s_id, b_id = _finalize_stats(st_sc, N * H * W, p["sc_bn_g"], p["sc_bn_b"])
        cur, s_in, b_in, pre_relu = x0, one_in, zero_in, False
        curH, curW = H, W
    else:
        identity = x0                                                    # cin == cout
        s_id = jnp.ones((1, 1, cout), f32)
        b_id = jnp.zeros((1, 1, cout), f32)
        cur, s_in, b_in, pre_relu = x0, one_in, zero_in, False
        curH, curW = H, W

    M = N * curH * curW
    bpi = curH // TB

    # conv1 (1x1) -- also applies the upsample-branch BN+ReLU (if any) on the fly
    y1, st1 = conv1x1_stats(cur, _w1x1(p["conv1"], cdt), s_in, b_in,
                            in_relu=pre_relu, out_dtype=cdt, block_rows=TB)
    s1, b1 = _finalize_stats(st1, M, p["bn1_g"], p["bn1_b"])
    # conv2 (3x3, pad=1) -- applies bn1+relu, fused im2col with halo row blocks
    y2, st2 = conv3x3_stats(y1, _w3x3(p["conv2"], cdt), s1, b1,
                            in_relu=True, out_dtype=cdt, block_rows=TB,
                            blocks_per_image=bpi)
    s2, b2 = _finalize_stats(st2, M, p["bn2_g"], p["bn2_b"])
    # conv3 (1x1) -- applies bn2+relu
    y3, st3 = conv1x1_stats(y2, _w1x1(p["conv3"], cdt), s2, b2,
                            in_relu=True, out_dtype=cdt, block_rows=TB)
    s3, b3 = _finalize_stats(st3, M, p["bn3_g"], p["bn3_b"])
    # bn3 + shortcut-BN + residual add + relu, fused
    out = bn_add_relu(y3, s3, b3, identity, s_id, b_id, block_rows=TB)
    out = out.reshape(N, curH, curW, cout)
    return jnp.transpose(out, (0, 3, 1, 2))                              # back to NCHW


# ----------------------------------------------------------------------------- reference
def pixel_shuffle_nchw(x, r=2):
    N, C, H, W = x.shape
    c = C // (r * r)
    x = x.reshape(N, c, r, r, H, W)
    x = jnp.transpose(x, (0, 1, 4, 2, 5, 3))
    return x.reshape(N, c, H * r, W * r)


def reference_forward(x, p, upscale, compute_dtype=jnp.float32):
    """Dtype-faithful reference: conv inputs/weights cast to compute_dtype, f32 accum,
    conv outputs rounded to compute_dtype (models the stored raw activations)."""
    f32 = jnp.float32
    cdt = compute_dtype

    def conv(v, w, pad):
        y = jax.lax.conv_general_dilated(
            v.astype(cdt), w.astype(cdt), (1, 1), [(pad, pad), (pad, pad)],
            dimension_numbers=("NCHW", "OIHW", "NCHW"),
            preferred_element_type=f32)
        return y.astype(cdt).astype(f32)

    def bn(v, g, b):
        mean = jnp.mean(v, axis=(0, 2, 3), keepdims=True)
        var = jnp.mean((v - mean) ** 2, axis=(0, 2, 3), keepdims=True)
        return ((v - mean) * jax.lax.rsqrt(var + EPS) * g.reshape(1, -1, 1, 1)
                + b.reshape(1, -1, 1, 1))

    relu = lambda v: jnp.maximum(v, 0.0)
    if upscale:
        identity = bn(pixel_shuffle_nchw(conv(x, p["sc_conv"], 0), 2),
                      p["sc_bn_g"], p["sc_bn_b"])
        h = relu(bn(pixel_shuffle_nchw(conv(x, p["up_conv"], 1), 2),
                    p["up_bn_g"], p["up_bn_b"]))
    elif "sc_conv" in p:
        identity = bn(conv(x, p["sc_conv"], 0), p["sc_bn_g"], p["sc_bn_b"])
        h = x
    else:
        identity = x.astype(cdt).astype(f32)
        h = x
    h = relu(bn(conv(h, p["conv1"], 0), p["bn1_g"], p["bn1_b"]))
    h = relu(bn(conv(h, p["conv2"], 1), p["bn2_g"], p["bn2_b"]))
    h = bn(conv(h, p["conv3"], 0), p["bn3_g"], p["bn3_b"])
    return relu(h + identity)


# ----------------------------------------------------------------------------- params
def init_params(key, cin, cmid, cout, upscale):
    ks = iter(jax.random.split(key, 16))

    def conv_w(k, co, ci, kh, kw):
        fan = ci * kh * kw
        return jax.random.normal(k, (co, ci, kh, kw), jnp.float32) / jnp.sqrt(float(fan))

    def bn_params(k, c):
        k1, k2 = jax.random.split(k)
        g = 1.0 + 0.1 * jax.random.normal(k1, (c,), jnp.float32)
        b = 0.1 * jax.random.normal(k2, (c,), jnp.float32)
        return g, b

    p = {}
    p["conv1"] = conv_w(next(ks), cmid, cin, 1, 1)
    p["bn1_g"], p["bn1_b"] = bn_params(next(ks), cmid)
    p["conv2"] = conv_w(next(ks), cmid, cmid, 3, 3)
    p["bn2_g"], p["bn2_b"] = bn_params(next(ks), cmid)
    p["conv3"] = conv_w(next(ks), cout, cmid, 1, 1)
    p["bn3_g"], p["bn3_b"] = bn_params(next(ks), cout)
    if upscale:
        p["up_conv"] = conv_w(next(ks), cin * 4, cin, 3, 3)
        p["up_bn_g"], p["up_bn_b"] = bn_params(next(ks), cin)
        p["sc_conv"] = conv_w(next(ks), cout * 4, cin, 1, 1)
        p["sc_bn_g"], p["sc_bn_b"] = bn_params(next(ks), cout)
    elif cin != cout:
        p["sc_conv"] = conv_w(next(ks), cout, cin, 1, 1)
        p["sc_bn_g"], p["sc_bn_b"] = bn_params(next(ks), cout)
    return p


# ----------------------------------------------------------------------------- main
if __name__ == "__main__":
    k_x, k_p0, k_p1 = jax.random.split(jax.random.PRNGKey(0), 3)
    x = jax.random.normal(k_x, (2, 4, 16, 16), jnp.float32)

    # config 1: no upscale, in_channels != out_channels (conv shortcut); f32 compute.
    p0 = init_params(k_p0, cin=4, cmid=8, cout=8, upscale=False)
    fwd0 = jax.jit(functools.partial(bottleneck_decoder_forward, upscale=False,
                                     compute_dtype=jnp.float32, block_rows=8))
    out0 = jax.block_until_ready(fwd0(x, p0))
    ref0 = reference_forward(x, p0, upscale=False, compute_dtype=jnp.float32)
    assert out0.shape == (2, 8, 16, 16)
    err0 = float(jnp.max(jnp.abs(out0 - ref0)))
    assert err0 < 3e-3, f"f32 config mismatch: {err0}"

    # config 2: upscale (conv + PixelShuffle(2) in both paths); bf16 matmul/storage,
    # f32 accumulation & BN stats.  Looser tolerance: bf16 re-rounding of stored
    # activations can differ by one ulp between implementations.
    p1 = init_params(k_p1, cin=4, cmid=8, cout=4, upscale=True)
    fwd1 = jax.jit(functools.partial(bottleneck_decoder_forward, upscale=True,
                                     compute_dtype=jnp.bfloat16, block_rows=8))
    out1 = jax.block_until_ready(fwd1(x, p1))
    ref1 = reference_forward(x, p1, upscale=True, compute_dtype=jnp.bfloat16)
    assert out1.shape == (2, 4, 32, 32)
    err1 = float(jnp.max(jnp.abs(out1 - ref1)))
    assert err1 < 5e-2, f"bf16 config mismatch: {err1}"

    print("KERNEL_OK")
</pallas_src>

<mosaic_0001>
module attributes {stable_mosaic.version = 11 : i64} {
  func.func @_conv1x1_stats_kernel(%arg0: i32, %arg1: memref<8x16x4xf32, #tpu.memory_space<vmem>>, %arg2: memref<4x8xf32, #tpu.memory_space<vmem>>, %arg3: memref<1x1x4xf32, #tpu.memory_space<vmem>>, %arg4: memref<1x1x4xf32, #tpu.memory_space<vmem>>, %arg5: memref<8x16x8xf32, #tpu.memory_space<vmem>>, %arg6: memref<1x2x8xf32, #tpu.memory_space<vmem>>) attributes {dimension_semantics = [#tpu.dimension_semantics<parallel>], iteration_bounds = array<i64: 4>, scalar_prefetch = 0 : i64, scratch_operands = 0 : i64, tpu.core_type = #tpu.core_type<tc>, window_params = [{transform_indices = @transform_0, window_bounds = array<i64: 8, 16, 4>}, {pipeline_mode = #tpu.pipeline_mode<synchronous>, transform_indices = @transform_1, window_bounds = array<i64: 4, 8>}, {pipeline_mode = #tpu.pipeline_mode<synchronous>, transform_indices = @transform_2, window_bounds = array<i64: 1, 1, 4>}, {pipeline_mode = #tpu.pipeline_mode<synchronous>, transform_indices = @transform_3, window_bounds = array<i64: 1, 1, 4>}, {transform_indices = @transform_4, window_bounds = array<i64: 8, 16, 8>}, {transform_indices = @transform_5, window_bounds = array<i64: 1, 2, 8>}]} {
    %c0 = arith.constant 0 : index
    %c0_0 = arith.constant 0 : index
    %c0_1 = arith.constant 0 : index
    %0 = vector.load %arg1[%c0, %c0_0, %c0_1] : memref<8x16x4xf32, #tpu.memory_space<vmem>>, vector<8x16x4xf32>
    %c0_2 = arith.constant 0 : index
    %c0_3 = arith.constant 0 : index
    %c0_4 = arith.constant 0 : index
    %1 = vector.load %arg3[%c0_2, %c0_3, %c0_4] : memref<1x1x4xf32, #tpu.memory_space<vmem>>, vector<1x1x4xf32>
    %2 = vector.broadcast %1 : vector<1x1x4xf32> to vector<8x16x4xf32>
    %3 = arith.mulf %0, %2 : vector<8x16x4xf32>
    %c0_5 = arith.constant 0 : index
    %c0_6 = arith.constant 0 : index
    %c0_7 = arith.constant 0 : index
    %4 = vector.load %arg4[%c0_5, %c0_6, %c0_7] : memref<1x1x4xf32, #tpu.memory_space<vmem>>, vector<1x1x4xf32>
    %5 = vector.broadcast %4 : vector<1x1x4xf32> to vector<8x16x4xf32>
    %6 = arith.addf %3, %5 : vector<8x16x4xf32>
    %7 = vector.shape_cast %6 : vector<8x16x4xf32> to vector<128x4xf32>
    %c0_8 = arith.constant 0 : index
    %c0_9 = arith.constant 0 : index
    %8 = vector.load %arg2[%c0_8, %c0_9] : memref<4x8xf32, #tpu.memory_space<vmem>>, vector<4x8xf32>
    %cst = arith.constant dense<0.000000e+00> : vector<128x8xf32>
    %9 = tpu.matmul %7, %8, %cst {dimension_numbers = #tpu.dot_dimension_numbers<[1], [0], [0], [1], [0, 0, 1, 1], [], []>} : vector<128x4xf32>, vector<4x8xf32>, vector<128x8xf32> -> vector<128x8xf32>
    %10 = vector.shape_cast %9 : vector<128x8xf32> to vector<8x16x8xf32>
    %c0_10 = arith.constant 0 : index
    %c0_11 = arith.constant 0 : index
    %c0_12 = arith.constant 0 : index
    %11 = vector.load %arg5[%c0_10, %c0_11, %c0_12] : memref<8x16x8xf32, #tpu.memory_space<vmem>>, vector<8x16x8xf32>
    tpu.vector_store %arg5[%c0_10, %c0_11, %c0_12], %10 {strides = array<i32>} : memref<8x16x8xf32, #tpu.memory_space<vmem>>, vector<8x16x8xf32>,
    %cst_13 = arith.constant dense<0.000000e+00> : vector<8xf32>
    %12 = vector.multi_reduction <add>, %9, %cst_13 [0] : vector<128x8xf32> to vector<8xf32>
    %13 = vector.shape_cast %12 : vector<8xf32> to vector<1x8xf32>
    %14 = arith.mulf %9, %9 : vector<128x8xf32>
    %cst_14 = arith.constant dense<0.000000e+00> : vector<8xf32>
    %15 = vector.multi_reduction <add>, %14, %cst_14 [0] : vector<128x8xf32> to vector<8xf32>
    %16 = vector.shape_cast %15 : vector<8xf32> to vector<1x8xf32>
    %17 = tpu.concatenate %13, %16 in 0 : vector<1x8xf32>, vector<1x8xf32> -> vector<2x8xf32>
    %18 = vector.shape_cast %17 : vector<2x8xf32> to vector<1x2x8xf32>
    %c0_15 = arith.constant 0 : index
    %c0_16 = arith.constant 0 : index
    %c0_17 = arith.constant 0 : index
    %19 = vector.load %arg6[%c0_15, %c0_16, %c0_17] : memref<1x2x8xf32, #tpu.memory_space<vmem>>, vector<1x2x8xf32>
    tpu.vector_store %arg6[%c0_15, %c0_16, %c0_17], %18 {strides = array<i32>} : memref<1x2x8xf32, #tpu.memory_space<vmem>>, vector<1x2x8xf32>,
    return
  }
  func.func @transform_0(%arg0: i32) -> (i32, i32, i32) {
    %c0_i32 = arith.constant 0 : i32
    %c0_i32_0 = arith.constant 0 : i32
    %c0_i32_1 = arith.constant 0 : i32
    return %arg0, %c0_i32, %c0_i32_0 : i32, i32, i32
  }
  func.func @transform_1(%arg0: i32) -> (i32, i32) {
    %c0_i32 = arith.constant 0 : i32
    %c0_i32_0 = arith.constant 0 : i32
    %c0_i32_1 = arith.constant 0 : i32
    return %c0_i32, %c0_i32_0 : i32, i32
  }
  func.func @transform_2(%arg0: i32) -> (i32, i32, i32) {
    %c0_i32 = arith.constant 0 : i32
    %c0_i32_0 = arith.constant 0 : i32
    %c0_i32_1 = arith.constant 0 : i32
    %c0_i32_2 = arith.constant 0 : i32
    return %c0_i32, %c0_i32_0, %c0_i32_1 : i32, i32, i32
  }
  func.func @transform_3(%arg0: i32) -> (i32, i32, i32) {
    %c0_i32 = arith.constant 0 : i32
    %c0_i32_0 = arith.constant 0 : i32
    %c0_i32_1 = arith.constant 0 : i32
    %c0_i32_2 = arith.constant 0 : i32
    return %c0_i32, %c0_i32_0, %c0_i32_1 : i32, i32, i32
  }
  func.func @transform_4(%arg0: i32) -> (i32, i32, i32) {
    %c0_i32 = arith.constant 0 : i32
    %c0_i32_0 = arith.constant 0 : i32
    %c0_i32_1 = arith.constant 0 : i32
    return %arg0, %c0_i32, %c0_i32_0 : i32, i32, i32
  }
  func.func @transform_5(%arg0: i32) -> (i32, i32, i32) {
    %c0_i32 = arith.constant 0 : i32
    %c0_i32_0 = arith.constant 0 : i32
    %c0_i32_1 = arith.constant 0 : i32
    return %arg0, %c0_i32, %c0_i32_0 : i32, i32, i32
  }
}

module attributes {stable_mosaic.version = 11 : i64} {
  func.func @_conv3x3_stats_kernel(%arg0: i32, %arg1: memref<8x16x8xf32, #tpu.memory_space<vmem>>, %arg2: memref<8x16x8xf32, #tpu.memory_space<vmem>>, %arg3: memref<8x16x8xf32, #tpu.memory_space<vmem>>, %arg4: memref<9x8x8xf32, #tpu.memory_space<vmem>>, %arg5: memref<1x1x8xf32, #tpu.memory_space<vmem>>, %arg6: memref<1x1x8xf32, #tpu.memory_space<vmem>>, %arg7: memref<8x16x8xf32, #tpu.memory_space<vmem>>, %arg8: memref<1x2x8xf32, #tpu.memory_space<vmem>>) attributes {dimension_semantics = [#tpu.dimension_semantics<parallel>], iteration_bounds = array<i64: 4>, scalar_prefetch = 0 : i64, scratch_operands = 0 : i64, tpu.core_type = #tpu.core_type<tc>, window_params = [{transform_indices = @transform_0, window_bounds = array<i64: 8, 16, 8>}, {transform_indices = @transform_1, window_bounds = array<i64: 8, 16, 8>}, {transform_indices = @transform_2, window_bounds = array<i64: 8, 16, 8>}, {pipeline_mode = #tpu.pipeline_mode<synchronous>, transform_indices = @transform_3, window_bounds = array<i64: 9, 8, 8>}, {pipeline_mode = #tpu.pipeline_mode<synchronous>, transform_indices = @transform_4, window_bounds = array<i64: 1, 1, 8>}, {pipeline_mode = #tpu.pipeline_mode<synchronous>, transform_indices = @transform_5, window_bounds = array<i64: 1, 1, 8>}, {transform_indices = @transform_6, window_bounds = array<i64: 8, 16, 8>}, {transform_indices = @transform_7, window_bounds = array<i64: 1, 2, 8>}]} {
    %c2_i32 = arith.constant 2 : i32
    %c0_i32 = arith.constant 0 : i32
    %0 = arith.cmpi eq, %c2_i32, %c0_i32 : i32
    %c1_i32 = arith.constant 1 : i32
    %1 = arith.select %0, %c1_i32, %c2_i32 : i32
    %2 = arith.remsi %arg0, %1 : i32
    %c0_i32_0 = arith.constant 0 : i32
    %3 = arith.cmpi ne, %2, %c0_i32_0 : i32
    %c0_i32_1 = arith.constant 0 : i32
    %4 = arith.cmpi slt, %2, %c0_i32_1 : i32
    %c0_i32_2 = arith.constant 0 : i32
    %5 = arith.cmpi slt, %1, %c0_i32_2 : i32
    %6 = arith.xori %4, %5 : i1
    %7 = arith.andi %6, %3 : i1
    %8 = arith.addi %2, %1 : i32
    %9 = arith.select %7, %8, %2 : i32
    %c0_i32_3 = arith.constant 0 : i32
    %10 = arith.cmpi ne, %9, %c0_i32_3 : i32
    %c1_i32_4 = arith.constant 1 : i32
    %11 = arith.cmpi ne, %9, %c1_i32_4 : i32
    %c0 = arith.constant 0 : index
    %c0_5 = arith.constant 0 : index
    %c0_6 = arith.constant 0 : index
    %12 = vector.load %arg5[%c0, %c0_5, %c0_6] : memref<1x1x8xf32, #tpu.memory_space<vmem>>, vector<1x1x8xf32>
    %c0_7 = arith.constant 0 : index
    %c0_8 = arith.constant 0 : index
    %c0_9 = arith.constant 0 : index
    %13 = vector.load %arg6[%c0_7, %c0_8, %c0_9] : memref<1x1x8xf32, #tpu.memory_space<vmem>>, vector<1x1x8xf32>
    %c7 = arith.constant 7 : index
    %c0_10 = arith.constant 0 : index
    %c0_11 = arith.constant 0 : index
    %14 = vector.load %arg1[%c7, %c0_10, %c0_11] : memref<8x16x8xf32, #tpu.memory_space<vmem>>, vector<1x16x8xf32>
    %15 = vector.broadcast %12 : vector<1x1x8xf32> to vector<1x16x8xf32>
    %16 = arith.mulf %14, %15 : vector<1x16x8xf32>
    %17 = vector.broadcast %13 : vector<1x1x8xf32> to vector<1x16x8xf32>
    %18 = arith.addf %16, %17 : vector<1x16x8xf32>
    %c0_12 = arith.constant 0 : index
    %c0_13 = arith.constant 0 : index
    %c0_14 = arith.constant 0 : index
    %19 = vector.load %arg2[%c0_12, %c0_13, %c0_14] : memref<8x16x8xf32, #tpu.memory_space<vmem>>, vector<8x16x8xf32>
    %20 = vector.broadcast %12 : vector<1x1x8xf32> to vector<8x16x8xf32>
    %21 = arith.mulf %19, %20 : vector<8x16x8xf32>
    %22 = vector.broadcast %13 : vector<1x1x8xf32> to vector<8x16x8xf32>
    %23 = arith.addf %21, %22 : vector<8x16x8xf32>
    %c0_15 = arith.constant 0 : index
    %c0_16 = arith.constant 0 : index
    %c0_17 = arith.constant 0 : index
    %24 = vector.load %arg3[%c0_15, %c0_16, %c0_17] : memref<8x16x8xf32, #tpu.memory_space<vmem>>, vector<1x16x8xf32>
    %25 = vector.broadcast %12 : vector<1x1x8xf32> to vector<1x16x8xf32>
    %26 = arith.mulf %24, %25 : vector<1x16x8xf32>
    %27 = vector.broadcast %13 : vector<1x1x8xf32> to vector<1x16x8xf32>
    %28 = arith.addf %26, %27 : vector<1x16x8xf32>
    %cst = arith.constant 0.000000e+00 : f32
    %29 = vector.broadcast %cst : f32 to vector<1x16x8xf32>
    %30 = arith.select %10, %18, %29 : vector<1x16x8xf32>
    %cst_18 = arith.constant 0.000000e+00 : f32
    %31 = vector.broadcast %cst_18 : f32 to vector<1x16x8xf32>
    %32 = arith.select %11, %28, %31 : vector<1x16x8xf32>
    %33 = tpu.concatenate %30, %23, %32 in 0 : vector<1x16x8xf32>, vector<8x16x8xf32>, vector<1x16x8xf32> -> vector<10x16x8xf32>
    %cst_19 = arith.constant 0.000000e+00 : f32
    %34 = vector.broadcast %cst_19 : f32 to vector<10x16x8xf32>
    %35 = arith.maximumf %33, %34 : vector<10x16x8xf32>
    %cst_20 = arith.constant 0.000000e+00 : f32
    %36 = vector.broadcast %cst_20 : f32 to vector<10x1x8xf32>
    %37 = tpu.concatenate %36, %35, %36 in 1 : vector<10x1x8xf32>, vector<10x16x8xf32>, vector<10x1x8xf32> -> vector<10x18x8xf32>
    %cst_21 = arith.constant 0.000000e+00 : f32
    %38 = vector.broadcast %cst_21 : f32 to vector<128x8xf32>
    %39 = vector.extract_strided_slice %37 {offsets = [0, 0, 0], sizes = [8, 16, 8], strides = [1, 1, 1]} : vector<10x18x8xf32> to vector<8x16x8xf32>
    %40 = vector.shape_cast %39 : vector<8x16x8xf32> to vector<128x8xf32>
    %c0_22 = arith.constant 0 : index
    %c0_23 = arith.constant 0 : index
    %c0_24 = arith.constant 0 : index
    %41 = vector.load %arg4[%c0_22, %c0_23, %c0_24] : memref<9x8x8xf32, #tpu.memory_space<vmem>>, vector<1x8x8xf32>
    %42 = vector.shape_cast %41 : vector<1x8x8xf32> to vector<8x8xf32>
    %cst_25 = arith.constant dense<0.000000e+00> : vector<128x8xf32>
    %43 = tpu.matmul %40, %42, %cst_25 {dimension_numbers = #tpu.dot_dimension_numbers<[1], [0], [0], [1], [0, 0, 1, 1], [], []>} : vector<128x8xf32>, vector<8x8xf32>, vector<128x8xf32> -> vector<128x8xf32>
    %44 = arith.addf %38, %43 : vector<128x8xf32>
    %45 = vector.extract_strided_slice %37 {offsets = [0, 1, 0], sizes = [8, 16, 8], strides = [1, 1, 1]} : vector<10x18x8xf32> to vector<8x16x8xf32>
    %46 = vector.shape_cast %45 : vector<8x16x8xf32> to vector<128x8xf32>
    %c1 = arith.constant 1 : index
    %c0_26 = arith.constant 0 : index
    %c0_27 = arith.constant 0 : index
    %47 = vector.load %arg4[%c1, %c0_26, %c0_27] : memref<9x8x8xf32, #tpu.memory_space<vmem>>, vector<1x8x8xf32>
    %48 = vector.shape_cast %47 : vector<1x8x8xf32> to vector<8x8xf32>
    %cst_28 = arith.constant dense<0.000000e+00> : vector<128x8xf32>
    %49 = tpu.matmul %46, %48, %cst_28 {dimension_numbers = #tpu.dot_dimension_numbers<[1], [0], [0], [1], [0, 0, 1, 1], [], []>} : vector<128x8xf32>, vector<8x8xf32>, vector<128x8xf32> -> vector<128x8xf32>
    %50 = arith.addf %44, %49 : vector<128x8xf32>
    %51 = vector.extract_strided_slice %37 {offsets = [0, 2, 0], sizes = [8, 16, 8], strides = [1, 1, 1]} : vector<10x18x8xf32> to vector<8x16x8xf32>
    %52 = vector.shape_cast %51 : vector<8x16x8xf32> to vector<128x8xf32>
    %c2 = arith.constant 2 : index
    %c0_29 = arith.constant 0 : index
    %c0_30 = arith.constant 0 : index
    %53 = vector.load %arg4[%c2, %c0_29, %c0_30] : memref<9x8x8xf32, #tpu.memory_space<vmem>>, vector<1x8x8xf32>
    %54 = vector.shape_cast %53 : vector<1x8x8xf32> to vector<8x8xf32>
    %cst_31 = arith.constant dense<0.000000e+00> : vector<128x8xf32>
    %55 = tpu.matmul %52, %54, %cst_31 {dimension_numbers = #tpu.dot_dimension_numbers<[1], [0], [0], [1], [0, 0, 1, 1], [], []>} : vector<128x8xf32>, vector<8x8xf32>, vector<128x8xf32> -> vector<128x8xf32>
    %56 = arith.addf %50, %55 : vector<128x8xf32>
    %57 = vector.extract_strided_slice %37 {offsets = [1, 0, 0], sizes = [8, 16, 8], strides = [1, 1, 1]} : vector<10x18x8xf32> to vector<8x16x8xf32>
    %58 = vector.shape_cast %57 : vector<8x16x8xf32> to vector<128x8xf32>
    %c3 = arith.constant 3 : index
    %c0_32 = arith.constant 0 : index
    %c0_33 = arith.constant 0 : index
    %59 = vector.load %arg4[%c3, %c0_32, %c0_33] : memref<9x8x8xf32, #tpu.memory_space<vmem>>, vector<1x8x8xf32>
    %60 = vector.shape_cast %59 : vector<1x8x8xf32> to vector<8x8xf32>
    %cst_34 = arith.constant dense<0.000000e+00> : vector<128x8xf32>
    %61 = tpu.matmul %58, %60, %cst_34 {dimension_numbers = #tpu.dot_dimension_numbers<[1], [0], [0], [1], [0, 0, 1, 1], [], []>} : vector<128x8xf32>, vector<8x8xf32>, vector<128x8xf32> -> vector<128x8xf32>
    %62 = arith.addf %56, %61 : vector<128x8xf32>
    %63 = vector.extract_strided_slice %37 {offsets = [1, 1, 0], sizes = [8, 16, 8], strides = [1, 1, 1]} : vector<10x18x8xf32> to vector<8x16x8xf32>
    %64 = vector.shape_cast %63 : vector<8x16x8xf32> to vector<128x8xf32>
    %c4 = arith.constant 4 : index
    %c0_35 = arith.constant 0 : index
    %c0_36 = arith.constant 0 : index
    %65 = vector.load %arg4[%c4, %c0_35, %c0_36] : memref<9x8x8xf32, #tpu.memory_space<vmem>>, vector<1x8x8xf32>
    %66 = vector.shape_cast %65 : vector<1x8x8xf32> to vector<8x8xf32>
    %cst_37 = arith.constant dense<0.000000e+00> : vector<128x8xf32>
    %67 = tpu.matmul %64, %66, %cst_37 {dimension_numbers = #tpu.dot_dimension_numbers<[1], [0], [0], [1], [0, 0, 1, 1], [], []>} : vector<128x8xf32>, vector<8x8xf32>, vector<128x8xf32> -> vector<128x8xf32>
    %68 = arith.addf %62, %67 : vector<128x8xf32>
    %69 = vector.extract_strided_slice %37 {offsets = [1, 2, 0], sizes = [8, 16, 8], strides = [1, 1, 1]} : vector<10x18x8xf32> to vector<8x16x8xf32>
    %70 = vector.shape_cast %69 : vector<8x16x8xf32> to vector<128x8xf32>
    %c5 = arith.constant 5 : index
    %c0_38 = arith.constant 0 : index
    %c0_39 = arith.constant 0 : index
    %71 = vector.load %arg4[%c5, %c0_38, %c0_39] : memref<9x8x8xf32, #tpu.memory_space<vmem>>, vector<1x8x8xf32>
    %72 = vector.shape_cast %71 : vector<1x8x8xf32> to vector<8x8xf32>
    %cst_40 = arith.constant dense<0.000000e+00> : vector<128x8xf32>
    %73 = tpu.matmul %70, %72, %cst_40 {dimension_numbers = #tpu.dot_dimension_numbers<[1], [0], [0], [1], [0, 0, 1, 1], [], []>} : vector<128x8xf32>, vector<8x8xf32>, vector<128x8xf32> -> vector<128x8xf32>
    %74 = arith.addf %68, %73 : vector<128x8xf32>
    %75 = vector.extract_strided_slice %37 {offsets = [2, 0, 0], sizes = [8, 16, 8], strides = [1, 1, 1]} : vector<10x18x8xf32> to vector<8x16x8xf32>
    %76 = vector.shape_cast %75 : vector<8x16x8xf32> to vector<128x8xf32>
    %c6 = arith.constant 6 : index
    %c0_41 = arith.constant 0 : index
    %c0_42 = arith.constant 0 : index
    %77 = vector.load %arg4[%c6, %c0_41, %c0_42] : memref<9x8x8xf32, #tpu.memory_space<vmem>>, vector<1x8x8xf32>
    %78 = vector.shape_cast %77 : vector<1x8x8xf32> to vector<8x8xf32>
    %cst_43 = arith.constant dense<0.000000e+00> : vector<128x8xf32>
    %79 = tpu.matmul %76, %78, %cst_43 {dimension_numbers = #tpu.dot_dimension_numbers<[1], [0], [0], [1], [0, 0, 1, 1], [], []>} : vector<128x8xf32>, vector<8x8xf32>, vector<128x8xf32> -> vector<128x8xf32>
    %80 = arith.addf %74, %79 : vector<128x8xf32>
    %81 = vector.extract_strided_slice %37 {offsets = [2, 1, 0], sizes = [8, 16, 8], strides = [1, 1, 1]} : vector<10x18x8xf32> to vector<8x16x8xf32>
    %82 = vector.shape_cast %81 : vector<8x16x8xf32> to vector<128x8xf32>
    %c7_44 = arith.constant 7 : index
    %c0_45 = arith.constant 0 : index
    %c0_46 = arith.constant 0 : index
    %83 = vector.load %arg4[%c7_44, %c0_45, %c0_46] : memref<9x8x8xf32, #tpu.memory_space<vmem>>, vector<1x8x8xf32>
    %84 = vector.shape_cast %83 : vector<1x8x8xf32> to vector<8x8xf32>
    %cst_47 = arith.constant dense<0.000000e+00> : vector<128x8xf32>
    %85 = tpu.matmul %82, %84, %cst_47 {dimension_numbers = #tpu.dot_dimension_numbers<[1], [0], [0], [1], [0, 0, 1, 1], [], []>} : vector<128x8xf32>, vector<8x8xf32>, vector<128x8xf32> -> vector<128x8xf32>
    %86 = arith.addf %80, %85 : vector<128x8xf32>
    %87 = vector.extract_strided_slice %37 {offsets = [2, 2, 0], sizes = [8, 16, 8], strides = [1, 1, 1]} : vector<10x18x8xf32> to vector<8x16x8xf32>
    %88 = vector.shape_cast %87 : vector<8x16x8xf32> to vector<128x8xf32>
    %c8 = arith.constant 8 : index
    %c0_48 = arith.constant 0 : index
    %c0_49 = arith.constant 0 : index
    %89 = vector.load %arg4[%c8, %c0_48, %c0_49] : memref<9x8x8xf32, #tpu.memory_space<vmem>>, vector<1x8x8xf32>
    %90 = vector.shape_cast %89 : vector<1x8x8xf32> to vector<8x8xf32>
    %cst_50 = arith.constant dense<0.000000e+00> : vector<128x8xf32>
    %91 = tpu.matmul %88, %90, %cst_50 {dimension_numbers = #tpu.dot_dimension_numbers<[1], [0], [0], [1], [0, 0, 1, 1], [], []>} : vector<128x8xf32>, vector<8x8xf32>, vector<128x8xf32> -> vector<128x8xf32>
    %92 = arith.addf %86, %91 : vector<128x8xf32>
    %93 = vector.shape_cast %92 : vector<128x8xf32> to vector<8x16x8xf32>
    %c0_51 = arith.constant 0 : index
    %c0_52 = arith.constant 0 : index
    %c0_53 = arith.constant 0 : index
    %94 = vector.load %arg7[%c0_51, %c0_52, %c0_53] : memref<8x16x8xf32, #tpu.memory_space<vmem>>, vector<8x16x8xf32>
    tpu.vector_store %arg7[%c0_51, %c0_52, %c0_53], %93 {strides = array<i32>} : memref<8x16x8xf32, #tpu.memory_space<vmem>>, vector<8x16x8xf32>,
    %cst_54 = arith.constant dense<0.000000e+00> : vector<8xf32>
    %95 = vector.multi_reduction <add>, %92, %cst_54 [0] : vector<128x8xf32> to vector<8xf32>
    %96 = vector.shape_cast %95 : vector<8xf32> to vector<1x8xf32>
    %97 = arith.mulf %92, %92 : vector<128x8xf32>
    %cst_55 = arith.constant dense<0.000000e+00> : vector<8xf32>
    %98 = vector.multi_reduction <add>, %97, %cst_55 [0] : vector<128x8xf32> to vector<8xf32>
    %99 = vector.shape_cast %98 : vector<8xf32> to vector<1x8xf32>
    %100 = tpu.concatenate %96, %99 in 0 : vector<1x8xf32>, vector<1x8xf32> -> vector<2x8xf32>
    %101 = vector.shape_cast %100 : vector<2x8xf32> to vector<1x2x8xf32>
    %c0_56 = arith.constant 0 : index
    %c0_57 = arith.constant 0 : index
    %c0_58 = arith.constant 0 : index
    %102 = vector.load %arg8[%c0_56, %c0_57, %c0_58] : memref<1x2x8xf32, #tpu.memory_space<vmem>>, vector<1x2x8xf32>
    tpu.vector_store %arg8[%c0_56, %c0_57, %c0_58], %101 {strides = array<i32>} : memref<1x2x8xf32, #tpu.memory_space<vmem>>, vector<1x2x8xf32>,
    return
  }
  func.func @transform_0(%arg0: i32) -> (i32, i32, i32) {
    %c1_i32 = arith.constant 1 : i32
    %0 = arith.subi %arg0, %c1_i32 : i32
    %c0_i32 = arith.constant 0 : i32
    %1 = arith.maxsi %0, %c0_i32 : i32
    %c0_i32_0 = arith.constant 0 : i32
    %c0_i32_1 = arith.constant 0 : i32
    %c0_i32_2 = arith.constant 0 : i32
    return %1, %c0_i32_0, %c0_i32_1 : i32, i32, i32
  }
  func.func @transform_1(%arg0: i32) -> (i32, i32, i32) {
    %c0_i32 = arith.constant 0 : i32
    %c0_i32_0 = arith.constant 0 : i32
    %c0_i32_1 = arith.constant 0 : i32
    return %arg0, %c0_i32, %c0_i32_0 : i32, i32, i32
  }
  func.func @transform_2(%arg0: i32) -> (i32, i32, i32) {
    %c1_i32 = arith.constant 1 : i32
    %0 = arith.addi %arg0, %c1_i32 : i32
    %c3_i32 = arith.constant 3 : i32
    %1 = arith.minsi %0, %c3_i32 : i32
    %c0_i32 = arith.constant 0 : i32
    %c0_i32_0 = arith.constant 0 : i32
    %c0_i32_1 = arith.constant 0 : i32
    return %1, %c0_i32, %c0_i32_0 : i32, i32, i32
  }
  func.func @transform_3(%arg0: i32) -> (i32, i32, i32) {
    %c0_i32 = arith.constant 0 : i32
    %c0_i32_0 = arith.constant 0 : i32
    %c0_i32_1 = arith.constant 0 : i32
    %c0_i32_2 = arith.constant 0 : i32
    return %c0_i32, %c0_i32_0, %c0_i32_1 : i32, i32, i32
  }
  func.func @transform_4(%arg0: i32) -> (i32, i32, i32) {
    %c0_i32 = arith.constant 0 : i32
    %c0_i32_0 = arith.constant 0 : i32
    %c0_i32_1 = arith.constant 0 : i32
    %c0_i32_2 = arith.constant 0 : i32
    return %c0_i32, %c0_i32_0, %c0_i32_1 : i32, i32, i32
  }
  func.func @transform_5(%arg0: i32) -> (i32, i32, i32) {
    %c0_i32 = arith.constant 0 : i32
    %c0_i32_0 = arith.constant 0 : i32
    %c0_i32_1 = arith.constant 0 : i32
    %c0_i32_2 = arith.constant 0 : i32
    return %c0_i32, %c0_i32_0, %c0_i32_1 : i32, i32, i32
  }
  func.func @transform_6(%arg0: i32) -> (i32, i32, i32) {
    %c0_i32 = arith.constant 0 : i32
    %c0_i32_0 = arith.constant 0 : i32
    %c0_i32_1 = arith.constant 0 : i32
    return %arg0, %c0_i32, %c0_i32_0 : i32, i32, i32
  }
  func.func @transform_7(%arg0: i32) -> (i32, i32, i32) {
    %c0_i32 = arith.constant 0 : i32
    %c0_i32_0 = arith.constant 0 : i32
    %c0_i32_1 = arith.constant 0 : i32
    return %arg0, %c0_i32, %c0_i32_0 : i32, i32, i32
  }
}

module attributes {stable_mosaic.version = 11 : i64} {
  func.func @_conv1x1_stats_kernel(%arg0: i32, %arg1: memref<8x16x8xf32, #tpu.memory_space<vmem>>, %arg2: memref<8x8xf32, #tpu.memory_space<vmem>>, %arg3: memref<1x1x8xf32, #tpu.memory_space<vmem>>, %arg4: memref<1x1x8xf32, #tpu.memory_space<vmem>>, %arg5: memref<8x16x8xf32, #tpu.memory_space<vmem>>, %arg6: memref<1x2x8xf32, #tpu.memory_space<vmem>>) attributes {dimension_semantics = [#tpu.dimension_semantics<parallel>], iteration_bounds = array<i64: 4>, scalar_prefetch = 0 : i64, scratch_operands = 0 : i64, tpu.core_type = #tpu.core_type<tc>, window_params = [{transform_indices = @transform_0, window_bounds = array<i64: 8, 16, 8>}, {pipeline_mode = #tpu.pipeline_mode<synchronous>, transform_indices = @transform_1, window_bounds = array<i64: 8, 8>}, {pipeline_mode = #tpu.pipeline_mode<synchronous>, transform_indices = @transform_2, window_bounds = array<i64: 1, 1, 8>}, {pipeline_mode = #tpu.pipeline_mode<synchronous>, transform_indices = @transform_3, window_bounds = array<i64: 1, 1, 8>}, {transform_indices = @transform_4, window_bounds = array<i64: 8, 16, 8>}, {transform_indices = @transform_5, window_bounds = array<i64: 1, 2, 8>}]} {
    %c0 = arith.constant 0 : index
    %c0_0 = arith.constant 0 : index
    %c0_1 = arith.constant 0 : index
    %0 = vector.load %arg1[%c0, %c0_0, %c0_1] : memref<8x16x8xf32, #tpu.memory_space<vmem>>, vector<8x16x8xf32>
    %c0_2 = arith.constant 0 : index
    %c0_3 = arith.constant 0 : index
    %c0_4 = arith.constant 0 : index
    %1 = vector.load %arg3[%c0_2, %c0_3, %c0_4] : memref<1x1x8xf32, #tpu.memory_space<vmem>>, vector<1x1x8xf32>
    %2 = vector.broadcast %1 : vector<1x1x8xf32> to vector<8x16x8xf32>
    %3 = arith.mulf %0, %2 : vector<8x16x8xf32>
    %c0_5 = arith.constant 0 : index
    %c0_6 = arith.constant 0 : index
    %c0_7 = arith.constant 0 : index
    %4 = vector.load %arg4[%c0_5, %c0_6, %c0_7] : memref<1x1x8xf32, #tpu.memory_space<vmem>>, vector<1x1x8xf32>
    %5 = vector.broadcast %4 : vector<1x1x8xf32> to vector<8x16x8xf32>
    %6 = arith.addf %3, %5 : vector<8x16x8xf32>
    %cst = arith.constant 0.000000e+00 : f32
    %7 = vector.broadcast %cst : f32 to vector<8x16x8xf32>
    %8 = arith.maximumf %6, %7 : vector<8x16x8xf32>
    %9 = vector.shape_cast %8 : vector<8x16x8xf32> to vector<128x8xf32>
    %c0_8 = arith.constant 0 : index
    %c0_9 = arith.constant 0 : index
    %10 = vector.load %arg2[%c0_8, %c0_9] : memref<8x8xf32, #tpu.memory_space<vmem>>, vector<8x8xf32>
    %cst_10 = arith.constant dense<0.000000e+00> : vector<128x8xf32>
    %11 = tpu.matmul %9, %10, %cst_10 {dimension_numbers = #tpu.dot_dimension_numbers<[1], [0], [0], [1], [0, 0, 1, 1], [], []>} : vector<128x8xf32>, vector<8x8xf32>, vector<128x8xf32> -> vector<128x8xf32>
    %12 = vector.shape_cast %11 : vector<128x8xf32> to vector<8x16x8xf32>
    %c0_11 = arith.constant 0 : index
    %c0_12 = arith.constant 0 : index
    %c0_13 = arith.constant 0 : index
    %13 = vector.load %arg5[%c0_11, %c0_12, %c0_13] : memref<8x16x8xf32, #tpu.memory_space<vmem>>, vector<8x16x8xf32>
    tpu.vector_store %arg5[%c0_11, %c0_12, %c0_13], %12 {strides = array<i32>} : memref<8x16x8xf32, #tpu.memory_space<vmem>>, vector<8x16x8xf32>,
    %cst_14 = arith.constant dense<0.000000e+00> : vector<8xf32>
    %14 = vector.multi_reduction <add>, %11, %cst_14 [0] : vector<128x8xf32> to vector<8xf32>
    %15 = vector.shape_cast %14 : vector<8xf32> to vector<1x8xf32>
    %16 = arith.mulf %11, %11 : vector<128x8xf32>
    %cst_15 = arith.constant dense<0.000000e+00> : vector<8xf32>
    %17 = vector.multi_reduction <add>, %16, %cst_15 [0] : vector<128x8xf32> to vector<8xf32>
    %18 = vector.shape_cast %17 : vector<8xf32> to vector<1x8xf32>
    %19 = tpu.concatenate %15, %18 in 0 : vector<1x8xf32>, vector<1x8xf32> -> vector<2x8xf32>
    %20 = vector.shape_cast %19 : vector<2x8xf32> to vector<1x2x8xf32>
    %c0_16 = arith.constant 0 : index
    %c0_17 = arith.constant 0 : index
    %c0_18 = arith.constant 0 : index
    %21 = vector.load %arg6[%c0_16, %c0_17, %c0_18] : memref<1x2x8xf32, #tpu.memory_space<vmem>>, vector<1x2x8xf32>
    tpu.vector_store %arg6[%c0_16, %c0_17, %c0_18], %20 {strides = array<i32>} : memref<1x2x8xf32, #tpu.memory_space<vmem>>, vector<1x2x8xf32>,
    return
  }
  func.func @transform_0(%arg0: i32) -> (i32, i32, i32) {
    %c0_i32 = arith.constant 0 : i32
    %c0_i32_0 = arith.constant 0 : i32
    %c0_i32_1 = arith.constant 0 : i32
    return %arg0, %c0_i32, %c0_i32_0 : i32, i32, i32
  }
  func.func @transform_1(%arg0: i32) -> (i32, i32) {
    %c0_i32 = arith.constant 0 : i32
    %c0_i32_0 = arith.constant 0 : i32
    %c0_i32_1 = arith.constant 0 : i32
    return %c0_i32, %c0_i32_0 : i32, i32
  }
  func.func @transform_2(%arg0: i32) -> (i32, i32, i32) {
    %c0_i32 = arith.constant 0 : i32
    %c0_i32_0 = arith.constant 0 : i32
    %c0_i32_1 = arith.constant 0 : i32
    %c0_i32_2 = arith.constant 0 : i32
    return %c0_i32, %c0_i32_0, %c0_i32_1 : i32, i32, i32
  }
  func.func @transform_3(%arg0: i32) -> (i32, i32, i32) {
    %c0_i32 = arith.constant 0 : i32
    %c0_i32_0 = arith.constant 0 : i32
    %c0_i32_1 = arith.constant 0 : i32
    %c0_i32_2 = arith.constant 0 : i32
    return %c0_i32, %c0_i32_0, %c0_i32_1 : i32, i32, i32
  }
  func.func @transform_4(%arg0: i32) -> (i32, i32, i32) {
    %c0_i32 = arith.constant 0 : i32
    %c0_i32_0 = arith.constant 0 : i32
    %c0_i32_1 = arith.constant 0 : i32
    return %arg0, %c0_i32, %c0_i32_0 : i32, i32, i32
  }
  func.func @transform_5(%arg0: i32) -> (i32, i32, i32) {
    %c0_i32 = arith.constant 0 : i32
    %c0_i32_0 = arith.constant 0 : i32
    %c0_i32_1 = arith.constant 0 : i32
    return %arg0, %c0_i32, %c0_i32_0 : i32, i32, i32
  }
}

module attributes {stable_mosaic.version = 11 : i64} {
  func.func @_bn_add_relu_kernel(%arg0: i32, %arg1: memref<8x16x8xf32, #tpu.memory_space<vmem>>, %arg2: memref<8x16x8xf32, #tpu.memory_space<vmem>>, %arg3: memref<1x1x8xf32, #tpu.memory_space<vmem>>, %arg4: memref<1x1x8xf32, #tpu.memory_space<vmem>>, %arg5: memref<1x1x8xf32, #tpu.memory_space<vmem>>, %arg6: memref<1x1x8xf32, #tpu.memory_space<vmem>>, %arg7: memref<8x16x8xf32, #tpu.memory_space<vmem>>) attributes {dimension_semantics = [#tpu.dimension_semantics<parallel>], iteration_bounds = array<i64: 4>, scalar_prefetch = 0 : i64, scratch_operands = 0 : i64, tpu.core_type = #tpu.core_type<tc>, window_params = [{transform_indices = @transform_0, window_bounds = array<i64: 8, 16, 8>}, {transform_indices = @transform_1, window_bounds = array<i64: 8, 16, 8>}, {pipeline_mode = #tpu.pipeline_mode<synchronous>, transform_indices = @transform_2, window_bounds = array<i64: 1, 1, 8>}, {pipeline_mode = #tpu.pipeline_mode<synchronous>, transform_indices = @transform_3, window_bounds = array<i64: 1, 1, 8>}, {pipeline_mode = #tpu.pipeline_mode<synchronous>, transform_indices = @transform_4, window_bounds = array<i64: 1, 1, 8>}, {pipeline_mode = #tpu.pipeline_mode<synchronous>, transform_indices = @transform_5, window_bounds = array<i64: 1, 1, 8>}, {transform_indices = @transform_6, window_bounds = array<i64: 8, 16, 8>}]} {
    %c0 = arith.constant 0 : index
    %c0_0 = arith.constant 0 : index
    %c0_1 = arith.constant 0 : index
    %0 = vector.load %arg1[%c0, %c0_0, %c0_1] : memref<8x16x8xf32, #tpu.memory_space<vmem>>, vector<8x16x8xf32>
    %c0_2 = arith.constant 0 : index
    %c0_3 = arith.constant 0 : index
    %c0_4 = arith.constant 0 : index
    %1 = vector.load %arg3[%c0_2, %c0_3, %c0_4] : memref<1x1x8xf32, #tpu.memory_space<vmem>>, vector<1x1x8xf32>
    %2 = vector.broadcast %1 : vector<1x1x8xf32> to vector<8x16x8xf32>
    %3 = arith.mulf %0, %2 : vector<8x16x8xf32>
    %c0_5 = arith.constant 0 : index
    %c0_6 = arith.constant 0 : index
    %c0_7 = arith.constant 0 : index
    %4 = vector.load %arg4[%c0_5, %c0_6, %c0_7] : memref<1x1x8xf32, #tpu.memory_space<vmem>>, vector<1x1x8xf32>
    %5 = vector.broadcast %4 : vector<1x1x8xf32> to vector<8x16x8xf32>
    %6 = arith.addf %3, %5 : vector<8x16x8xf32>
    %c0_8 = arith.constant 0 : index
    %c0_9 = arith.constant 0 : index
    %c0_10 = arith.constant 0 : index
    %7 = vector.load %arg2[%c0_8, %c0_9, %c0_10] : memref<8x16x8xf32, #tpu.memory_space<vmem>>, vector<8x16x8xf32>
    %c0_11 = arith.constant 0 : index
    %c0_12 = arith.constant 0 : index
    %c0_13 = arith.constant 0 : index
    %8 = vector.load %arg5[%c0_11, %c0_12, %c0_13] : memref<1x1x8xf32, #tpu.memory_space<vmem>>, vector<1x1x8xf32>
    %9 = vector.broadcast %8 : vector<1x1x8xf32> to vector<8x16x8xf32>
    %10 = arith.mulf %7, %9 : vector<8x16x8xf32>
    %c0_14 = arith.constant 0 : index
    %c0_15 = arith.constant 0 : index
    %c0_16 = arith.constant 0 : index
    %11 = vector.load %arg6[%c0_14, %c0_15, %c0_16] : memref<1x1x8xf32, #tpu.memory_space<vmem>>, vector<1x1x8xf32>
    %12 = vector.broadcast %11 : vector<1x1x8xf32> to vector<8x16x8xf32>
    %13 = arith.addf %10, %12 : vector<8x16x8xf32>
    %14 = arith.addf %6, %13 : vector<8x16x8xf32>
    %cst = arith.constant 0.000000e+00 : f32
    %15 = vector.broadcast %cst : f32 to vector<8x16x8xf32>
    %16 = arith.maximumf %14, %15 : vector<8x16x8xf32>
    %c0_17 = arith.constant 0 : index
    %c0_18 = arith.constant 0 : index
    %c0_19 = arith.constant 0 : index
    %17 = vector.load %arg7[%c0_17, %c0_18, %c0_19] : memref<8x16x8xf32, #tpu.memory_space<vmem>>, vector<8x16x8xf32>
    tpu.vector_store %arg7[%c0_17, %c0_18, %c0_19], %16 {strides = array<i32>} : memref<8x16x8xf32, #tpu.memory_space<vmem>>, vector<8x16x8xf32>,
    return
  }
  func.func @transform_0(%arg0: i32) -> (i32, i32, i32) {
    %c0_i32 = arith.constant 0 : i32
    %c0_i32_0 = arith.constant 0 : i32
    %c0_i32_1 = arith.constant 0 : i32
    return %arg0, %c0_i32, %c0_i32_0 : i32, i32, i32
  }
  func.func @transform_1(%arg0: i32) -> (i32, i32, i32) {
    %c0_i32 = arith.constant 0 : i32
    %c0_i32_0 = arith.constant 0 : i32
    %c0_i32_1 = arith.constant 0 : i32
    return %arg0, %c0_i32, %c0_i32_0 : i32, i32, i32
  }
  func.func @transform_2(%arg0: i32) -> (i32, i32, i32) {
    %c0_i32 = arith.constant 0 : i32
    %c0_i32_0 = arith.constant 0 : i32
    %c0_i32_1 = arith.constant 0 : i32
    %c0_i32_2 = arith.constant 0 : i32
    return %c0_i32, %c0_i32_0, %c0_i32_1 : i32, i32, i32
  }
  func.func @transform_3(%arg0: i32) -> (i32, i32, i32) {
    %c0_i32 = arith.constant 0 : i32
    %c0_i32_0 = arith.constant 0 : i32
    %c0_i32_1 = arith.constant 0 : i32
    %c0_i32_2 = arith.constant 0 : i32
    return %c0_i32, %c0_i32_0, %c0_i32_1 : i32, i32, i32
  }
  func.func @transform_4(%arg0: i32) -> (i32, i32, i32) {
    %c0_i32 = arith.constant 0 : i32
    %c0_i32_0 = arith.constant 0 : i32
    %c0_i32_1 = arith.constant 0 : i32
    %c0_i32_2 = arith.constant 0 : i32
    return %c0_i32, %c0_i32_0, %c0_i32_1 : i32, i32, i32
  }
  func.func @transform_5(%arg0: i32) -> (i32, i32, i32) {
    %c0_i32 = arith.constant 0 : i32
    %c0_i32_0 = arith.constant 0 : i32
    %c0_i32_1 = arith.constant 0 : i32
    %c0_i32_2 = arith.constant 0 : i32
    return %c0_i32, %c0_i32_0, %c0_i32_1 : i32, i32, i32
  }
  func.func @transform_6(%arg0: i32) -> (i32, i32, i32) {
    %c0_i32 = arith.constant 0 : i32
    %c0_i32_0 = arith.constant 0 : i32
    %c0_i32_1 = arith.constant 0 : i32
    return %arg0, %c0_i32, %c0_i32_0 : i32, i32, i32
  }
}

</mosaic_0001>

<llo_original>
// kernel: bottleneck_decoder_forward.6
$region0: #{bottleneck_decoder_forward.6}
  #allocation0 [shape = 'u32[]', space=smem, size = 0x4, offset = 0x4, fixed_abs, tag = 'smem constant byte address 0x4 - core index']
  #allocation1 [shape = 'u32[144,128]{1,0:T(1,128)}', space=vmem, size = 0x12000, scoped, tag = 'internal scratch']
  %s0 = inlined_call_operand.vmem [shape: f32[32,16,4], index: 0, kind: input, shape index: {}]
  %s1 = inlined_call_operand.vmem [shape: f32[4,8], index: 1, kind: input, shape index: {}]
  %s2 = inlined_call_operand.vmem [shape: f32[1,1,4], index: 2, kind: input, shape index: {}]
  %s3 = inlined_call_operand.vmem [shape: f32[1,1,4], index: 3, kind: input, shape index: {}]
  %s4 = inlined_call_operand.vmem [shape: f32[32,16,8], index: 4, kind: output, shape index: {0}]
  %s5 = inlined_call_operand.vmem [shape: f32[4,2,8], index: 5, kind: output, shape index: {1}]
  %6 = xla_tuple %s4, %s5
  %s7 = sld [smem:[#allocation0]]
  $region57: #{bottleneck_decoder_forward.6} parent=0
    _
  %s9 = ssub.s32 1, %s7
  %s10 = scalar_select 0, %s9, %s7
  loop: start=0, step=1, limit=6
  $region2: #{bottleneck_decoder_forward.6} parent=0 // loop_pre_header
    _
  $region3: #{bottleneck_decoder_forward.6} parent=0 // loop_header
    %s12 = sphi 0, %s16
    %p13 = scmp.ge.s32.totalorder %s12, 6
    %s22 = sphi 0, %s24
    %s25 = sphi 0, %s22
    %s26 = sphi 0, %s25
    %s42 = sphi 0, %s26
    %s46 = sphi 0, %s46
    %s48 = sphi 0, %s46
    %s49 = sphi 0, %s48
    %s63 = sphi 0, %s49
    %s67 = sphi 0, %s67
    %s69 = sphi 0, %s67
    %s70 = sphi 0, %s69
    %s84 = sphi 0, %s70
    %s88 = sphi 0, %s88
    %s90 = sphi 0, %s88
    %s91 = sphi 0, %s90
    %s105 = sphi 0, %s91
    %s111 = sphi 0, %s113
    %s114 = sphi 0, %s111
    %s115 = sphi 0, %s114
    %s131 = sphi 0, %s115
    %s137 = sphi 0, %s139
    %s140 = sphi 0, %s137
    %s141 = sphi 0, %s140
    %s157 = sphi 0, %s141
  $region4: #{bottleneck_decoder_forward.6} parent=0 // loop_header_branch
    %15 = sbr.rel (%p13) target = $region8
  $region5: #{bottleneck_decoder_forward.6} parent=0 // loop_body
    %s17 = ssub.s32 %s12, 1
    %s18 = ssub.s32 %s12, 2
    %s19 = sadd.s32 %s12, 1
    %s20 = ssub.s32 %s12, %s19
    %p21 = scmp.eq.s32.totalorder %s20, 0
    %s23 = sadd.s32 %s22, 1
    %s24 = scalar_select %p21, %s22, %s23
    %p27 = pneg %p21
    %p28 = scmp.eq.s32.totalorder %s12, 3
    %p29 = por %p27, %p28
    %p30 = scmp.ne.s32.totalorder %s22, %s25
    %p31 = scmp.eq.s32.totalorder %s12, 0
    %p32 = por %p30, %p31
    %p33 = scmp.ne.s32.totalorder %s22, %s25
    %p34 = scmp.eq.s32.totalorder %s17, 3
    %p35 = por %p33, %p34
    %p36 = scmp.ne.s32.totalorder %s25, %s26
    %p37 = scmp.eq.s32.totalorder %s17, 0
    %p38 = por %p36, %p37
    %p39 = scmp.ne.s32.totalorder %s25, %s26
    %p40 = scmp.eq.s32.totalorder %s18, 3
    %p41 = por %p39, %p40
    %p43 = scmp.ne.s32.totalorder %s26, %s42
    %p44 = scmp.eq.s32.totalorder %s18, 0
    %p45 = por %p43, %p44
    %s47 = sadd.s32 %s46, 1
    %p50 = scmp.eq.s32.totalorder %s12, 3
    %p51 = scmp.ne.s32.totalorder %s46, %s48
    %p52 = scmp.eq.s32.totalorder %s12, 0
    %p53 = por %p51, %p52
    %p54 = scmp.ne.s32.totalorder %s46, %s48
    %p55 = scmp.eq.s32.totalorder %s17, 3
    %p56 = por %p54, %p55
    %p57 = scmp.ne.s32.totalorder %s48, %s49
    %p58 = scmp.eq.s32.totalorder %s17, 0
    %p59 = por %p57, %p58
    %p60 = scmp.ne.s32.totalorder %s48, %s49
    %p61 = scmp.eq.s32.totalorder %s18, 3
    %p62 = por %p60, %p61
    %p64 = scmp.ne.s32.totalorder %s49, %s63
    %p65 = scmp.eq.s32.totalorder %s18, 0
    %p66 = por %p64, %p65
    %s68 = sadd.s32 %s67, 1
    %p71 = scmp.eq.s32.totalorder %s12, 3
    %p72 = scmp.ne.s32.totalorder %s67, %s69
    %p73 = scmp.eq.s32.totalorder %s12, 0
    %p74 = por %p72, %p73
    %p75 = scmp.ne.s32.totalorder %s67, %s69
    %p76 = scmp.eq.s32.totalorder %s17, 3
    %p77 = por %p75, %p76
    %p78 = scmp.ne.s32.totalorder %s69, %s70
    %p79 = scmp.eq.s32.totalorder %s17, 0
    %p80 = por %p78, %p79
    %p81 = scmp.ne.s32.totalorder %s69, %s70
    %p82 = scmp.eq.s32.totalorder %s18, 3
    %p83 = por %p81, %p82
    %p85 = scmp.ne.s32.totalorder %s70, %s84
    %p86 = scmp.eq.s32.totalorder %s18, 0
    %p87 = por %p85, %p86
    %s89 = sadd.s32 %s88, 1
    %p92 = scmp.eq.s32.totalorder %s12, 3
    %p93 = scmp.ne.s32.totalorder %s88, %s90
    %p94 = scmp.eq.s32.totalorder %s12, 0
    %p95 = por %p93, %p94
    %p96 = scmp.ne.s32.totalorder %s88, %s90
    %p97 = scmp.eq.s32.totalorder %s17, 3
    %p98 = por %p96, %p97
    %p99 = scmp.ne.s32.totalorder %s90, %s91
    %p100 = scmp.eq.s32.totalorder %s17, 0
    %p101 = por %p99, %p100
    %p102 = scmp.ne.s32.totalorder %s90, %s91
    %p103 = scmp.eq.s32.totalorder %s18, 3
    %p104 = por %p102, %p103
    %p106 = scmp.ne.s32.totalorder %s91, %s105
    %p107 = scmp.eq.s32.totalorder %s18, 0
    %p108 = por %p106, %p107
    %s109 = ssub.s32 %s12, %s19
    %p110 = scmp.eq.s32.totalorder %s109, 0
    %s112 = sadd.s32 %s111, 1
    %s113 = scalar_select %p110, %s111, %s112
    %p116 = pneg %p110
    %p117 = scmp.eq.s32.totalorder %s12, 3
    %p118 = por %p116, %p117
    %p119 = scmp.ne.s32.totalorder %s111, %s114
    %p120 = scmp.eq.s32.totalorder %s12, 0
    %p121 = por %p119, %p120
    %p122 = scmp.ne.s32.totalorder %s111, %s114
    %p123 = scmp.eq.s32.totalorder %s17, 3
    %p124 = por %p122, %p123
    %p125 = scmp.ne.s32.totalorder %s114, %s115
    %p126 = scmp.eq.s32.totalorder %s17, 0
    %p127 = por %p125, %p126
    %p128 = scmp.ne.s32.totalorder %s114, %s115
    %p129 = scmp.eq.s32.totalorder %s18, 3
    %p130 = por %p128, %p129
    %p132 = scmp.ne.s32.totalorder %s115, %s131
    %p133 = scmp.eq.s32.totalorder %s18, 0
    %p134 = por %p132, %p133
    %s135 = ssub.s32 %s12, %s19
    %p136 = scmp.eq.s32.totalorder %s135, 0
    %s138 = sadd.s32 %s137, 1
    %s139 = scalar_select %p136, %s137, %s138
    %p142 = pneg %p136
    %p143 = scmp.eq.s32.totalorder %s12, 3
    %p144 = por %p142, %p143
    %p145 = scmp.ne.s32.totalorder %s137, %s140
    %p146 = scmp.eq.s32.totalorder %s12, 0
    %p147 = por %p145, %p146
    %p148 = scmp.ne.s32.totalorder %s137, %s140
    %p149 = scmp.eq.s32.totalorder %s17, 3
    %p150 = por %p148, %p149
    %p151 = scmp.ne.s32.totalorder %s140, %s141
    %p152 = scmp.eq.s32.totalorder %s17, 0
    %p153 = por %p151, %p152
    %p154 = scmp.ne.s32.totalorder %s140, %s141
    %p155 = scmp.eq.s32.totalorder %s18, 3
    %p156 = por %p154, %p155
    %p158 = scmp.ne.s32.totalorder %s141, %s157
    %p159 = scmp.eq.s32.totalorder %s18, 0
    %p160 = por %p158, %p159
    %p161 = scmp.le.s32.totalorder 1, %s12
    %p162 = scmp.lt.s32.totalorder %s12, 5
    %p163 = pnand %p161, %p162
    %p164 = pneg %p163
    // Predicated region
    $region9: #{bottleneck_decoder_forward.6} parent=5 // pred_check
      _
    $region10: #{bottleneck_decoder_forward.6} parent=5 // pred_check_branch
      %166 = sbr.rel (%p163) target = $region12
    $region11: #{bottleneck_decoder_forward.6} parent=5 // pred_region
      %s167 = ssub.s32 %s12, 1
      // Predicated region
      $region13: #{bottleneck_decoder_forward.6} parent=11 // pred_check
        %p168 = pneg %p59
      $region14: #{bottleneck_decoder_forward.6} parent=11 // pred_check_branch
        %170 = sbr.rel (%p168) target = $region16
      $region15: #{bottleneck_decoder_forward.6} parent=11 // pred_region
        _
      $region16: #{bottleneck_decoder_forward.6} parent=11 // pred_fallthru
        _
      // Predicated region
      $region17: #{bottleneck_decoder_forward.6} parent=11 // pred_check
        %p171 = pneg %p80
      $region18: #{bottleneck_decoder_forward.6} parent=11 // pred_check_branch
        %173 = sbr.rel (%p171) target = $region20
      $region19: #{bottleneck_decoder_forward.6} parent=11 // pred_region
        _
      $region20: #{bottleneck_decoder_forward.6} parent=11 // pred_fallthru
        _
      // Predicated region
      $region21: #{bottleneck_decoder_forward.6} parent=11 // pred_check
        %p174 = pneg %p101
      $region22: #{bottleneck_decoder_forward.6} parent=11 // pred_check_branch
        %176 = sbr.rel (%p174) target = $region24
      $region23: #{bottleneck_decoder_forward.6} parent=11 // pred_region
        _
      $region24: #{bottleneck_decoder_forward.6} parent=11 // pred_fallthru
        _
    $region12: #{bottleneck_decoder_forward.6} parent=5 // pred_fallthru
      _
    %p177 = scmp.lt.s32.totalorder %s12, 4
    // Predicated region
    $region25: #{bottleneck_decoder_forward.6} parent=5 // pred_check
      %p178 = pneg %p177
    $region26: #{bottleneck_decoder_forward.6} parent=5 // pred_check_branch
      %180 = sbr.rel (%p178) target = $region28
    $region27: #{bottleneck_decoder_forward.6} parent=5 // pred_region
      // Predicated region
      $region29: #{bottleneck_decoder_forward.6} parent=27 // pred_check
        %p181 = pneg %p32
      $region30: #{bottleneck_decoder_forward.6} parent=27 // pred_check_branch
        %183 = sbr.rel (%p181) target = $region32
      $region31: #{bottleneck_decoder_forward.6} parent=27 // pred_region
        %s184 = smul.u32 8, %s12
        %p185 = scmp.lt.s32.totalorder %s184, 31
        %s186 = scalar_select %p185, %s184, 31
        %s187 = smul.addr %s186, 2
        %s188 = smul.addr %s187, 8
        %s189 = scalar_lea.vmem %s0, %s188
        %s190 = smul.u32 8, %s12
      $region32: #{bottleneck_decoder_forward.6} parent=27 // pred_fallthru
        _
    $region28: #{bottleneck_decoder_forward.6} parent=5 // pred_fallthru
      _
    %p191 = scmp.le.s32.totalorder 1, %s12
    %p192 = scmp.lt.s32.totalorder %s12, 5
    %p193 = pnand %p191, %p192
    %p194 = pneg %p193
    // Predicated region
    $region33: #{bottleneck_decoder_forward.6} parent=5 // pred_check
      _
    $region34: #{bottleneck_decoder_forward.6} parent=5 // pred_check_branch
      %196 = sbr.rel (%p193) target = $region36
    $region35: #{bottleneck_decoder_forward.6} parent=5 // pred_region
      %s197 = ssub.s32 %s12, 1
      %s198 = smul.u32 8, %s17
      %p199 = scmp.lt.s32.totalorder %s198, 31
      %s200 = scalar_select %p199, %s198, 31
      %s201 = smul.addr %s200, 2
      %s202 = smul.addr %s201, 8
      %s203 = scalar_lea.vmem %s0, %s202
      %p204 = pneg %p38
      %p205 = pneg %p35
      %p206 = pneg %p59
      %p207 = pneg %p56
      %p208 = pneg %p80
      %p209 = pneg %p77
      %p210 = pneg %p101
      %p211 = pneg %p98
      %p212 = pneg %p127
      %p213 = pneg %p124
      %s214 = smul.u32 8, %s17
      %p215 = scmp.lt.s32.totalorder %s214, 31
      %s216 = scalar_select %p215, %s214, 31
      %s217 = smul.addr %s216, 2
      %s218 = smul.addr %s217, 8
      %s219 = scalar_lea.vmem %s4, %s218
      %p220 = pneg %p153
      %p221 = pneg %p150
      %p222 = scmp.lt.s32.totalorder %s17, 3
      %s223 = scalar_select %p222, %s17, 3
      %s224 = smul.addr %s223, 2
      %s225 = scalar_lea.vmem %s5, %s224
      %s226 = smul.u32 8, %s17
      %p227 = scmp.lt.s32.totalorder %s226, 31
      %s228 = scalar_select %p227, %s226, 31
      %s229 = smul.addr %s228, 2
      %s230 = smul.addr %s229, 8
      %s231 = scalar_lea.vmem %s0, %s230
      %s232 = smul.u32 8, %s17
      %s233 = smul.u32 8, %s17
      %p234 = scmp.lt.s32.totalorder %s233, 31
      %s235 = scalar_select %p234, %s233, 31
      %s236 = smul.addr %s235, 2
      %s237 = smul.addr %s236, 8
      %s238 = scalar_lea.vmem %s4, %s237
      %s239 = smul.u32 8, %s17
      %p240 = scmp.lt.s32.totalorder %s17, 3
      %s241 = scalar_select %p240, %s17, 3
      %s242 = smul.addr %s241, 2
      %s243 = scalar_lea.vmem %s5, %s242
      %v244 = vld [vmem:[%s231] sm:$0xff]
      %v245 = vld [vmem:[%s231 + $0x8] sm:$0xff]
      %v246 = vld [vmem:[%s231 + $0x10] sm:$0xff]
      %v247 = vld [vmem:[%s231 + $0x18] sm:$0xff]
      %v248 = vld [vmem:[%s231 + $0x20] sm:$0xff]
      %v249 = vld [vmem:[%s231 + $0x28] sm:$0xff]
      %v250 = vld [vmem:[%s231 + $0x30] sm:$0xff]
      %v251 = vld [vmem:[%s231 + $0x38] sm:$0xff]
      %v252 = vld [vmem:[%s231 + $0x40] sm:$0xff]
      %v253 = vld [vmem:[%s231 + $0x48] sm:$0xff]
      %v254 = vld [vmem:[%s231 + $0x50] sm:$0xff]
      %v255 = vld [vmem:[%s231 + $0x58] sm:$0xff]
      %v256 = vld [vmem:[%s231 + $0x60] sm:$0xff]
      %v257 = vld [vmem:[%s231 + $0x68] sm:$0xff]
      %v258 = vld [vmem:[%s231 + $0x70] sm:$0xff]
      %v259 = vld [vmem:[%s231 + $0x78] sm:$0xff]
      %v260 = vld [vmem:[%s2] sm:$0x1]
      %v262 = vlaneseq
      %v263 = vshrl.u32 %v262, 7
      %v264 = vsub.s32 0, %v263
      %v265 = vrot.slane %v260, %v264
      %v267 = vmul.f32 %v244, %v265
      %v268 = vmul.f32 %v245, %v265
      %v269 = vmul.f32 %v246, %v265
      %v270 = vmul.f32 %v247, %v265
      %v271 = vmul.f32 %v248, %v265
      %v272 = vmul.f32 %v249, %v265
      %v273 = vmul.f32 %v250, %v265
      %v274 = vmul.f32 %v251, %v265
      %v275 = vmul.f32 %v252, %v265
      %v276 = vmul.f32 %v253, %v265
      %v277 = vmul.f32 %v254, %v265
      %v278 = vmul.f32 %v255, %v265
      %v279 = vmul.f32 %v256, %v265
      %v280 = vmul.f32 %v257, %v265
      %v281 = vmul.f32 %v258, %v265
      %v282 = vmul.f32 %v259, %v265
      %v283 = vld [vmem:[%s3] sm:$0x1]
      %v285 = vlaneseq
      %v286 = vshrl.u32 %v285, 7
      %v287 = vsub.s32 0, %v286
      %v288 = vrot.slane %v283, %v287
      %v290 = vadd.f32 %v267, %v288
      %v291 = vadd.f32 %v268, %v288
      %v292 = vadd.f32 %v269, %v288
      %v293 = vadd.f32 %v270, %v288
      %v294 = vadd.f32 %v271, %v288
      %v295 = vadd.f32 %v272, %v288
      %v296 = vadd.f32 %v273, %v288
      %v297 = vadd.f32 %v274, %v288
      %v298 = vadd.f32 %v275, %v288
      %v299 = vadd.f32 %v276, %v288
      %v300 = vadd.f32 %v277, %v288
      %v301 = vadd.f32 %v278, %v288
      %v302 = vadd.f32 %v279, %v288
      %v303 = vadd.f32 %v280, %v288
      %v304 = vadd.f32 %v281, %v288
      %v305 = vadd.f32 %v282, %v288
      %v306 = vld [vmem:[%s1] sm:$0xf]
      %vm307 = vcmask 31744
      %v309 = vsel %vm307, %v290, 0
      %v312 = vsel %vm307, %v291, 0
      %v315 = vsel %vm307, %v292, 0
      %v318 = vsel %vm307, %v293, 0
      %v321 = vsel %vm307, %v294, 0
      %v324 = vsel %vm307, %v295, 0
      %v327 = vsel %vm307, %v296, 0
      %v330 = vsel %vm307, %v297, 0
      %v333 = vsel %vm307, %v298, 0
      %v336 = vsel %vm307, %v299, 0
      %v339 = vsel %vm307, %v300, 0
      %v342 = vsel %vm307, %v301, 0
      %v345 = vsel %vm307, %v302, 0
      %v348 = vsel %vm307, %v303, 0
      %v351 = vsel %vm307, %v304, 0
      %v354 = vsel %vm307, %v305, 0
      %vm356 = vcmask 1043456
      %v358 = vsel %vm356, %v306, 0
      %360 = vmatprep.subr.mxu0 0.0
      %361 = vmatpush1.msra.mxu0 %v358
      %362 = vmatprep.subr.mxu0 0.0
      %363 = vmatpush1.msra.mxu0 0.0
      %364 = vmatprep.subr.mxu0 0.0
      %365 = vmatpush1.msra.mxu0 0.0
      %366 = vmatprep.subr.mxu0 0.0
      %367 = vmatpush1.msra.mxu0 0.0
      %368 = vmatprep.subr.mxu0 0.0
      %369 = vmatpush1.msra.mxu0 0.0
      %370 = vmatprep.subr.mxu0 0.0
      %371 = vmatpush1.msra.mxu0 0.0
      %372 = vmatprep.subr.mxu0 0.0
      %373 = vmatpush1.msra.mxu0 0.0
      %374 = vmatprep.subr.mxu0 0.0
      %375 = vmatpush1.msra.mxu0 0.0
      %376 = vmatprep.subr.mxu0 0.0
      %377 = vmatpush1.msra.mxu0 0.0
      %378 = vmatprep.subr.mxu0 0.0
      %379 = vmatpush1.msra.mxu0 0.0
      %380 = vmatprep.subr.mxu0 0.0
      %381 = vmatpush1.msra.mxu0 0.0
      %382 = vmatprep.subr.mxu0 0.0
      %383 = vmatpush1.msra.mxu0 0.0
      %384 = vmatprep.subr.mxu0 0.0
      %385 = vmatpush1.msra.mxu0 0.0
      %386 = vmatprep.subr.mxu0 0.0
      %387 = vmatpush1.msra.mxu0 0.0
      %388 = vmatprep.subr.mxu0 0.0
      %389 = vmatpush1.msra.mxu0 0.0
      %390 = vmatprep.subr.mxu0 0.0
      %391 = vmatpush1.msra.mxu0 0.0
      %392 = vmatprep.subr.mxu0 0.0
      %393 = vmatpush1.msra.mxu0 0.0
      %394 = vmatprep.subr.mxu0 0.0
      %395 = vmatpush1.msra.mxu0 0.0
      %396 = vmatprep.subr.mxu0 0.0
      %397 = vmatpush1.msra.mxu0 0.0
      %398 = vmatprep.subr.mxu0 0.0
      %399 = vmatpush1.msra.mxu0 0.0
      %400 = vmatprep.subr.mxu0 0.0
      %401 = vmatpush1.msra.mxu0 0.0
      %402 = vmatprep.subr.mxu0 0.0
      %403 = vmatpush1.msra.mxu0 0.0
      %404 = vmatprep.subr.mxu0 0.0
      %405 = vmatpush1.msra.mxu0 0.0
      %406 = vmatprep.subr.mxu0 0.0
      %407 = vmatpush1.msra.mxu0 0.0
      %408 = vmatprep.subr.mxu0 0.0
      %409 = vmatpush1.msra.mxu0 0.0
      %410 = vmatprep.subr.mxu0 0.0
      %411 = vmatpush1.msra.mxu0 0.0
      %412 = vmatprep.subr.mxu0 0.0
      %413 = vmatpush1.msra.mxu0 0.0
      %414 = vmatprep.subr.mxu0 0.0
      %415 = vmatpush1.msra.mxu0 0.0
      %416 = vmatprep.subr.mxu0 0.0
      %417 = vmatpush1.msra.mxu0 0.0
      %418 = vmatprep.subr.mxu0 0.0
      %419 = vmatpush1.msra.mxu0 0.0
      %420 = vmatprep.subr.mxu0 0.0
      %421 = vmatpush1.msra.mxu0 0.0
      %422 = vmatprep.subr.mxu0 0.0
      %423 = vmatpush1.msra.mxu0 0.0
      %424 = vmatprep.mubr.f32.mxu0 0.0
      %425 = vmatmul.mubr.f32.gmra.mrb[0].mxu0 %v309
      %v426 = vpop.f32.mrb[0].mxu0
      %v427 = vadd.f32 0.0, %v426
      %v428 = vpop.f32.mrb[0].mxu0
      %429 = vmatprep.mubr.f32.mxu0 0.0
      %430 = vmatmul.mubr.f32.gmra.mrb[0].mxu0 %v312
      %v431 = vpop.f32.mrb[0].mxu0
      %v432 = vadd.f32 0.0, %v431
      %v433 = vpop.f32.mrb[0].mxu0
      %434 = vmatprep.mubr.f32.mxu0 0.0
      %435 = vmatmul.mubr.f32.gmra.mrb[0].mxu0 %v315
      %v436 = vpop.f32.mrb[0].mxu0
      %v437 = vadd.f32 0.0, %v436
      %v438 = vpop.f32.mrb[0].mxu0
      %439 = vmatprep.mubr.f32.mxu0 0.0
      %440 = vmatmul.mubr.f32.gmra.mrb[0].mxu0 %v318
      %v441 = vpop.f32.mrb[0].mxu0
      %v442 = vadd.f32 0.0, %v441
      %v443 = vpop.f32.mrb[0].mxu0
      %444 = vmatprep.mubr.f32.mxu0 0.0
      %445 = vmatmul.mubr.f32.gmra.mrb[0].mxu0 %v321
      %v446 = vpop.f32.mrb[0].mxu0
      %v447 = vadd.f32 0.0, %v446
      %v448 = vpop.f32.mrb[0].mxu0
      %449 = vmatprep.mubr.f32.mxu0 0.0
      %450 = vmatmul.mubr.f32.gmra.mrb[0].mxu0 %v324
      %v451 = vpop.f32.mrb[0].mxu0
      %v452 = vadd.f32 0.0, %v451
      %v453 = vpop.f32.mrb[0].mxu0
      %454 = vmatprep.mubr.f32.mxu0 0.0
      %455 = vmatmul.mubr.f32.gmra.mrb[0].mxu0 %v327
      %v456 = vpop.f32.mrb[0].mxu0
      %v457 = vadd.f32 0.0, %v456
      %v458 = vpop.f32.mrb[0].mxu0
      %459 = vmatprep.mubr.f32.mxu0 0.0
      %460 = vmatmul.mubr.f32.gmra.mrb[0].mxu0 %v330
      %v461 = vpop.f32.mrb[0].mxu0
      %v462 = vadd.f32 0.0, %v461
      %v463 = vpop.f32.mrb[0].mxu0
      %464 = vmatprep.mubr.f32.mxu0 0.0
      %465 = vmatmul.mubr.f32.gmra.mrb[0].mxu0 %v333
      %v466 = vpop.f32.mrb[0].mxu0
      %v467 = vadd.f32 0.0, %v466
      %v468 = vpop.f32.mrb[0].mxu0
      %469 = vmatprep.mubr.f32.mxu0 0.0
      %470 = vmatmul.mubr.f32.gmra.mrb[0].mxu0 %v336
      %v471 = vpop.f32.mrb[0].mxu0
      %v472 = vadd.f32 0.0, %v471
      %v473 = vpop.f32.mrb[0].mxu0
      %474 = vmatprep.mubr.f32.mxu0 0.0
      %475 = vmatmul.mubr.f32.gmra.mrb[0].mxu0 %v339
      %v476 = vpop.f32.mrb[0].mxu0
      %v477 = vadd.f32 0.0, %v476
      %v478 = vpop.f32.mrb[0].mxu0
      %479 = vmatprep.mubr.f32.mxu0 0.0
      %480 = vmatmul.mubr.f32.gmra.mrb[0].mxu0 %v342
      %v481 = vpop.f32.mrb[0].mxu0
      %v482 = vadd.f32 0.0, %v481
      %v483 = vpop.f32.mrb[0].mxu0
      %484 = vmatprep.mubr.f32.mxu0 0.0
      %485 = vmatmul.mubr.f32.gmra.mrb[0].mxu0 %v345
      %v486 = vpop.f32.mrb[0].mxu0
      %v487 = vadd.f32 0.0, %v486
      %v488 = vpop.f32.mrb[0].mxu0
      %489 = vmatprep.mubr.f32.mxu0 0.0
      %490 = vmatmul.mubr.f32.gmra.mrb[0].mxu0 %v348
      %v491 = vpop.f32.mrb[0].mxu0
      %v492 = vadd.f32 0.0, %v491
      %v493 = vpop.f32.mrb[0].mxu0
      %494 = vmatprep.mubr.f32.mxu0 0.0
      %495 = vmatmul.mubr.f32.gmra.mrb[0].mxu0 %v351
      %v496 = vpop.f32.mrb[0].mxu0
      %v497 = vadd.f32 0.0, %v496
      %v498 = vpop.f32.mrb[0].mxu0
      %499 = vmatprep.mubr.f32.mxu0 0.0
      %500 = vmatmul.mubr.f32.gmra.mrb[0].mxu0 %v354
      %v501 = vpop.f32.mrb[0].mxu0
      %v502 = vadd.f32 0.0, %v501
      %v503 = vpop.f32.mrb[0].mxu0
      %504 = vdwg.mxu0
      %vm505 = vcmask 64512
      %506 = vst.msk [vmem:[%s238] sm:$0xff] %vm505, %v427
      %507 = vst.msk [vmem:[%s238 + $0x8] sm:$0xff] %vm505, %v432
      %508 = vst.msk [vmem:[%s238 + $0x10] sm:$0xff] %vm505, %v437
      %509 = vst.msk [vmem:[%s238 + $0x18] sm:$0xff] %vm505, %v442
      %510 = vst.msk [vmem:[%s238 + $0x20] sm:$0xff] %vm505, %v447
      %511 = vst.msk [vmem:[%s238 + $0x28] sm:$0xff] %vm505, %v452
      %512 = vst.msk [vmem:[%s238 + $0x30] sm:$0xff] %vm505, %v457
      %513 = vst.msk [vmem:[%s238 + $0x38] sm:$0xff] %vm505, %v462
      %514 = vst.msk [vmem:[%s238 + $0x40] sm:$0xff] %vm505, %v467
      %515 = vst.msk [vmem:[%s238 + $0x48] sm:$0xff] %vm505, %v472
      %516 = vst.msk [vmem:[%s238 + $0x50] sm:$0xff] %vm505, %v477
      %517 = vst.msk [vmem:[%s238 + $0x58] sm:$0xff] %vm505, %v482
      %518 = vst.msk [vmem:[%s238 + $0x60] sm:$0xff] %vm505, %v487
      %519 = vst.msk [vmem:[%s238 + $0x68] sm:$0xff] %vm505, %v492
      %520 = vst.msk [vmem:[%s238 + $0x70] sm:$0xff] %vm505, %v497
      %521 = vst.msk [vmem:[%s238 + $0x78] sm:$0xff] %vm505, %v502
      %v522 = vsel %vm505, %v427, 0.0
      %v523 = vsel %vm505, %v432, 0.0
      %v524 = vadd.f32 %v522, %v523
      %v525 = vsel %vm505, %v437, 0.0
      %v526 = vadd.f32 %v524, %v525
      %v527 = vsel %vm505, %v442, 0.0
      %v528 = vadd.f32 %v526, %v527
      %v529 = vsel %vm505, %v447, 0.0
      %v530 = vadd.f32 %v528, %v529
      %v531 = vsel %vm505, %v452, 0.0
      %v532 = vadd.f32 %v530, %v531
      %v533 = vsel %vm505, %v457, 0.0
      %v534 = vadd.f32 %v532, %v533
      %v535 = vsel %vm505, %v462, 0.0
      %v536 = vadd.f32 %v534, %v535
      %v537 = vsel %vm505, %v467, 0.0
      %v538 = vadd.f32 %v536, %v537
      %v539 = vsel %vm505, %v472, 0.0
      %v540 = vadd.f32 %v538, %v539
      %v541 = vsel %vm505, %v477, 0.0
      %v542 = vadd.f32 %v540, %v541
      %v543 = vsel %vm505, %v482, 0.0
      %v544 = vadd.f32 %v542, %v543
      %v545 = vsel %vm505, %v487, 0.0
      %v546 = vadd.f32 %v544, %v545
      %v547 = vsel %vm505, %v492, 0.0
      %v548 = vadd.f32 %v546, %v547
      %v549 = vsel %vm505, %v497, 0.0
      %v550 = vadd.f32 %v548, %v549
      %v551 = vsel %vm505, %v502, 0.0
      %v552 = vadd.f32 %v550, %v551
      %v553 = vrot.slane %v552, 4
      %v554 = vadd.f32 %v552, %v553
      %v555 = vrot.slane %v554, 2
      %v556 = vadd.f32 %v554, %v555
      %v557 = vrot.slane %v556, 1
      %v558 = vadd.f32 %v556, %v557
      %v559 = vmul.f32 %v427, %v427
      %v560 = vmul.f32 %v432, %v432
      %v561 = vmul.f32 %v437, %v437
      %v562 = vmul.f32 %v442, %v442
      %v563 = vmul.f32 %v447, %v447
      %v564 = vmul.f32 %v452, %v452
      %v565 = vmul.f32 %v457, %v457
      %v566 = vmul.f32 %v462, %v462
      %v567 = vmul.f32 %v467, %v467
      %v568 = vmul.f32 %v472, %v472
      %v569 = vmul.f32 %v477, %v477
      %v570 = vmul.f32 %v482, %v482
      %v571 = vmul.f32 %v487, %v487
      %v572 = vmul.f32 %v492, %v492
      %v573 = vmul.f32 %v497, %v497
      %v574 = vmul.f32 %v502, %v502
      %v575 = vsel %vm505, %v559, 0.0
      %v576 = vsel %vm505, %v560, 0.0
      %v577 = vadd.f32 %v575, %v576
      %v578 = vsel %vm505, %v561, 0.0
      %v579 = vadd.f32 %v577, %v578
      %v580 = vsel %vm505, %v562, 0.0
      %v581 = vadd.f32 %v579, %v580
      %v582 = vsel %vm505, %v563, 0.0
      %v583 = vadd.f32 %v581, %v582
      %v584 = vsel %vm505, %v564, 0.0
      %v585 = vadd.f32 %v583, %v584
      %v586 = vsel %vm505, %v565, 0.0
      %v587 = vadd.f32 %v585, %v586
      %v588 = vsel %vm505, %v566, 0.0
      %v589 = vadd.f32 %v587, %v588
      %v590 = vsel %vm505, %v567, 0.0
      %v591 = vadd.f32 %v589, %v590
      %v592 = vsel %vm505, %v568, 0.0
      %v593 = vadd.f32 %v591, %v592
      %v594 = vsel %vm505, %v569, 0.0
      %v595 = vadd.f32 %v593, %v594
      %v596 = vsel %vm505, %v570, 0.0
      %v597 = vadd.f32 %v595, %v596
      %v598 = vsel %vm505, %v571, 0.0
      %v599 = vadd.f32 %v597, %v598
      %v600 = vsel %vm505, %v572, 0.0
      %v601 = vadd.f32 %v599, %v600
      %v602 = vsel %vm505, %v573, 0.0
      %v603 = vadd.f32 %v601, %v602
      %v604 = vsel %vm505, %v574, 0.0
      %v605 = vadd.f32 %v603, %v604
      %v606 = vrot.slane %v605, 4
      %v607 = vadd.f32 %v605, %v606
      %v608 = vrot.slane %v607, 2
      %v609 = vadd.f32 %v607, %v608
      %v610 = vrot.slane %v609, 1
      %v611 = vadd.f32 %v609, %v610
      %vm612 = vcmask 1040384
      %v613 = vsel %vm612, %v558, %v611
      %vm614 = vcmask 58368
      %615 = vst.msk [vmem:[%s243] sm:$0x3] %vm614, %v613
      %s616 = smul.u32 8, %s17
      %p617 = scmp.lt.s32.totalorder %s616, 31
      %s618 = scalar_select %p617, %s616, 31
      %s619 = smul.addr %s618, 2
      %s620 = smul.addr %s619, 8
      %s621 = scalar_lea.vmem %s4, %s620
      %p622 = scmp.lt.s32.totalorder %s17, 3
      %s623 = scalar_select %p622, %s17, 3
      %s624 = smul.addr %s623, 2
      %s625 = scalar_lea.vmem %s5, %s624
      // Predicated region
      $region37: #{bottleneck_decoder_forward.6} parent=35 // pred_check
        %p626 = pneg %p124
      $region38: #{bottleneck_decoder_forward.6} parent=35 // pred_check_branch
        %628 = sbr.rel (%p626) target = $region40
      $region39: #{bottleneck_decoder_forward.6} parent=35 // pred_region
        %s629 = smul.u32 8, %s17
      $region40: #{bottleneck_decoder_forward.6} parent=35 // pred_fallthru
        _
      // Predicated region
      $region41: #{bottleneck_decoder_forward.6} parent=35 // pred_check
        %p630 = pneg %p150
      $region42: #{bottleneck_decoder_forward.6} parent=35 // pred_check_branch
        %632 = sbr.rel (%p630) target = $region44
      $region43: #{bottleneck_decoder_forward.6} parent=35 // pred_region
        _
      $region44: #{bottleneck_decoder_forward.6} parent=35 // pred_fallthru
        _
    $region36: #{bottleneck_decoder_forward.6} parent=5 // pred_fallthru
      _
    %p633 = scmp.le.s32.totalorder 2, %s12
    // Predicated region
    $region45: #{bottleneck_decoder_forward.6} parent=5 // pred_check
      %p634 = pneg %p633
    $region46: #{bottleneck_decoder_forward.6} parent=5 // pred_check_branch
      %636 = sbr.rel (%p634) target = $region48
    $region47: #{bottleneck_decoder_forward.6} parent=5 // pred_region
      %s637 = ssub.s32 %s12, 2
      // Predicated region
      $region49: #{bottleneck_decoder_forward.6} parent=47 // pred_check
        %p638 = pneg %p130
      $region50: #{bottleneck_decoder_forward.6} parent=47 // pred_check_branch
        %640 = sbr.rel (%p638) target = $region52
      $region51: #{bottleneck_decoder_forward.6} parent=47 // pred_region
        %s641 = smul.u32 8, %s18
        %p642 = scmp.lt.s32.totalorder %s641, 31
        %s643 = scalar_select %p642, %s641, 31
        %s644 = smul.addr %s643, 2
        %s645 = smul.addr %s644, 8
        %s646 = scalar_lea.vmem %s4, %s645
      $region52: #{bottleneck_decoder_forward.6} parent=47 // pred_fallthru
        _
      // Predicated region
      $region53: #{bottleneck_decoder_forward.6} parent=47 // pred_check
        %p647 = pneg %p156
      $region54: #{bottleneck_decoder_forward.6} parent=47 // pred_check_branch
        %649 = sbr.rel (%p647) target = $region56
      $region55: #{bottleneck_decoder_forward.6} parent=47 // pred_region
        %p650 = scmp.lt.s32.totalorder %s18, 3
        %s651 = scalar_select %p650, %s18, 3
        %s652 = smul.addr %s651, 2
        %s653 = scalar_lea.vmem %s5, %s652
      $region56: #{bottleneck_decoder_forward.6} parent=47 // pred_fallthru
        _
    $region48: #{bottleneck_decoder_forward.6} parent=5 // pred_fallthru
      _
  $region6: #{bottleneck_decoder_forward.6} parent=0 // loop_footer
    %s16 = sadd.s32 1, %s12
  $region7: #{bottleneck_decoder_forward.6} parent=0 // loop_footer_branch
    %11 = sbr.rel target = $region3
  $region8: #{bottleneck_decoder_forward.6} parent=0 // loop_exit
    _

// kernel: bottleneck_decoder_forward.8
$region0: #{bottleneck_decoder_forward.8}
  #allocation0 [shape = 'u32[]', space=smem, size = 0x4, offset = 0x4, fixed_abs, tag = 'smem constant byte address 0x4 - core index']
  #allocation1 [shape = 'u32[144,128]{1,0:T(1,128)}', space=vmem, size = 0x12000, scoped, tag = 'internal scratch']
  %s0 = inlined_call_operand.vmem [shape: f32[32,16,8], index: 0, kind: input, shape index: {}]
  %s1 = inlined_call_operand.vmem [shape: f32[8,8], index: 1, kind: input, shape index: {}]
  %s2 = inlined_call_operand.vmem [shape: f32[1,1,8], index: 2, kind: input, shape index: {}]
  %s3 = inlined_call_operand.vmem [shape: f32[1,1,8], index: 3, kind: input, shape index: {}]
  %s4 = inlined_call_operand.vmem [shape: f32[32,16,8], index: 4, kind: output, shape index: {0}]
  %s5 = inlined_call_operand.vmem [shape: f32[4,2,8], index: 5, kind: output, shape index: {1}]
  %6 = xla_tuple %s4, %s5
  %s7 = sld [smem:[#allocation0]]
  $region57: #{bottleneck_decoder_forward.8} parent=0
    _
  %s9 = ssub.s32 1, %s7
  %s10 = scalar_select 0, %s9, %s7
  loop: start=0, step=1, limit=6
  $region2: #{bottleneck_decoder_forward.8} parent=0 // loop_pre_header
    _
  $region3: #{bottleneck_decoder_forward.8} parent=0 // loop_header
    %s12 = sphi 0, %s16
    %p13 = scmp.ge.s32.totalorder %s12, 6
    %s22 = sphi 0, %s24
    %s25 = sphi 0, %s22
    %s26 = sphi 0, %s25
    %s42 = sphi 0, %s26
    %s46 = sphi 0, %s46
    %s48 = sphi 0, %s46
    %s49 = sphi 0, %s48
    %s63 = sphi 0, %s49
    %s67 = sphi 0, %s67
    %s69 = sphi 0, %s67
    %s70 = sphi 0, %s69
    %s84 = sphi 0, %s70
    %s88 = sphi 0, %s88
    %s90 = sphi 0, %s88
    %s91 = sphi 0, %s90
    %s105 = sphi 0, %s91
    %s111 = sphi 0, %s113
    %s114 = sphi 0, %s111
    %s115 = sphi 0, %s114
    %s131 = sphi 0, %s115
    %s137 = sphi 0, %s139
    %s140 = sphi 0, %s137
    %s141 = sphi 0, %s140
    %s157 = sphi 0, %s141
  $region4: #{bottleneck_decoder_forward.8} parent=0 // loop_header_branch
    %15 = sbr.rel (%p13) target = $region8
  $region5: #{bottleneck_decoder_forward.8} parent=0 // loop_body
    %s17 = ssub.s32 %s12, 1
    %s18 = ssub.s32 %s12, 2
    %s19 = sadd.s32 %s12, 1
    %s20 = ssub.s32 %s12, %s19
    %p21 = scmp.eq.s32.totalorder %s20, 0
    %s23 = sadd.s32 %s22, 1
    %s24 = scalar_select %p21, %s22, %s23
    %p27 = pneg %p21
    %p28 = scmp.eq.s32.totalorder %s12, 3
    %p29 = por %p27, %p28
    %p30 = scmp.ne.s32.totalorder %s22, %s25
    %p31 = scmp.eq.s32.totalorder %s12, 0
    %p32 = por %p30, %p31
    %p33 = scmp.ne.s32.totalorder %s22, %s25
    %p34 = scmp.eq.s32.totalorder %s17, 3
    %p35 = por %p33, %p34
    %p36 = scmp.ne.s32.totalorder %s25, %s26
    %p37 = scmp.eq.s32.totalorder %s17, 0
    %p38 = por %p36, %p37
    %p39 = scmp.ne.s32.totalorder %s25, %s26
    %p40 = scmp.eq.s32.totalorder %s18, 3
    %p41 = por %p39, %p40
    %p43 = scmp.ne.s32.totalorder %s26, %s42
    %p44 = scmp.eq.s32.totalorder %s18, 0
    %p45 = por %p43, %p44
    %s47 = sadd.s32 %s46, 1
    %p50 = scmp.eq.s32.totalorder %s12, 3
    %p51 = scmp.ne.s32.totalorder %s46, %s48
    %p52 = scmp.eq.s32.totalorder %s12, 0
    %p53 = por %p51, %p52
    %p54 = scmp.ne.s32.totalorder %s46, %s48
    %p55 = scmp.eq.s32.totalorder %s17, 3
    %p56 = por %p54, %p55
    %p57 = scmp.ne.s32.totalorder %s48, %s49
    %p58 = scmp.eq.s32.totalorder %s17, 0
    %p59 = por %p57, %p58
    %p60 = scmp.ne.s32.totalorder %s48, %s49
    %p61 = scmp.eq.s32.totalorder %s18, 3
    %p62 = por %p60, %p61
    %p64 = scmp.ne.s32.totalorder %s49, %s63
    %p65 = scmp.eq.s32.totalorder %s18, 0
    %p66 = por %p64, %p65
    %s68 = sadd.s32 %s67, 1
    %p71 = scmp.eq.s32.totalorder %s12, 3
    %p72 = scmp.ne.s32.totalorder %s67, %s69
    %p73 = scmp.eq.s32.totalorder %s12, 0
    %p74 = por %p72, %p73
    %p75 = scmp.ne.s32.totalorder %s67, %s69
    %p76 = scmp.eq.s32.totalorder %s17, 3
    %p77 = por %p75, %p76
    %p78 = scmp.ne.s32.totalorder %s69, %s70
    %p79 = scmp.eq.s32.totalorder %s17, 0
    %p80 = por %p78, %p79
    %p81 = scmp.ne.s32.totalorder %s69, %s70
    %p82 = scmp.eq.s32.totalorder %s18, 3
    %p83 = por %p81, %p82
    %p85 = scmp.ne.s32.totalorder %s70, %s84
    %p86 = scmp.eq.s32.totalorder %s18, 0
    %p87 = por %p85, %p86
    %s89 = sadd.s32 %s88, 1
    %p92 = scmp.eq.s32.totalorder %s12, 3
    %p93 = scmp.ne.s32.totalorder %s88, %s90
    %p94 = scmp.eq.s32.totalorder %s12, 0
    %p95 = por %p93, %p94
    %p96 = scmp.ne.s32.totalorder %s88, %s90
    %p97 = scmp.eq.s32.totalorder %s17, 3
    %p98 = por %p96, %p97
    %p99 = scmp.ne.s32.totalorder %s90, %s91
    %p100 = scmp.eq.s32.totalorder %s17, 0
    %p101 = por %p99, %p100
    %p102 = scmp.ne.s32.totalorder %s90, %s91
    %p103 = scmp.eq.s32.totalorder %s18, 3
    %p104 = por %p102, %p103
    %p106 = scmp.ne.s32.totalorder %s91, %s105
    %p107 = scmp.eq.s32.totalorder %s18, 0
    %p108 = por %p106, %p107
    %s109 = ssub.s32 %s12, %s19
    %p110 = scmp.eq.s32.totalorder %s109, 0
    %s112 = sadd.s32 %s111, 1
    %s113 = scalar_select %p110, %s111, %s112
    %p116 = pneg %p110
    %p117 = scmp.eq.s32.totalorder %s12, 3
    %p118 = por %p116, %p117
    %p119 = scmp.ne.s32.totalorder %s111, %s114
    %p120 = scmp.eq.s32.totalorder %s12, 0
    %p121 = por %p119, %p120
    %p122 = scmp.ne.s32.totalorder %s111, %s114
    %p123 = scmp.eq.s32.totalorder %s17, 3
    %p124 = por %p122, %p123
    %p125 = scmp.ne.s32.totalorder %s114, %s115
    %p126 = scmp.eq.s32.totalorder %s17, 0
    %p127 = por %p125, %p126
    %p128 = scmp.ne.s32.totalorder %s114, %s115
    %p129 = scmp.eq.s32.totalorder %s18, 3
    %p130 = por %p128, %p129
    %p132 = scmp.ne.s32.totalorder %s115, %s131
    %p133 = scmp.eq.s32.totalorder %s18, 0
    %p134 = por %p132, %p133
    %s135 = ssub.s32 %s12, %s19
    %p136 = scmp.eq.s32.totalorder %s135, 0
    %s138 = sadd.s32 %s137, 1
    %s139 = scalar_select %p136, %s137, %s138
    %p142 = pneg %p136
    %p143 = scmp.eq.s32.totalorder %s12, 3
    %p144 = por %p142, %p143
    %p145 = scmp.ne.s32.totalorder %s137, %s140
    %p146 = scmp.eq.s32.totalorder %s12, 0
    %p147 = por %p145, %p146
    %p148 = scmp.ne.s32.totalorder %s137, %s140
    %p149 = scmp.eq.s32.totalorder %s17, 3
    %p150 = por %p148, %p149
    %p151 = scmp.ne.s32.totalorder %s140, %s141
    %p152 = scmp.eq.s32.totalorder %s17, 0
    %p153 = por %p151, %p152
    %p154 = scmp.ne.s32.totalorder %s140, %s141
    %p155 = scmp.eq.s32.totalorder %s18, 3
    %p156 = por %p154, %p155
    %p158 = scmp.ne.s32.totalorder %s141, %s157
    %p159 = scmp.eq.s32.totalorder %s18, 0
    %p160 = por %p158, %p159
    %p161 = scmp.le.s32.totalorder 1, %s12
    %p162 = scmp.lt.s32.totalorder %s12, 5
    %p163 = pnand %p161, %p162
    %p164 = pneg %p163
    // Predicated region
    $region9: #{bottleneck_decoder_forward.8} parent=5 // pred_check
      _
    $region10: #{bottleneck_decoder_forward.8} parent=5 // pred_check_branch
      %166 = sbr.rel (%p163) target = $region12
    $region11: #{bottleneck_decoder_forward.8} parent=5 // pred_region
      %s167 = ssub.s32 %s12, 1
      // Predicated region
      $region13: #{bottleneck_decoder_forward.8} parent=11 // pred_check
        %p168 = pneg %p59
      $region14: #{bottleneck_decoder_forward.8} parent=11 // pred_check_branch
        %170 = sbr.rel (%p168) target = $region16
      $region15: #{bottleneck_decoder_forward.8} parent=11 // pred_region
        _
      $region16: #{bottleneck_decoder_forward.8} parent=11 // pred_fallthru
        _
      // Predicated region
      $region17: #{bottleneck_decoder_forward.8} parent=11 // pred_check
        %p171 = pneg %p80
      $region18: #{bottleneck_decoder_forward.8} parent=11 // pred_check_branch
        %173 = sbr.rel (%p171) target = $region20
      $region19: #{bottleneck_decoder_forward.8} parent=11 // pred_region
        _
      $region20: #{bottleneck_decoder_forward.8} parent=11 // pred_fallthru
        _
      // Predicated region
      $region21: #{bottleneck_decoder_forward.8} parent=11 // pred_check
        %p174 = pneg %p101
      $region22: #{bottleneck_decoder_forward.8} parent=11 // pred_check_branch
        %176 = sbr.rel (%p174) target = $region24
      $region23: #{bottleneck_decoder_forward.8} parent=11 // pred_region
        _
      $region24: #{bottleneck_decoder_forward.8} parent=11 // pred_fallthru
        _
    $region12: #{bottleneck_decoder_forward.8} parent=5 // pred_fallthru
      _
    %p177 = scmp.lt.s32.totalorder %s12, 4
    // Predicated region
    $region25: #{bottleneck_decoder_forward.8} parent=5 // pred_check
      %p178 = pneg %p177
    $region26: #{bottleneck_decoder_forward.8} parent=5 // pred_check_branch
      %180 = sbr.rel (%p178) target = $region28
    $region27: #{bottleneck_decoder_forward.8} parent=5 // pred_region
      // Predicated region
      $region29: #{bottleneck_decoder_forward.8} parent=27 // pred_check
        %p181 = pneg %p32
      $region30: #{bottleneck_decoder_forward.8} parent=27 // pred_check_branch
        %183 = sbr.rel (%p181) target = $region32
      $region31: #{bottleneck_decoder_forward.8} parent=27 // pred_region
        %s184 = smul.u32 8, %s12
        %p185 = scmp.lt.s32.totalorder %s184, 31
        %s186 = scalar_select %p185, %s184, 31
        %s187 = smul.addr %s186, 2
        %s188 = smul.addr %s187, 8
        %s189 = scalar_lea.vmem %s0, %s188
        %s190 = smul.u32 8, %s12
      $region32: #{bottleneck_decoder_forward.8} parent=27 // pred_fallthru
        _
    $region28: #{bottleneck_decoder_forward.8} parent=5 // pred_fallthru
      _
    %p191 = scmp.le.s32.totalorder 1, %s12
    %p192 = scmp.lt.s32.totalorder %s12, 5
    %p193 = pnand %p191, %p192
    %p194 = pneg %p193
    // Predicated region
    $region33: #{bottleneck_decoder_forward.8} parent=5 // pred_check
      _
    $region34: #{bottleneck_decoder_forward.8} parent=5 // pred_check_branch
      %196 = sbr.rel (%p193) target = $region36
    $region35: #{bottleneck_decoder_forward.8} parent=5 // pred_region
      %s197 = ssub.s32 %s12, 1
      %s198 = smul.u32 8, %s17
      %p199 = scmp.lt.s32.totalorder %s198, 31
      %s200 = scalar_select %p199, %s198, 31
      %s201 = smul.addr %s200, 2
      %s202 = smul.addr %s201, 8
      %s203 = scalar_lea.vmem %s0, %s202
      %p204 = pneg %p38
      %p205 = pneg %p35
      %p206 = pneg %p59
      %p207 = pneg %p56
      %p208 = pneg %p80
      %p209 = pneg %p77
      %p210 = pneg %p101
      %p211 = pneg %p98
      %p212 = pneg %p127
      %p213 = pneg %p124
      %s214 = smul.u32 8, %s17
      %p215 = scmp.lt.s32.totalorder %s214, 31
      %s216 = scalar_select %p215, %s214, 31
      %s217 = smul.addr %s216, 2
      %s218 = smul.addr %s217, 8
      %s219 = scalar_lea.vmem %s4, %s218
      %p220 = pneg %p153
      %p221 = pneg %p150
      %p222 = scmp.lt.s32.totalorder %s17, 3
      %s223 = scalar_select %p222, %s17, 3
      %s224 = smul.addr %s223, 2
      %s225 = scalar_lea.vmem %s5, %s224
      %s226 = smul.u32 8, %s17
      %p227 = scmp.lt.s32.totalorder %s226, 31
      %s228 = scalar_select %p227, %s226, 31
      %s229 = smul.addr %s228, 2
      %s230 = smul.addr %s229, 8
      %s231 = scalar_lea.vmem %s0, %s230
      %s232 = smul.u32 8, %s17
      %s233 = smul.u32 8, %s17
      %p234 = scmp.lt.s32.totalorder %s233, 31
      %s235 = scalar_select %p234, %s233, 31
      %s236 = smul.addr %s235, 2
      %s237 = smul.addr %s236, 8
      %s238 = scalar_lea.vmem %s4, %s237
      %s239 = smul.u32 8, %s17
      %p240 = scmp.lt.s32.totalorder %s17, 3
      %s241 = scalar_select %p240, %s17, 3
      %s242 = smul.addr %s241, 2
      %s243 = scalar_lea.vmem %s5, %s242
      %v244 = vld [vmem:[%s231] sm:$0xff]
      %v245 = vld [vmem:[%s231 + $0x8] sm:$0xff]
      %v246 = vld [vmem:[%s231 + $0x10] sm:$0xff]
      %v247 = vld [vmem:[%s231 + $0x18] sm:$0xff]
      %v248 = vld [vmem:[%s231 + $0x20] sm:$0xff]
      %v249 = vld [vmem:[%s231 + $0x28] sm:$0xff]
      %v250 = vld [vmem:[%s231 + $0x30] sm:$0xff]
      %v251 = vld [vmem:[%s231 + $0x38] sm:$0xff]
      %v252 = vld [vmem:[%s231 + $0x40] sm:$0xff]
      %v253 = vld [vmem:[%s231 + $0x48] sm:$0xff]
      %v254 = vld [vmem:[%s231 + $0x50] sm:$0xff]
      %v255 = vld [vmem:[%s231 + $0x58] sm:$0xff]
      %v256 = vld [vmem:[%s231 + $0x60] sm:$0xff]
      %v257 = vld [vmem:[%s231 + $0x68] sm:$0xff]
      %v258 = vld [vmem:[%s231 + $0x70] sm:$0xff]
      %v259 = vld [vmem:[%s231 + $0x78] sm:$0xff]
      %v260 = vld [vmem:[%s2] sm:$0x1]
      %v262 = vlaneseq
      %v263 = vshrl.u32 %v262, 7
      %v264 = vsub.s32 0, %v263
      %v265 = vrot.slane %v260, %v264
      %v267 = vmul.f32 %v244, %v265
      %v268 = vmul.f32 %v245, %v265
      %v269 = vmul.f32 %v246, %v265
      %v270 = vmul.f32 %v247, %v265
      %v271 = vmul.f32 %v248, %v265
      %v272 = vmul.f32 %v249, %v265
      %v273 = vmul.f32 %v250, %v265
      %v274 = vmul.f32 %v251, %v265
      %v275 = vmul.f32 %v252, %v265
      %v276 = vmul.f32 %v253, %v265
      %v277 = vmul.f32 %v254, %v265
      %v278 = vmul.f32 %v255, %v265
      %v279 = vmul.f32 %v256, %v265
      %v280 = vmul.f32 %v257, %v265
      %v281 = vmul.f32 %v258, %v265
      %v282 = vmul.f32 %v259, %v265
      %v283 = vld [vmem:[%s3] sm:$0x1]
      %v285 = vlaneseq
      %v286 = vshrl.u32 %v285, 7
      %v287 = vsub.s32 0, %v286
      %v288 = vrot.slane %v283, %v287
      %v290 = vadd.f32 %v267, %v288
      %v291 = vadd.f32 %v268, %v288
      %v292 = vadd.f32 %v269, %v288
      %v293 = vadd.f32 %v270, %v288
      %v294 = vadd.f32 %v271, %v288
      %v295 = vadd.f32 %v272, %v288
      %v296 = vadd.f32 %v273, %v288
      %v297 = vadd.f32 %v274, %v288
      %v298 = vadd.f32 %v275, %v288
      %v299 = vadd.f32 %v276, %v288
      %v300 = vadd.f32 %v277, %v288
      %v301 = vadd.f32 %v278, %v288
      %v302 = vadd.f32 %v279, %v288
      %v303 = vadd.f32 %v280, %v288
      %v304 = vadd.f32 %v281, %v288
      %v305 = vadd.f32 %v282, %v288
      %v306 = vmax.f32 %v290, 0.0
      %v307 = vmax.f32 %v291, 0.0
      %v308 = vmax.f32 %v292, 0.0
      %v309 = vmax.f32 %v293, 0.0
      %v310 = vmax.f32 %v294, 0.0
      %v311 = vmax.f32 %v295, 0.0
      %v312 = vmax.f32 %v296, 0.0
      %v313 = vmax.f32 %v297, 0.0
      %v314 = vmax.f32 %v298, 0.0
      %v315 = vmax.f32 %v299, 0.0
      %v316 = vmax.f32 %v300, 0.0
      %v317 = vmax.f32 %v301, 0.0
      %v318 = vmax.f32 %v302, 0.0
      %v319 = vmax.f32 %v303, 0.0
      %v320 = vmax.f32 %v304, 0.0
      %v321 = vmax.f32 %v305, 0.0
      %v322 = vld [vmem:[%s1] sm:$0xff]
      %vm323 = vcmask 64512
      %v325 = vsel %vm323, %v306, 0
      %v328 = vsel %vm323, %v307, 0
      %v331 = vsel %vm323, %v308, 0
      %v334 = vsel %vm323, %v309, 0
      %v337 = vsel %vm323, %v310, 0
      %v340 = vsel %vm323, %v311, 0
      %v343 = vsel %vm323, %v312, 0
      %v346 = vsel %vm323, %v313, 0
      %v349 = vsel %vm323, %v314, 0
      %v352 = vsel %vm323, %v315, 0
      %v355 = vsel %vm323, %v316, 0
      %v358 = vsel %vm323, %v317, 0
      %v361 = vsel %vm323, %v318, 0
      %v364 = vsel %vm323, %v319, 0
      %v367 = vsel %vm323, %v320, 0
      %v370 = vsel %vm323, %v321, 0
      %372 = vmatprep.subr.mxu0 0.0
      %373 = vmatpush1.msra.mxu0 %v322
      %374 = vmatprep.subr.mxu0 0.0
      %375 = vmatpush1.msra.mxu0 0.0
      %376 = vmatprep.subr.mxu0 0.0
      %377 = vmatpush1.msra.mxu0 0.0
      %378 = vmatprep.subr.mxu0 0.0
      %379 = vmatpush1.msra.mxu0 0.0
      %380 = vmatprep.subr.mxu0 0.0
      %381 = vmatpush1.msra.mxu0 0.0
      %382 = vmatprep.subr.mxu0 0.0
      %383 = vmatpush1.msra.mxu0 0.0
      %384 = vmatprep.subr.mxu0 0.0
      %385 = vmatpush1.msra.mxu0 0.0
      %386 = vmatprep.subr.mxu0 0.0
      %387 = vmatpush1.msra.mxu0 0.0
      %388 = vmatprep.subr.mxu0 0.0
      %389 = vmatpush1.msra.mxu0 0.0
      %390 = vmatprep.subr.mxu0 0.0
      %391 = vmatpush1.msra.mxu0 0.0
      %392 = vmatprep.subr.mxu0 0.0
      %393 = vmatpush1.msra.mxu0 0.0
      %394 = vmatprep.subr.mxu0 0.0
      %395 = vmatpush1.msra.mxu0 0.0
      %396 = vmatprep.subr.mxu0 0.0
      %397 = vmatpush1.msra.mxu0 0.0
      %398 = vmatprep.subr.mxu0 0.0
      %399 = vmatpush1.msra.mxu0 0.0
      %400 = vmatprep.subr.mxu0 0.0
      %401 = vmatpush1.msra.mxu0 0.0
      %402 = vmatprep.subr.mxu0 0.0
      %403 = vmatpush1.msra.mxu0 0.0
      %404 = vmatprep.subr.mxu0 0.0
      %405 = vmatpush1.msra.mxu0 0.0
      %406 = vmatprep.subr.mxu0 0.0
      %407 = vmatpush1.msra.mxu0 0.0
      %408 = vmatprep.subr.mxu0 0.0
      %409 = vmatpush1.msra.mxu0 0.0
      %410 = vmatprep.subr.mxu0 0.0
      %411 = vmatpush1.msra.mxu0 0.0
      %412 = vmatprep.subr.mxu0 0.0
      %413 = vmatpush1.msra.mxu0 0.0
      %414 = vmatprep.subr.mxu0 0.0
      %415 = vmatpush1.msra.mxu0 0.0
      %416 = vmatprep.subr.mxu0 0.0
      %417 = vmatpush1.msra.mxu0 0.0
      %418 = vmatprep.subr.mxu0 0.0
      %419 = vmatpush1.msra.mxu0 0.0
      %420 = vmatprep.subr.mxu0 0.0
      %421 = vmatpush1.msra.mxu0 0.0
      %422 = vmatprep.subr.mxu0 0.0
      %423 = vmatpush1.msra.mxu0 0.0
      %424 = vmatprep.subr.mxu0 0.0
      %425 = vmatpush1.msra.mxu0 0.0
      %426 = vmatprep.subr.mxu0 0.0
      %427 = vmatpush1.msra.mxu0 0.0
      %428 = vmatprep.subr.mxu0 0.0
      %429 = vmatpush1.msra.mxu0 0.0
      %430 = vmatprep.subr.mxu0 0.0
      %431 = vmatpush1.msra.mxu0 0.0
      %432 = vmatprep.subr.mxu0 0.0
      %433 = vmatpush1.msra.mxu0 0.0
      %434 = vmatprep.subr.mxu0 0.0
      %435 = vmatpush1.msra.mxu0 0.0
      %436 = vmatprep.mubr.f32.mxu0 0.0
      %437 = vmatmul.mubr.f32.gmra.mrb[0].mxu0 %v325
      %v438 = vpop.f32.mrb[0].mxu0
      %v439 = vadd.f32 0.0, %v438
      %v440 = vpop.f32.mrb[0].mxu0
      %441 = vmatprep.mubr.f32.mxu0 0.0
      %442 = vmatmul.mubr.f32.gmra.mrb[0].mxu0 %v328
      %v443 = vpop.f32.mrb[0].mxu0
      %v444 = vadd.f32 0.0, %v443
      %v445 = vpop.f32.mrb[0].mxu0
      %446 = vmatprep.mubr.f32.mxu0 0.0
      %447 = vmatmul.mubr.f32.gmra.mrb[0].mxu0 %v331
      %v448 = vpop.f32.mrb[0].mxu0
      %v449 = vadd.f32 0.0, %v448
      %v450 = vpop.f32.mrb[0].mxu0
      %451 = vmatprep.mubr.f32.mxu0 0.0
      %452 = vmatmul.mubr.f32.gmra.mrb[0].mxu0 %v334
      %v453 = vpop.f32.mrb[0].mxu0
      %v454 = vadd.f32 0.0, %v453
      %v455 = vpop.f32.mrb[0].mxu0
      %456 = vmatprep.mubr.f32.mxu0 0.0
      %457 = vmatmul.mubr.f32.gmra.mrb[0].mxu0 %v337
      %v458 = vpop.f32.mrb[0].mxu0
      %v459 = vadd.f32 0.0, %v458
      %v460 = vpop.f32.mrb[0].mxu0
      %461 = vmatprep.mubr.f32.mxu0 0.0
      %462 = vmatmul.mubr.f32.gmra.mrb[0].mxu0 %v340
      %v463 = vpop.f32.mrb[0].mxu0
      %v464 = vadd.f32 0.0, %v463
      %v465 = vpop.f32.mrb[0].mxu0
      %466 = vmatprep.mubr.f32.mxu0 0.0
      %467 = vmatmul.mubr.f32.gmra.mrb[0].mxu0 %v343
      %v468 = vpop.f32.mrb[0].mxu0
      %v469 = vadd.f32 0.0, %v468
      %v470 = vpop.f32.mrb[0].mxu0
      %471 = vmatprep.mubr.f32.mxu0 0.0
      %472 = vmatmul.mubr.f32.gmra.mrb[0].mxu0 %v346
      %v473 = vpop.f32.mrb[0].mxu0
      %v474 = vadd.f32 0.0, %v473
      %v475 = vpop.f32.mrb[0].mxu0
      %476 = vmatprep.mubr.f32.mxu0 0.0
      %477 = vmatmul.mubr.f32.gmra.mrb[0].mxu0 %v349
      %v478 = vpop.f32.mrb[0].mxu0
      %v479 = vadd.f32 0.0, %v478
      %v480 = vpop.f32.mrb[0].mxu0
      %481 = vmatprep.mubr.f32.mxu0 0.0
      %482 = vmatmul.mubr.f32.gmra.mrb[0].mxu0 %v352
      %v483 = vpop.f32.mrb[0].mxu0
      %v484 = vadd.f32 0.0, %v483
      %v485 = vpop.f32.mrb[0].mxu0
      %486 = vmatprep.mubr.f32.mxu0 0.0
      %487 = vmatmul.mubr.f32.gmra.mrb[0].mxu0 %v355
      %v488 = vpop.f32.mrb[0].mxu0
      %v489 = vadd.f32 0.0, %v488
      %v490 = vpop.f32.mrb[0].mxu0
      %491 = vmatprep.mubr.f32.mxu0 0.0
      %492 = vmatmul.mubr.f32.gmra.mrb[0].mxu0 %v358
      %v493 = vpop.f32.mrb[0].mxu0
      %v494 = vadd.f32 0.0, %v493
      %v495 = vpop.f32.mrb[0].mxu0
      %496 = vmatprep.mubr.f32.mxu0 0.0
      %497 = vmatmul.mubr.f32.gmra.mrb[0].mxu0 %v361
      %v498 = vpop.f32.mrb[0].mxu0
      %v499 = vadd.f32 0.0, %v498
      %v500 = vpop.f32.mrb[0].mxu0
      %501 = vmatprep.mubr.f32.mxu0 0.0
      %502 = vmatmul.mubr.f32.gmra.mrb[0].mxu0 %v364
      %v503 = vpop.f32.mrb[0].mxu0
      %v504 = vadd.f32 0.0, %v503
      %v505 = vpop.f32.mrb[0].mxu0
      %506 = vmatprep.mubr.f32.mxu0 0.0
      %507 = vmatmul.mubr.f32.gmra.mrb[0].mxu0 %v367
      %v508 = vpop.f32.mrb[0].mxu0
      %v509 = vadd.f32 0.0, %v508
      %v510 = vpop.f32.mrb[0].mxu0
      %511 = vmatprep.mubr.f32.mxu0 0.0
      %512 = vmatmul.mubr.f32.gmra.mrb[0].mxu0 %v370
      %v513 = vpop.f32.mrb[0].mxu0
      %v514 = vadd.f32 0.0, %v513
      %v515 = vpop.f32.mrb[0].mxu0
      %516 = vdwg.mxu0
      %517 = vst.msk [vmem:[%s238] sm:$0xff] %vm323, %v439
      %518 = vst.msk [vmem:[%s238 + $0x8] sm:$0xff] %vm323, %v444
      %519 = vst.msk [vmem:[%s238 + $0x10] sm:$0xff] %vm323, %v449
      %520 = vst.msk [vmem:[%s238 + $0x18] sm:$0xff] %vm323, %v454
      %521 = vst.msk [vmem:[%s238 + $0x20] sm:$0xff] %vm323, %v459
      %522 = vst.msk [vmem:[%s238 + $0x28] sm:$0xff] %vm323, %v464
      %523 = vst.msk [vmem:[%s238 + $0x30] sm:$0xff] %vm323, %v469
      %524 = vst.msk [vmem:[%s238 + $0x38] sm:$0xff] %vm323, %v474
      %525 = vst.msk [vmem:[%s238 + $0x40] sm:$0xff] %vm323, %v479
      %526 = vst.msk [vmem:[%s238 + $0x48] sm:$0xff] %vm323, %v484
      %527 = vst.msk [vmem:[%s238 + $0x50] sm:$0xff] %vm323, %v489
      %528 = vst.msk [vmem:[%s238 + $0x58] sm:$0xff] %vm323, %v494
      %529 = vst.msk [vmem:[%s238 + $0x60] sm:$0xff] %vm323, %v499
      %530 = vst.msk [vmem:[%s238 + $0x68] sm:$0xff] %vm323, %v504
      %531 = vst.msk [vmem:[%s238 + $0x70] sm:$0xff] %vm323, %v509
      %532 = vst.msk [vmem:[%s238 + $0x78] sm:$0xff] %vm323, %v514
      %v533 = vsel %vm323, %v439, 0.0
      %v534 = vsel %vm323, %v444, 0.0
      %v535 = vadd.f32 %v533, %v534
      %v536 = vsel %vm323, %v449, 0.0
      %v537 = vadd.f32 %v535, %v536
      %v538 = vsel %vm323, %v454, 0.0
      %v539 = vadd.f32 %v537, %v538
      %v540 = vsel %vm323, %v459, 0.0
      %v541 = vadd.f32 %v539, %v540
      %v542 = vsel %vm323, %v464, 0.0
      %v543 = vadd.f32 %v541, %v542
      %v544 = vsel %vm323, %v469, 0.0
      %v545 = vadd.f32 %v543, %v544
      %v546 = vsel %vm323, %v474, 0.0
      %v547 = vadd.f32 %v545, %v546
      %v548 = vsel %vm323, %v479, 0.0
      %v549 = vadd.f32 %v547, %v548
      %v550 = vsel %vm323, %v484, 0.0
      %v551 = vadd.f32 %v549, %v550
      %v552 = vsel %vm323, %v489, 0.0
      %v553 = vadd.f32 %v551, %v552
      %v554 = vsel %vm323, %v494, 0.0
      %v555 = vadd.f32 %v553, %v554
      %v556 = vsel %vm323, %v499, 0.0
      %v557 = vadd.f32 %v555, %v556
      %v558 = vsel %vm323, %v504, 0.0
      %v559 = vadd.f32 %v557, %v558
      %v560 = vsel %vm323, %v509, 0.0
      %v561 = vadd.f32 %v559, %v560
      %v562 = vsel %vm323, %v514, 0.0
      %v563 = vadd.f32 %v561, %v562
      %v564 = vrot.slane %v563, 4
      %v565 = vadd.f32 %v563, %v564
      %v566 = vrot.slane %v565, 2
      %v567 = vadd.f32 %v565, %v566
      %v568 = vrot.slane %v567, 1
      %v569 = vadd.f32 %v567, %v568
      %v570 = vmul.f32 %v439, %v439
      %v571 = vmul.f32 %v444, %v444
      %v572 = vmul.f32 %v449, %v449
      %v573 = vmul.f32 %v454, %v454
      %v574 = vmul.f32 %v459, %v459
      %v575 = vmul.f32 %v464, %v464
      %v576 = vmul.f32 %v469, %v469
      %v577 = vmul.f32 %v474, %v474
      %v578 = vmul.f32 %v479, %v479
      %v579 = vmul.f32 %v484, %v484
      %v580 = vmul.f32 %v489, %v489
      %v581 = vmul.f32 %v494, %v494
      %v582 = vmul.f32 %v499, %v499
      %v583 = vmul.f32 %v504, %v504
      %v584 = vmul.f32 %v509, %v509
      %v585 = vmul.f32 %v514, %v514
      %v586 = vsel %vm323, %v570, 0.0
      %v587 = vsel %vm323, %v571, 0.0
      %v588 = vadd.f32 %v586, %v587
      %v589 = vsel %vm323, %v572, 0.0
      %v590 = vadd.f32 %v588, %v589
      %v591 = vsel %vm323, %v573, 0.0
      %v592 = vadd.f32 %v590, %v591
      %v593 = vsel %vm323, %v574, 0.0
      %v594 = vadd.f32 %v592, %v593
      %v595 = vsel %vm323, %v575, 0.0
      %v596 = vadd.f32 %v594, %v595
      %v597 = vsel %vm323, %v576, 0.0
      %v598 = vadd.f32 %v596, %v597
      %v599 = vsel %vm323, %v577, 0.0
      %v600 = vadd.f32 %v598, %v599
      %v601 = vsel %vm323, %v578, 0.0
      %v602 = vadd.f32 %v600, %v601
      %v603 = vsel %vm323, %v579, 0.0
      %v604 = vadd.f32 %v602, %v603
      %v605 = vsel %vm323, %v580, 0.0
      %v606 = vadd.f32 %v604, %v605
      %v607 = vsel %vm323, %v581, 0.0
      %v608 = vadd.f32 %v606, %v607
      %v609 = vsel %vm323, %v582, 0.0
      %v610 = vadd.f32 %v608, %v609
      %v611 = vsel %vm323, %v583, 0.0
      %v612 = vadd.f32 %v610, %v611
      %v613 = vsel %vm323, %v584, 0.0
      %v614 = vadd.f32 %v612, %v613
      %v615 = vsel %vm323, %v585, 0.0
      %v616 = vadd.f32 %v614, %v615
      %v617 = vrot.slane %v616, 4
      %v618 = vadd.f32 %v616, %v617
      %v619 = vrot.slane %v618, 2
      %v620 = vadd.f32 %v618, %v619
      %v621 = vrot.slane %v620, 1
      %v622 = vadd.f32 %v620, %v621
      %vm623 = vcmask 1040384
      %v624 = vsel %vm623, %v569, %v622
      %vm625 = vcmask 58368
      %626 = vst.msk [vmem:[%s243] sm:$0x3] %vm625, %v624
      %s627 = smul.u32 8, %s17
      %p628 = scmp.lt.s32.totalorder %s627, 31
      %s629 = scalar_select %p628, %s627, 31
      %s630 = smul.addr %s629, 2
      %s631 = smul.addr %s630, 8
      %s632 = scalar_lea.vmem %s4, %s631
      %p633 = scmp.lt.s32.totalorder %s17, 3
      %s634 = scalar_select %p633, %s17, 3
      %s635 = smul.addr %s634, 2
      %s636 = scalar_lea.vmem %s5, %s635
      // Predicated region
      $region37: #{bottleneck_decoder_forward.8} parent=35 // pred_check
        %p637 = pneg %p124
      $region38: #{bottleneck_decoder_forward.8} parent=35 // pred_check_branch
        %639 = sbr.rel (%p637) target = $region40
      $region39: #{bottleneck_decoder_forward.8} parent=35 // pred_region
        %s640 = smul.u32 8, %s17
      $region40: #{bottleneck_decoder_forward.8} parent=35 // pred_fallthru
        _
      // Predicated region
      $region41: #{bottleneck_decoder_forward.8} parent=35 // pred_check
        %p641 = pneg %p150
      $region42: #{bottleneck_decoder_forward.8} parent=35 // pred_check_branch
        %643 = sbr.rel (%p641) target = $region44
      $region43: #{bottleneck_decoder_forward.8} parent=35 // pred_region
        _
      $region44: #{bottleneck_decoder_forward.8} parent=35 // pred_fallthru
        _
    $region36: #{bottleneck_decoder_forward.8} parent=5 // pred_fallthru
      _
    %p644 = scmp.le.s32.totalorder 2, %s12
    // Predicated region
    $region45: #{bottleneck_decoder_forward.8} parent=5 // pred_check
      %p645 = pneg %p644
    $region46: #{bottleneck_decoder_forward.8} parent=5 // pred_check_branch
      %647 = sbr.rel (%p645) target = $region48
    $region47: #{bottleneck_decoder_forward.8} parent=5 // pred_region
      %s648 = ssub.s32 %s12, 2
      // Predicated region
      $region49: #{bottleneck_decoder_forward.8} parent=47 // pred_check
        %p649 = pneg %p130
      $region50: #{bottleneck_decoder_forward.8} parent=47 // pred_check_branch
        %651 = sbr.rel (%p649) target = $region52
      $region51: #{bottleneck_decoder_forward.8} parent=47 // pred_region
        %s652 = smul.u32 8, %s18
        %p653 = scmp.lt.s32.totalorder %s652, 31
        %s654 = scalar_select %p653, %s652, 31
        %s655 = smul.addr %s654, 2
        %s656 = smul.addr %s655, 8
        %s657 = scalar_lea.vmem %s4, %s656
      $region52: #{bottleneck_decoder_forward.8} parent=47 // pred_fallthru
        _
      // Predicated region
      $region53: #{bottleneck_decoder_forward.8} parent=47 // pred_check
        %p658 = pneg %p156
      $region54: #{bottleneck_decoder_forward.8} parent=47 // pred_check_branch
        %660 = sbr.rel (%p658) target = $region56
      $region55: #{bottleneck_decoder_forward.8} parent=47 // pred_region
        %p661 = scmp.lt.s32.totalorder %s18, 3
        %s662 = scalar_select %p661, %s18, 3
        %s663 = smul.addr %s662, 2
        %s664 = scalar_lea.vmem %s5, %s663
      $region56: #{bottleneck_decoder_forward.8} parent=47 // pred_fallthru
        _
    $region48: #{bottleneck_decoder_forward.8} parent=5 // pred_fallthru
      _
  $region6: #{bottleneck_decoder_forward.8} parent=0 // loop_footer
    %s16 = sadd.s32 1, %s12
  $region7: #{bottleneck_decoder_forward.8} parent=0 // loop_footer_branch
    %11 = sbr.rel target = $region3
  $region8: #{bottleneck_decoder_forward.8} parent=0 // loop_exit
    _

// kernel: bottleneck_decoder_forward.9
$region0: #{bottleneck_decoder_forward.9}
  #allocation0 [shape = 'u32[]', space=smem, size = 0x4, offset = 0x4, fixed_abs, tag = 'smem constant byte address 0x4 - core index']
  #allocation1 [shape = 'u32[144,128]{1,0:T(1,128)}', space=vmem, size = 0x12000, scoped, tag = 'internal scratch']
  %s0 = inlined_call_operand.vmem [shape: f32[32,16,8], index: 0, kind: input, shape index: {}]
  %s1 = inlined_call_operand.vmem [shape: f32[32,16,8], index: 1, kind: input, shape index: {}]
  %s2 = inlined_call_operand.vmem [shape: f32[1,1,8], index: 2, kind: input, shape index: {}]
  %s3 = inlined_call_operand.vmem [shape: f32[1,1,8], index: 3, kind: input, shape index: {}]
  %s4 = inlined_call_operand.vmem [shape: f32[1,1,8], index: 4, kind: input, shape index: {}]
  %s5 = inlined_call_operand.vmem [shape: f32[1,1,8], index: 5, kind: input, shape index: {}]
  %s6 = inlined_call_operand.vmem [shape: f32[32,16,8], index: 6, kind: output, shape index: {}]
  %s7 = sld [smem:[#allocation0]]
  $region57: #{bottleneck_decoder_forward.9} parent=0
    _
  %s9 = ssub.s32 1, %s7
  %s10 = scalar_select 0, %s9, %s7
  loop: start=0, step=1, limit=6
  $region2: #{bottleneck_decoder_forward.9} parent=0 // loop_pre_header
    _
  $region3: #{bottleneck_decoder_forward.9} parent=0 // loop_header
    %s12 = sphi 0, %s16
    %p13 = scmp.ge.s32.totalorder %s12, 6
    %s22 = sphi 0, %s24
    %s25 = sphi 0, %s22
    %s26 = sphi 0, %s25
    %s42 = sphi 0, %s26
    %s48 = sphi 0, %s50
    %s51 = sphi 0, %s48
    %s52 = sphi 0, %s51
    %s68 = sphi 0, %s52
    %s72 = sphi 0, %s72
    %s74 = sphi 0, %s72
    %s75 = sphi 0, %s74
    %s89 = sphi 0, %s75
    %s93 = sphi 0, %s93
    %s95 = sphi 0, %s93
    %s96 = sphi 0, %s95
    %s110 = sphi 0, %s96
    %s114 = sphi 0, %s114
    %s116 = sphi 0, %s114
    %s117 = sphi 0, %s116
    %s131 = sphi 0, %s117
    %s135 = sphi 0, %s135
    %s137 = sphi 0, %s135
    %s138 = sphi 0, %s137
    %s152 = sphi 0, %s138
    %s158 = sphi 0, %s160
    %s161 = sphi 0, %s158
    %s162 = sphi 0, %s161
    %s178 = sphi 0, %s162
  $region4: #{bottleneck_decoder_forward.9} parent=0 // loop_header_branch
    %15 = sbr.rel (%p13) target = $region8
  $region5: #{bottleneck_decoder_forward.9} parent=0 // loop_body
    %s17 = ssub.s32 %s12, 1
    %s18 = ssub.s32 %s12, 2
    %s19 = sadd.s32 %s12, 1
    %s20 = ssub.s32 %s12, %s19
    %p21 = scmp.eq.s32.totalorder %s20, 0
    %s23 = sadd.s32 %s22, 1
    %s24 = scalar_select %p21, %s22, %s23
    %p27 = pneg %p21
    %p28 = scmp.eq.s32.totalorder %s12, 3
    %p29 = por %p27, %p28
    %p30 = scmp.ne.s32.totalorder %s22, %s25
    %p31 = scmp.eq.s32.totalorder %s12, 0
    %p32 = por %p30, %p31
    %p33 = scmp.ne.s32.totalorder %s22, %s25
    %p34 = scmp.eq.s32.totalorder %s17, 3
    %p35 = por %p33, %p34
    %p36 = scmp.ne.s32.totalorder %s25, %s26
    %p37 = scmp.eq.s32.totalorder %s17, 0
    %p38 = por %p36, %p37
    %p39 = scmp.ne.s32.totalorder %s25, %s26
    %p40 = scmp.eq.s32.totalorder %s18, 3
    %p41 = por %p39, %p40
    %p43 = scmp.ne.s32.totalorder %s26, %s42
    %p44 = scmp.eq.s32.totalorder %s18, 0
    %p45 = por %p43, %p44
    %s46 = ssub.s32 %s12, %s19
    %p47 = scmp.eq.s32.totalorder %s46, 0
    %s49 = sadd.s32 %s48, 1
    %s50 = scalar_select %p47, %s48, %s49
    %p53 = pneg %p47
    %p54 = scmp.eq.s32.totalorder %s12, 3
    %p55 = por %p53, %p54
    %p56 = scmp.ne.s32.totalorder %s48, %s51
    %p57 = scmp.eq.s32.totalorder %s12, 0
    %p58 = por %p56, %p57
    %p59 = scmp.ne.s32.totalorder %s48, %s51
    %p60 = scmp.eq.s32.totalorder %s17, 3
    %p61 = por %p59, %p60
    %p62 = scmp.ne.s32.totalorder %s51, %s52
    %p63 = scmp.eq.s32.totalorder %s17, 0
    %p64 = por %p62, %p63
    %p65 = scmp.ne.s32.totalorder %s51, %s52
    %p66 = scmp.eq.s32.totalorder %s18, 3
    %p67 = por %p65, %p66
    %p69 = scmp.ne.s32.totalorder %s52, %s68
    %p70 = scmp.eq.s32.totalorder %s18, 0
    %p71 = por %p69, %p70
    %s73 = sadd.s32 %s72, 1
    %p76 = scmp.eq.s32.totalorder %s12, 3
    %p77 = scmp.ne.s32.totalorder %s72, %s74
    %p78 = scmp.eq.s32.totalorder %s12, 0
    %p79 = por %p77, %p78
    %p80 = scmp.ne.s32.totalorder %s72, %s74
    %p81 = scmp.eq.s32.totalorder %s17, 3
    %p82 = por %p80, %p81
    %p83 = scmp.ne.s32.totalorder %s74, %s75
    %p84 = scmp.eq.s32.totalorder %s17, 0
    %p85 = por %p83, %p84
    %p86 = scmp.ne.s32.totalorder %s74, %s75
    %p87 = scmp.eq.s32.totalorder %s18, 3
    %p88 = por %p86, %p87
    %p90 = scmp.ne.s32.totalorder %s75, %s89
    %p91 = scmp.eq.s32.totalorder %s18, 0
    %p92 = por %p90, %p91
    %s94 = sadd.s32 %s93, 1
    %p97 = scmp.eq.s32.totalorder %s12, 3
    %p98 = scmp.ne.s32.totalorder %s93, %s95
    %p99 = scmp.eq.s32.totalorder %s12, 0
    %p100 = por %p98, %p99
    %p101 = scmp.ne.s32.totalorder %s93, %s95
    %p102 = scmp.eq.s32.totalorder %s17, 3
    %p103 = por %p101, %p102
    %p104 = scmp.ne.s32.totalorder %s95, %s96
    %p105 = scmp.eq.s32.totalorder %s17, 0
    %p106 = por %p104, %p105
    %p107 = scmp.ne.s32.totalorder %s95, %s96
    %p108 = scmp.eq.s32.totalorder %s18, 3
    %p109 = por %p107, %p108
    %p111 = scmp.ne.s32.totalorder %s96, %s110
    %p112 = scmp.eq.s32.totalorder %s18, 0
    %p113 = por %p111, %p112
    %s115 = sadd.s32 %s114, 1
    %p118 = scmp.eq.s32.totalorder %s12, 3
    %p119 = scmp.ne.s32.totalorder %s114, %s116
    %p120 = scmp.eq.s32.totalorder %s12, 0
    %p121 = por %p119, %p120
    %p122 = scmp.ne.s32.totalorder %s114, %s116
    %p123 = scmp.eq.s32.totalorder %s17, 3
    %p124 = por %p122, %p123
    %p125 = scmp.ne.s32.totalorder %s116, %s117
    %p126 = scmp.eq.s32.totalorder %s17, 0
    %p127 = por %p125, %p126
    %p128 = scmp.ne.s32.totalorder %s116, %s117
    %p129 = scmp.eq.s32.totalorder %s18, 3
    %p130 = por %p128, %p129
    %p132 = scmp.ne.s32.totalorder %s117, %s131
    %p133 = scmp.eq.s32.totalorder %s18, 0
    %p134 = por %p132, %p133
    %s136 = sadd.s32 %s135, 1
    %p139 = scmp.eq.s32.totalorder %s12, 3
    %p140 = scmp.ne.s32.totalorder %s135, %s137
    %p141 = scmp.eq.s32.totalorder %s12, 0
    %p142 = por %p140, %p141
    %p143 = scmp.ne.s32.totalorder %s135, %s137
    %p144 = scmp.eq.s32.totalorder %s17, 3
    %p145 = por %p143, %p144
    %p146 = scmp.ne.s32.totalorder %s137, %s138
    %p147 = scmp.eq.s32.totalorder %s17, 0
    %p148 = por %p146, %p147
    %p149 = scmp.ne.s32.totalorder %s137, %s138
    %p150 = scmp.eq.s32.totalorder %s18, 3
    %p151 = por %p149, %p150
    %p153 = scmp.ne.s32.totalorder %s138, %s152
    %p154 = scmp.eq.s32.totalorder %s18, 0
    %p155 = por %p153, %p154
    %s156 = ssub.s32 %s12, %s19
    %p157 = scmp.eq.s32.totalorder %s156, 0
    %s159 = sadd.s32 %s158, 1
    %s160 = scalar_select %p157, %s158, %s159
    %p163 = pneg %p157
    %p164 = scmp.eq.s32.totalorder %s12, 3
    %p165 = por %p163, %p164
    %p166 = scmp.ne.s32.totalorder %s158, %s161
    %p167 = scmp.eq.s32.totalorder %s12, 0
    %p168 = por %p166, %p167
    %p169 = scmp.ne.s32.totalorder %s158, %s161
    %p170 = scmp.eq.s32.totalorder %s17, 3
    %p171 = por %p169, %p170
    %p172 = scmp.ne.s32.totalorder %s161, %s162
    %p173 = scmp.eq.s32.totalorder %s17, 0
    %p174 = por %p172, %p173
    %p175 = scmp.ne.s32.totalorder %s161, %s162
    %p176 = scmp.eq.s32.totalorder %s18, 3
    %p177 = por %p175, %p176
    %p179 = scmp.ne.s32.totalorder %s162, %s178
    %p180 = scmp.eq.s32.totalorder %s18, 0
    %p181 = por %p179, %p180
    %p182 = scmp.le.s32.totalorder 1, %s12
    %p183 = scmp.lt.s32.totalorder %s12, 5
    %p184 = pnand %p182, %p183
    %p185 = pneg %p184
    // Predicated region
    $region9: #{bottleneck_decoder_forward.9} parent=5 // pred_check
      _
    $region10: #{bottleneck_decoder_forward.9} parent=5 // pred_check_branch
      %187 = sbr.rel (%p184) target = $region12
    $region11: #{bottleneck_decoder_forward.9} parent=5 // pred_region
      %s188 = ssub.s32 %s12, 1
      // Predicated region
      $region13: #{bottleneck_decoder_forward.9} parent=11 // pred_check
        %p189 = pneg %p85
      $region14: #{bottleneck_decoder_forward.9} parent=11 // pred_check_branch
        %191 = sbr.rel (%p189) target = $region16
      $region15: #{bottleneck_decoder_forward.9} parent=11 // pred_region
        _
      $region16: #{bottleneck_decoder_forward.9} parent=11 // pred_fallthru
        _
      // Predicated region
      $region17: #{bottleneck_decoder_forward.9} parent=11 // pred_check
        %p192 = pneg %p106
      $region18: #{bottleneck_decoder_forward.9} parent=11 // pred_check_branch
        %194 = sbr.rel (%p192) target = $region20
      $region19: #{bottleneck_decoder_forward.9} parent=11 // pred_region
        _
      $region20: #{bottleneck_decoder_forward.9} parent=11 // pred_fallthru
        _
      // Predicated region
      $region21: #{bottleneck_decoder_forward.9} parent=11 // pred_check
        %p195 = pneg %p127
      $region22: #{bottleneck_decoder_forward.9} parent=11 // pred_check_branch
        %197 = sbr.rel (%p195) target = $region24
      $region23: #{bottleneck_decoder_forward.9} parent=11 // pred_region
        _
      $region24: #{bottleneck_decoder_forward.9} parent=11 // pred_fallthru
        _
      // Predicated region
      $region25: #{bottleneck_decoder_forward.9} parent=11 // pred_check
        %p198 = pneg %p148
      $region26: #{bottleneck_decoder_forward.9} parent=11 // pred_check_branch
        %200 = sbr.rel (%p198) target = $region28
      $region27: #{bottleneck_decoder_forward.9} parent=11 // pred_region
        _
      $region28: #{bottleneck_decoder_forward.9} parent=11 // pred_fallthru
        _
    $region12: #{bottleneck_decoder_forward.9} parent=5 // pred_fallthru
      _
    %p201 = scmp.lt.s32.totalorder %s12, 4
    // Predicated region
    $region29: #{bottleneck_decoder_forward.9} parent=5 // pred_check
      %p202 = pneg %p201
    $region30: #{bottleneck_decoder_forward.9} parent=5 // pred_check_branch
      %204 = sbr.rel (%p202) target = $region32
    $region31: #{bottleneck_decoder_forward.9} parent=5 // pred_region
      // Predicated region
      $region33: #{bottleneck_decoder_forward.9} parent=31 // pred_check
        %p205 = pneg %p32
      $region34: #{bottleneck_decoder_forward.9} parent=31 // pred_check_branch
        %207 = sbr.rel (%p205) target = $region36
      $region35: #{bottleneck_decoder_forward.9} parent=31 // pred_region
        %s208 = smul.u32 8, %s12
        %p209 = scmp.lt.s32.totalorder %s208, 31
        %s210 = scalar_select %p209, %s208, 31
        %s211 = smul.addr %s210, 2
        %s212 = smul.addr %s211, 8
        %s213 = scalar_lea.vmem %s0, %s212
        %s214 = smul.u32 8, %s12
      $region36: #{bottleneck_decoder_forward.9} parent=31 // pred_fallthru
        _
      // Predicated region
      $region37: #{bottleneck_decoder_forward.9} parent=31 // pred_check
        %p215 = pneg %p58
      $region38: #{bottleneck_decoder_forward.9} parent=31 // pred_check_branch
        %217 = sbr.rel (%p215) target = $region40
      $region39: #{bottleneck_decoder_forward.9} parent=31 // pred_region
        %s218 = smul.u32 8, %s12
        %p219 = scmp.lt.s32.totalorder %s218, 31
        %s220 = scalar_select %p219, %s218, 31
        %s221 = smul.addr %s220, 2
        %s222 = smul.addr %s221, 8
        %s223 = scalar_lea.vmem %s1, %s222
        %s224 = smul.u32 8, %s12
      $region40: #{bottleneck_decoder_forward.9} parent=31 // pred_fallthru
        _
    $region32: #{bottleneck_decoder_forward.9} parent=5 // pred_fallthru
      _
    %p225 = scmp.le.s32.totalorder 1, %s12
    %p226 = scmp.lt.s32.totalorder %s12, 5
    %p227 = pnand %p225, %p226
    %p228 = pneg %p227
    // Predicated region
    $region41: #{bottleneck_decoder_forward.9} parent=5 // pred_check
      _
    $region42: #{bottleneck_decoder_forward.9} parent=5 // pred_check_branch
      %230 = sbr.rel (%p227) target = $region44
    $region43: #{bottleneck_decoder_forward.9} parent=5 // pred_region
      %s231 = ssub.s32 %s12, 1
      %s232 = smul.u32 8, %s17
      %p233 = scmp.lt.s32.totalorder %s232, 31
      %s234 = scalar_select %p233, %s232, 31
      %s235 = smul.addr %s234, 2
      %s236 = smul.addr %s235, 8
      %s237 = scalar_lea.vmem %s0, %s236
      %p238 = pneg %p38
      %p239 = pneg %p35
      %s240 = smul.u32 8, %s17
      %p241 = scmp.lt.s32.totalorder %s240, 31
      %s242 = scalar_select %p241, %s240, 31
      %s243 = smul.addr %s242, 2
      %s244 = smul.addr %s243, 8
      %s245 = scalar_lea.vmem %s1, %s244
      %p246 = pneg %p64
      %p247 = pneg %p61
      %p248 = pneg %p85
      %p249 = pneg %p82
      %p250 = pneg %p106
      %p251 = pneg %p103
      %p252 = pneg %p127
      %p253 = pneg %p124
      %p254 = pneg %p148
      %p255 = pneg %p145
      %p256 = pneg %p174
      %p257 = pneg %p171
      %s258 = smul.u32 8, %s17
      %p259 = scmp.lt.s32.totalorder %s258, 31
      %s260 = scalar_select %p259, %s258, 31
      %s261 = smul.addr %s260, 2
      %s262 = smul.addr %s261, 8
      %s263 = scalar_lea.vmem %s6, %s262
      %s264 = smul.u32 8, %s17
      %p265 = scmp.lt.s32.totalorder %s264, 31
      %s266 = scalar_select %p265, %s264, 31
      %s267 = smul.addr %s266, 2
      %s268 = smul.addr %s267, 8
      %s269 = scalar_lea.vmem %s0, %s268
      %s270 = smul.u32 8, %s17
      %s271 = smul.u32 8, %s17
      %p272 = scmp.lt.s32.totalorder %s271, 31
      %s273 = scalar_select %p272, %s271, 31
      %s274 = smul.addr %s273, 2
      %s275 = smul.addr %s274, 8
      %s276 = scalar_lea.vmem %s1, %s275
      %s277 = smul.u32 8, %s17
      %s278 = smul.u32 8, %s17
      %p279 = scmp.lt.s32.totalorder %s278, 31
      %s280 = scalar_select %p279, %s278, 31
      %s281 = smul.addr %s280, 2
      %s282 = smul.addr %s281, 8
      %s283 = scalar_lea.vmem %s6, %s282
      %s284 = smul.u32 8, %s17
      %v285 = vld [vmem:[%s269] sm:$0xff]
      %v286 = vld [vmem:[%s269 + $0x8] sm:$0xff]
      %v287 = vld [vmem:[%s269 + $0x10] sm:$0xff]
      %v288 = vld [vmem:[%s269 + $0x18] sm:$0xff]
      %v289 = vld [vmem:[%s269 + $0x20] sm:$0xff]
      %v290 = vld [vmem:[%s269 + $0x28] sm:$0xff]
      %v291 = vld [vmem:[%s269 + $0x30] sm:$0xff]
      %v292 = vld [vmem:[%s269 + $0x38] sm:$0xff]
      %v293 = vld [vmem:[%s269 + $0x40] sm:$0xff]
      %v294 = vld [vmem:[%s269 + $0x48] sm:$0xff]
      %v295 = vld [vmem:[%s269 + $0x50] sm:$0xff]
      %v296 = vld [vmem:[%s269 + $0x58] sm:$0xff]
      %v297 = vld [vmem:[%s269 + $0x60] sm:$0xff]
      %v298 = vld [vmem:[%s269 + $0x68] sm:$0xff]
      %v299 = vld [vmem:[%s269 + $0x70] sm:$0xff]
      %v300 = vld [vmem:[%s269 + $0x78] sm:$0xff]
      %v301 = vld [vmem:[%s2] sm:$0x1]
      %v303 = vlaneseq
      %v304 = vshrl.u32 %v303, 7
      %v305 = vsub.s32 0, %v304
      %v306 = vrot.slane %v301, %v305
      %v308 = vmul.f32 %v285, %v306
      %v309 = vmul.f32 %v286, %v306
      %v310 = vmul.f32 %v287, %v306
      %v311 = vmul.f32 %v288, %v306
      %v312 = vmul.f32 %v289, %v306
      %v313 = vmul.f32 %v290, %v306
      %v314 = vmul.f32 %v291, %v306
      %v315 = vmul.f32 %v292, %v306
      %v316 = vmul.f32 %v293, %v306
      %v317 = vmul.f32 %v294, %v306
      %v318 = vmul.f32 %v295, %v306
      %v319 = vmul.f32 %v296, %v306
      %v320 = vmul.f32 %v297, %v306
      %v321 = vmul.f32 %v298, %v306
      %v322 = vmul.f32 %v299, %v306
      %v323 = vmul.f32 %v300, %v306
      %v324 = vld [vmem:[%s3] sm:$0x1]
      %v326 = vlaneseq
      %v327 = vshrl.u32 %v326, 7
      %v328 = vsub.s32 0, %v327
      %v329 = vrot.slane %v324, %v328
      %v331 = vadd.f32 %v308, %v329
      %v332 = vadd.f32 %v309, %v329
      %v333 = vadd.f32 %v310, %v329
      %v334 = vadd.f32 %v311, %v329
      %v335 = vadd.f32 %v312, %v329
      %v336 = vadd.f32 %v313, %v329
      %v337 = vadd.f32 %v314, %v329
      %v338 = vadd.f32 %v315, %v329
      %v339 = vadd.f32 %v316, %v329
      %v340 = vadd.f32 %v317, %v329
      %v341 = vadd.f32 %v318, %v329
      %v342 = vadd.f32 %v319, %v329
      %v343 = vadd.f32 %v320, %v329
      %v344 = vadd.f32 %v321, %v329
      %v345 = vadd.f32 %v322, %v329
      %v346 = vadd.f32 %v323, %v329
      %v347 = vld [vmem:[%s276] sm:$0xff]
      %v348 = vld [vmem:[%s276 + $0x8] sm:$0xff]
      %v349 = vld [vmem:[%s276 + $0x10] sm:$0xff]
      %v350 = vld [vmem:[%s276 + $0x18] sm:$0xff]
      %v351 = vld [vmem:[%s276 + $0x20] sm:$0xff]
      %v352 = vld [vmem:[%s276 + $0x28] sm:$0xff]
      %v353 = vld [vmem:[%s276 + $0x30] sm:$0xff]
      %v354 = vld [vmem:[%s276 + $0x38] sm:$0xff]
      %v355 = vld [vmem:[%s276 + $0x40] sm:$0xff]
      %v356 = vld [vmem:[%s276 + $0x48] sm:$0xff]
      %v357 = vld [vmem:[%s276 + $0x50] sm:$0xff]
      %v358 = vld [vmem:[%s276 + $0x58] sm:$0xff]
      %v359 = vld [vmem:[%s276 + $0x60] sm:$0xff]
      %v360 = vld [vmem:[%s276 + $0x68] sm:$0xff]
      %v361 = vld [vmem:[%s276 + $0x70] sm:$0xff]
      %v362 = vld [vmem:[%s276 + $0x78] sm:$0xff]
      %v363 = vld [vmem:[%s4] sm:$0x1]
      %v365 = vlaneseq
      %v366 = vshrl.u32 %v365, 7
      %v367 = vsub.s32 0, %v366
      %v368 = vrot.slane %v363, %v367
      %v370 = vmul.f32 %v347, %v368
      %v371 = vmul.f32 %v348, %v368
      %v372 = vmul.f32 %v349, %v368
      %v373 = vmul.f32 %v350, %v368
      %v374 = vmul.f32 %v351, %v368
      %v375 = vmul.f32 %v352, %v368
      %v376 = vmul.f32 %v353, %v368
      %v377 = vmul.f32 %v354, %v368
      %v378 = vmul.f32 %v355, %v368
      %v379 = vmul.f32 %v356, %v368
      %v380 = vmul.f32 %v357, %v368
      %v381 = vmul.f32 %v358, %v368
      %v382 = vmul.f32 %v359, %v368
      %v383 = vmul.f32 %v360, %v368
      %v384 = vmul.f32 %v361, %v368
      %v385 = vmul.f32 %v362, %v368
      %v386 = vld [vmem:[%s5] sm:$0x1]
      %v388 = vlaneseq
      %v389 = vshrl.u32 %v388, 7
      %v390 = vsub.s32 0, %v389
      %v391 = vrot.slane %v386, %v390
      %v393 = vadd.f32 %v370, %v391
      %v394 = vadd.f32 %v371, %v391
      %v395 = vadd.f32 %v372, %v391
      %v396 = vadd.f32 %v373, %v391
      %v397 = vadd.f32 %v374, %v391
      %v398 = vadd.f32 %v375, %v391
      %v399 = vadd.f32 %v376, %v391
      %v400 = vadd.f32 %v377, %v391
      %v401 = vadd.f32 %v378, %v391
      %v402 = vadd.f32 %v379, %v391
      %v403 = vadd.f32 %v380, %v391
      %v404 = vadd.f32 %v381, %v391
      %v405 = vadd.f32 %v382, %v391
      %v406 = vadd.f32 %v383, %v391
      %v407 = vadd.f32 %v384, %v391
      %v408 = vadd.f32 %v385, %v391
      %v409 = vadd.f32 %v331, %v393
      %v410 = vadd.f32 %v332, %v394
      %v411 = vadd.f32 %v333, %v395
      %v412 = vadd.f32 %v334, %v396
      %v413 = vadd.f32 %v335, %v397
      %v414 = vadd.f32 %v336, %v398
      %v415 = vadd.f32 %v337, %v399
      %v416 = vadd.f32 %v338, %v400
      %v417 = vadd.f32 %v339, %v401
      %v418 = vadd.f32 %v340, %v402
      %v419 = vadd.f32 %v341, %v403
      %v420 = vadd.f32 %v342, %v404
      %v421 = vadd.f32 %v343, %v405
      %v422 = vadd.f32 %v344, %v406
      %v423 = vadd.f32 %v345, %v407
      %v424 = vadd.f32 %v346, %v408
      %v425 = vmax.f32 %v409, 0.0
      %v426 = vmax.f32 %v410, 0.0
      %v427 = vmax.f32 %v411, 0.0
      %v428 = vmax.f32 %v412, 0.0
      %v429 = vmax.f32 %v413, 0.0
      %v430 = vmax.f32 %v414, 0.0
      %v431 = vmax.f32 %v415, 0.0
      %v432 = vmax.f32 %v416, 0.0
      %v433 = vmax.f32 %v417, 0.0
      %v434 = vmax.f32 %v418, 0.0
      %v435 = vmax.f32 %v419, 0.0
      %v436 = vmax.f32 %v420, 0.0
      %v437 = vmax.f32 %v421, 0.0
      %v438 = vmax.f32 %v422, 0.0
      %v439 = vmax.f32 %v423, 0.0
      %v440 = vmax.f32 %v424, 0.0
      %vm441 = vcmask 64512
      %442 = vst.msk [vmem:[%s283] sm:$0xff] %vm441, %v425
      %443 = vst.msk [vmem:[%s283 + $0x8] sm:$0xff] %vm441, %v426
      %444 = vst.msk [vmem:[%s283 + $0x10] sm:$0xff] %vm441, %v427
      %445 = vst.msk [vmem:[%s283 + $0x18] sm:$0xff] %vm441, %v428
      %446 = vst.msk [vmem:[%s283 + $0x20] sm:$0xff] %vm441, %v429
      %447 = vst.msk [vmem:[%s283 + $0x28] sm:$0xff] %vm441, %v430
      %448 = vst.msk [vmem:[%s283 + $0x30] sm:$0xff] %vm441, %v431
      %449 = vst.msk [vmem:[%s283 + $0x38] sm:$0xff] %vm441, %v432
      %450 = vst.msk [vmem:[%s283 + $0x40] sm:$0xff] %vm441, %v433
      %451 = vst.msk [vmem:[%s283 + $0x48] sm:$0xff] %vm441, %v434
      %452 = vst.msk [vmem:[%s283 + $0x50] sm:$0xff] %vm441, %v435
      %453 = vst.msk [vmem:[%s283 + $0x58] sm:$0xff] %vm441, %v436
      %454 = vst.msk [vmem:[%s283 + $0x60] sm:$0xff] %vm441, %v437
      %455 = vst.msk [vmem:[%s283 + $0x68] sm:$0xff] %vm441, %v438
      %456 = vst.msk [vmem:[%s283 + $0x70] sm:$0xff] %vm441, %v439
      %457 = vst.msk [vmem:[%s283 + $0x78] sm:$0xff] %vm441, %v440
      %s458 = smul.u32 8, %s17
      %p459 = scmp.lt.s32.totalorder %s458, 31
      %s460 = scalar_select %p459, %s458, 31
      %s461 = smul.addr %s460, 2
      %s462 = smul.addr %s461, 8
      %s463 = scalar_lea.vmem %s6, %s462
      // Predicated region
      $region45: #{bottleneck_decoder_forward.9} parent=43 // pred_check
        %p464 = pneg %p171
      $region46: #{bottleneck_decoder_forward.9} parent=43 // pred_check_branch
        %466 = sbr.rel (%p464) target = $region48
      $region47: #{bottleneck_decoder_forward.9} parent=43 // pred_region
        %s467 = smul.u32 8, %s17
      $region48: #{bottleneck_decoder_forward.9} parent=43 // pred_fallthru
        _
    $region44: #{bottleneck_decoder_forward.9} parent=5 // pred_fallthru
      _
    %p468 = scmp.le.s32.totalorder 2, %s12
    // Predicated region
    $region49: #{bottleneck_decoder_forward.9} parent=5 // pred_check
      %p469 = pneg %p468
    $region50: #{bottleneck_decoder_forward.9} parent=5 // pred_check_branch
      %471 = sbr.rel (%p469) target = $region52
    $region51: #{bottleneck_decoder_forward.9} parent=5 // pred_region
      %s472 = ssub.s32 %s12, 2
      // Predicated region
      $region53: #{bottleneck_decoder_forward.9} parent=51 // pred_check
        %p473 = pneg %p177
      $region54: #{bottleneck_decoder_forward.9} parent=51 // pred_check_branch
        %475 = sbr.rel (%p473) target = $region56
      $region55: #{bottleneck_decoder_forward.9} parent=51 // pred_region
        %s476 = smul.u32 8, %s18
        %p477 = scmp.lt.s32.totalorder %s476, 31
        %s478 = scalar_select %p477, %s476, 31
        %s479 = smul.addr %s478, 2
        %s480 = smul.addr %s479, 8
        %s481 = scalar_lea.vmem %s6, %s480
      $region56: #{bottleneck_decoder_forward.9} parent=51 // pred_fallthru
        _
    $region52: #{bottleneck_decoder_forward.9} parent=5 // pred_fallthru
      _
  $region6: #{bottleneck_decoder_forward.9} parent=0 // loop_footer
    %s16 = sadd.s32 1, %s12
  $region7: #{bottleneck_decoder_forward.9} parent=0 // loop_footer_branch
    %11 = sbr.rel target = $region3
  $region8: #{bottleneck_decoder_forward.9} parent=0 // loop_exit
    _

// kernel: bottleneck_decoder_forward.7
$region0: #{bottleneck_decoder_forward.7}
  #allocation0 [shape = 'u32[]', space=smem, size = 0x4, offset = 0x4, fixed_abs, tag = 'smem constant byte address 0x4 - core index']
  #allocation1 [shape = 'u32[144,128]{1,0:T(1,128)}', space=vmem, size = 0x12000, scoped, tag = 'internal scratch']
  %s0 = inlined_call_operand.vmem [shape: f32[32,16,8], index: 0, kind: input, shape index: {}, may-alias: {0,1,2}]
  %s1 = inlined_call_operand.vmem [shape: f32[32,16,8], index: 1, kind: input, shape index: {}, may-alias: {0,1,2}]
  %s2 = inlined_call_operand.vmem [shape: f32[32,16,8], index: 2, kind: input, shape index: {}, may-alias: {0,1,2}]
  %s3 = inlined_call_operand.vmem [shape: f32[9,8,8], index: 3, kind: input, shape index: {}]
  %s4 = inlined_call_operand.vmem [shape: f32[1,1,8], index: 4, kind: input, shape index: {}]
  %s5 = inlined_call_operand.vmem [shape: f32[1,1,8], index: 5, kind: input, shape index: {}]
  %s6 = inlined_call_operand.vmem [shape: f32[32,16,8], index: 6, kind: output, shape index: {0}]
  %s7 = inlined_call_operand.vmem [shape: f32[4,2,8], index: 7, kind: output, shape index: {1}]
  %8 = xla_tuple %s6, %s7
  %s9 = sld [smem:[#allocation0]]
  $region65: #{bottleneck_decoder_forward.7} parent=0
    _
  %s11 = ssub.s32 1, %s9
  %s12 = scalar_select 0, %s11, %s9
  loop: start=0, step=1, limit=6
  $region2: #{bottleneck_decoder_forward.7} parent=0 // loop_pre_header
    _
  $region3: #{bottleneck_decoder_forward.7} parent=0 // loop_header
    %s14 = sphi 0, %s18
    %p15 = scmp.ge.s32.totalorder %s14, 6
    %s30 = sphi 0, %s32
    %s33 = sphi 0, %s30
    %s34 = sphi 0, %s33
    %s50 = sphi 0, %s34
    %s56 = sphi 0, %s58
    %s59 = sphi 0, %s56
    %s60 = sphi 0, %s59
    %s76 = sphi 0, %s60
    %s88 = sphi 0, %s90
    %s91 = sphi 0, %s88
    %s92 = sphi 0, %s91
    %s108 = sphi 0, %s92
    %s112 = sphi 0, %s112
    %s114 = sphi 0, %s112
    %s115 = sphi 0, %s114
    %s129 = sphi 0, %s115
    %s133 = sphi 0, %s133
    %s135 = sphi 0, %s133
    %s136 = sphi 0, %s135
    %s150 = sphi 0, %s136
    %s154 = sphi 0, %s154
    %s156 = sphi 0, %s154
    %s157 = sphi 0, %s156
    %s171 = sphi 0, %s157
    %s177 = sphi 0, %s179
    %s180 = sphi 0, %s177
    %s181 = sphi 0, %s180
    %s197 = sphi 0, %s181
    %s203 = sphi 0, %s205
    %s206 = sphi 0, %s203
    %s207 = sphi 0, %s206
    %s223 = sphi 0, %s207
  $region4: #{bottleneck_decoder_forward.7} parent=0 // loop_header_branch
    %17 = sbr.rel (%p15) target = $region8
  $region5: #{bottleneck_decoder_forward.7} parent=0 // loop_body
    %s19 = ssub.s32 %s14, 1
    %s20 = ssub.s32 %s14, 2
    %s21 = sadd.s32 %s14, 1
    %s22 = ssub.s32 %s14, 1
    %p23 = scmp.gt.s32.totalorder %s22, 0
    %s24 = scalar_select %p23, %s22, 0
    %s25 = ssub.s32 %s21, 1
    %p26 = scmp.gt.s32.totalorder %s25, 0
    %s27 = scalar_select %p26, %s25, 0
    %s28 = ssub.s32 %s24, %s27
    %p29 = scmp.eq.s32.totalorder %s28, 0
    %s31 = sadd.s32 %s30, 1
    %s32 = scalar_select %p29, %s30, %s31
    %p35 = pneg %p29
    %p36 = scmp.eq.s32.totalorder %s14, 3
    %p37 = por %p35, %p36
    %p38 = scmp.ne.s32.totalorder %s30, %s33
    %p39 = scmp.eq.s32.totalorder %s14, 0
    %p40 = por %p38, %p39
    %p41 = scmp.ne.s32.totalorder %s30, %s33
    %p42 = scmp.eq.s32.totalorder %s19, 3
    %p43 = por %p41, %p42
    %p44 = scmp.ne.s32.totalorder %s33, %s34
    %p45 = scmp.eq.s32.totalorder %s19, 0
    %p46 = por %p44, %p45
    %p47 = scmp.ne.s32.totalorder %s33, %s34
    %p48 = scmp.eq.s32.totalorder %s20, 3
    %p49 = por %p47, %p48
    %p51 = scmp.ne.s32.totalorder %s34, %s50
    %p52 = scmp.eq.s32.totalorder %s20, 0
    %p53 = por %p51, %p52
    %s54 = ssub.s32 %s14, %s21
    %p55 = scmp.eq.s32.totalorder %s54, 0
    %s57 = sadd.s32 %s56, 1
    %s58 = scalar_select %p55, %s56, %s57
    %p61 = pneg %p55
    %p62 = scmp.eq.s32.totalorder %s14, 3
    %p63 = por %p61, %p62
    %p64 = scmp.ne.s32.totalorder %s56, %s59
    %p65 = scmp.eq.s32.totalorder %s14, 0
    %p66 = por %p64, %p65
    %p67 = scmp.ne.s32.totalorder %s56, %s59
    %p68 = scmp.eq.s32.totalorder %s19, 3
    %p69 = por %p67, %p68
    %p70 = scmp.ne.s32.totalorder %s59, %s60
    %p71 = scmp.eq.s32.totalorder %s19, 0
    %p72 = por %p70, %p71
    %p73 = scmp.ne.s32.totalorder %s59, %s60
    %p74 = scmp.eq.s32.totalorder %s20, 3
    %p75 = por %p73, %p74
    %p77 = scmp.ne.s32.totalorder %s60, %s76
    %p78 = scmp.eq.s32.totalorder %s20, 0
    %p79 = por %p77, %p78
    %s80 = sadd.s32 %s14, 1
    %p81 = scmp.lt.s32.totalorder %s80, 3
    %s82 = scalar_select %p81, %s80, 3
    %s83 = sadd.s32 %s21, 1
    %p84 = scmp.lt.s32.totalorder %s83, 3
    %s85 = scalar_select %p84, %s83, 3
    %s86 = ssub.s32 %s82, %s85
    %p87 = scmp.eq.s32.totalorder %s86, 0
    %s89 = sadd.s32 %s88, 1
    %s90 = scalar_select %p87, %s88, %s89
    %p93 = pneg %p87
    %p94 = scmp.eq.s32.totalorder %s14, 3
    %p95 = por %p93, %p94
    %p96 = scmp.ne.s32.totalorder %s88, %s91
    %p97 = scmp.eq.s32.totalorder %s14, 0
    %p98 = por %p96, %p97
    %p99 = scmp.ne.s32.totalorder %s88, %s91
    %p100 = scmp.eq.s32.totalorder %s19, 3
    %p101 = por %p99, %p100
    %p102 = scmp.ne.s32.totalorder %s91, %s92
    %p103 = scmp.eq.s32.totalorder %s19, 0
    %p104 = por %p102, %p103
    %p105 = scmp.ne.s32.totalorder %s91, %s92
    %p106 = scmp.eq.s32.totalorder %s20, 3
    %p107 = por %p105, %p106
    %p109 = scmp.ne.s32.totalorder %s92, %s108
    %p110 = scmp.eq.s32.totalorder %s20, 0
    %p111 = por %p109, %p110
    %s113 = sadd.s32 %s112, 1
    %p116 = scmp.eq.s32.totalorder %s14, 3
    %p117 = scmp.ne.s32.totalorder %s112, %s114
    %p118 = scmp.eq.s32.totalorder %s14, 0
    %p119 = por %p117, %p118
    %p120 = scmp.ne.s32.totalorder %s112, %s114
    %p121 = scmp.eq.s32.totalorder %s19, 3
    %p122 = por %p120, %p121
    %p123 = scmp.ne.s32.totalorder %s114, %s115
    %p124 = scmp.eq.s32.totalorder %s19, 0
    %p125 = por %p123, %p124
    %p126 = scmp.ne.s32.totalorder %s114, %s115
    %p127 = scmp.eq.s32.totalorder %s20, 3
    %p128 = por %p126, %p127
    %p130 = scmp.ne.s32.totalorder %s115, %s129
    %p131 = scmp.eq.s32.totalorder %s20, 0
    %p132 = por %p130, %p131
    %s134 = sadd.s32 %s133, 1
    %p137 = scmp.eq.s32.totalorder %s14, 3
    %p138 = scmp.ne.s32.totalorder %s133, %s135
    %p139 = scmp.eq.s32.totalorder %s14, 0
    %p140 = por %p138, %p139
    %p141 = scmp.ne.s32.totalorder %s133, %s135
    %p142 = scmp.eq.s32.totalorder %s19, 3
    %p143 = por %p141, %p142
    %p144 = scmp.ne.s32.totalorder %s135, %s136
    %p145 = scmp.eq.s32.totalorder %s19, 0
    %p146 = por %p144, %p145
    %p147 = scmp.ne.s32.totalorder %s135, %s136
    %p148 = scmp.eq.s32.totalorder %s20, 3
    %p149 = por %p147, %p148
    %p151 = scmp.ne.s32.totalorder %s136, %s150
    %p152 = scmp.eq.s32.totalorder %s20, 0
    %p153 = por %p151, %p152
    %s155 = sadd.s32 %s154, 1
    %p158 = scmp.eq.s32.totalorder %s14, 3
    %p159 = scmp.ne.s32.totalorder %s154, %s156
    %p160 = scmp.eq.s32.totalorder %s14, 0
    %p161 = por %p159, %p160
    %p162 = scmp.ne.s32.totalorder %s154, %s156
    %p163 = scmp.eq.s32.totalorder %s19, 3
    %p164 = por %p162, %p163
    %p165 = scmp.ne.s32.totalorder %s156, %s157
    %p166 = scmp.eq.s32.totalorder %s19, 0
    %p167 = por %p165, %p166
    %p168 = scmp.ne.s32.totalorder %s156, %s157
    %p169 = scmp.eq.s32.totalorder %s20, 3
    %p170 = por %p168, %p169
    %p172 = scmp.ne.s32.totalorder %s157, %s171
    %p173 = scmp.eq.s32.totalorder %s20, 0
    %p174 = por %p172, %p173
    %s175 = ssub.s32 %s14, %s21
    %p176 = scmp.eq.s32.totalorder %s175, 0
    %s178 = sadd.s32 %s177, 1
    %s179 = scalar_select %p176, %s177, %s178
    %p182 = pneg %p176
    %p183 = scmp.eq.s32.totalorder %s14, 3
    %p184 = por %p182, %p183
    %p185 = scmp.ne.s32.totalorder %s177, %s180
    %p186 = scmp.eq.s32.totalorder %s14, 0
    %p187 = por %p185, %p186
    %p188 = scmp.ne.s32.totalorder %s177, %s180
    %p189 = scmp.eq.s32.totalorder %s19, 3
    %p190 = por %p188, %p189
    %p191 = scmp.ne.s32.totalorder %s180, %s181
    %p192 = scmp.eq.s32.totalorder %s19, 0
    %p193 = por %p191, %p192
    %p194 = scmp.ne.s32.totalorder %s180, %s181
    %p195 = scmp.eq.s32.totalorder %s20, 3
    %p196 = por %p194, %p195
    %p198 = scmp.ne.s32.totalorder %s181, %s197
    %p199 = scmp.eq.s32.totalorder %s20, 0
    %p200 = por %p198, %p199
    %s201 = ssub.s32 %s14, %s21
    %p202 = scmp.eq.s32.totalorder %s201, 0
    %s204 = sadd.s32 %s203, 1
    %s205 = scalar_select %p202, %s203, %s204
    %p208 = pneg %p202
    %p209 = scmp.eq.s32.totalorder %s14, 3
    %p210 = por %p208, %p209
    %p211 = scmp.ne.s32.totalorder %s203, %s206
    %p212 = scmp.eq.s32.totalorder %s14, 0
    %p213 = por %p211, %p212
    %p214 = scmp.ne.s32.totalorder %s203, %s206
    %p215 = scmp.eq.s32.totalorder %s19, 3
    %p216 = por %p214, %p215
    %p217 = scmp.ne.s32.totalorder %s206, %s207
    %p218 = scmp.eq.s32.totalorder %s19, 0
    %p219 = por %p217, %p218
    %p220 = scmp.ne.s32.totalorder %s206, %s207
    %p221 = scmp.eq.s32.totalorder %s20, 3
    %p222 = por %p220, %p221
    %p224 = scmp.ne.s32.totalorder %s207, %s223
    %p225 = scmp.eq.s32.totalorder %s20, 0
    %p226 = por %p224, %p225
    %p227 = scmp.le.s32.totalorder 1, %s14
    %p228 = scmp.lt.s32.totalorder %s14, 5
    %p229 = pnand %p227, %p228
    %p230 = pneg %p229
    // Predicated region
    $region9: #{bottleneck_decoder_forward.7} parent=5 // pred_check
      _
    $region10: #{bottleneck_decoder_forward.7} parent=5 // pred_check_branch
      %232 = sbr.rel (%p229) target = $region12
    $region11: #{bottleneck_decoder_forward.7} parent=5 // pred_region
      %s233 = ssub.s32 %s14, 1
      // Predicated region
      $region13: #{bottleneck_decoder_forward.7} parent=11 // pred_check
        %p234 = pneg %p125
      $region14: #{bottleneck_decoder_forward.7} parent=11 // pred_check_branch
        %236 = sbr.rel (%p234) target = $region16
      $region15: #{bottleneck_decoder_forward.7} parent=11 // pred_region
        _
      $region16: #{bottleneck_decoder_forward.7} parent=11 // pred_fallthru
        _
      // Predicated region
      $region17: #{bottleneck_decoder_forward.7} parent=11 // pred_check
        %p237 = pneg %p146
      $region18: #{bottleneck_decoder_forward.7} parent=11 // pred_check_branch
        %239 = sbr.rel (%p237) target = $region20
      $region19: #{bottleneck_decoder_forward.7} parent=11 // pred_region
        _
      $region20: #{bottleneck_decoder_forward.7} parent=11 // pred_fallthru
        _
      // Predicated region
      $region21: #{bottleneck_decoder_forward.7} parent=11 // pred_check
        %p240 = pneg %p167
      $region22: #{bottleneck_decoder_forward.7} parent=11 // pred_check_branch
        %242 = sbr.rel (%p240) target = $region24
      $region23: #{bottleneck_decoder_forward.7} parent=11 // pred_region
        _
      $region24: #{bottleneck_decoder_forward.7} parent=11 // pred_fallthru
        _
    $region12: #{bottleneck_decoder_forward.7} parent=5 // pred_fallthru
      _
    %p243 = scmp.lt.s32.totalorder %s14, 4
    // Predicated region
    $region25: #{bottleneck_decoder_forward.7} parent=5 // pred_check
      %p244 = pneg %p243
    $region26: #{bottleneck_decoder_forward.7} parent=5 // pred_check_branch
      %246 = sbr.rel (%p244) target = $region28
    $region27: #{bottleneck_decoder_forward.7} parent=5 // pred_region
      // Predicated region
      $region29: #{bottleneck_decoder_forward.7} parent=27 // pred_check
        %p247 = pneg %p40
      $region30: #{bottleneck_decoder_forward.7} parent=27 // pred_check_branch
        %249 = sbr.rel (%p247) target = $region32
      $region31: #{bottleneck_decoder_forward.7} parent=27 // pred_region
        %s250 = ssub.s32 %s14, 1
        %p251 = scmp.gt.s32.totalorder %s250, 0
        %s252 = scalar_select %p251, %s250, 0
        %s253 = smul.u32 8, %s252
        %p254 = scmp.lt.s32.totalorder %s253, 31
        %s255 = scalar_select %p254, %s253, 31
        %s256 = smul.addr %s255, 2
        %s257 = smul.addr %s256, 8
        %s258 = scalar_lea.vmem %s0, %s257
        %s259 = ssub.s32 %s14, 1
        %p260 = scmp.gt.s32.totalorder %s259, 0
        %s261 = scalar_select %p260, %s259, 0
        %s262 = smul.u32 8, %s261
      $region32: #{bottleneck_decoder_forward.7} parent=27 // pred_fallthru
        _
      // Predicated region
      $region33: #{bottleneck_decoder_forward.7} parent=27 // pred_check
        %p263 = pneg %p66
      $region34: #{bottleneck_decoder_forward.7} parent=27 // pred_check_branch
        %265 = sbr.rel (%p263) target = $region36
      $region35: #{bottleneck_decoder_forward.7} parent=27 // pred_region
        %s266 = smul.u32 8, %s14
        %p267 = scmp.lt.s32.totalorder %s266, 31
        %s268 = scalar_select %p267, %s266, 31
        %s269 = smul.addr %s268, 2
        %s270 = smul.addr %s269, 8
        %s271 = scalar_lea.vmem %s1, %s270
        %s272 = smul.u32 8, %s14
      $region36: #{bottleneck_decoder_forward.7} parent=27 // pred_fallthru
        _
      // Predicated region
      $region37: #{bottleneck_decoder_forward.7} parent=27 // pred_check
        %p273 = pneg %p98
      $region38: #{bottleneck_decoder_forward.7} parent=27 // pred_check_branch
        %275 = sbr.rel (%p273) target = $region40
      $region39: #{bottleneck_decoder_forward.7} parent=27 // pred_region
        %s276 = sadd.s32 %s14, 1
        %p277 = scmp.lt.s32.totalorder %s276, 3
        %s278 = scalar_select %p277, %s276, 3
        %s279 = smul.u32 8, %s278
        %p280 = scmp.lt.s32.totalorder %s279, 31
        %s281 = scalar_select %p280, %s279, 31
        %s282 = smul.addr %s281, 2
        %s283 = smul.addr %s282, 8
        %s284 = scalar_lea.vmem %s2, %s283
        %s285 = sadd.s32 %s14, 1
        %p286 = scmp.lt.s32.totalorder %s285, 3
        %s287 = scalar_select %p286, %s285, 3
        %s288 = smul.u32 8, %s287
      $region40: #{bottleneck_decoder_forward.7} parent=27 // pred_fallthru
        _
    $region28: #{bottleneck_decoder_forward.7} parent=5 // pred_fallthru
      _
    %p289 = scmp.le.s32.totalorder 1, %s14
    %p290 = scmp.lt.s32.totalorder %s14, 5
    %p291 = pnand %p289, %p290
    %p292 = pneg %p291
    // Predicated region
    $region41: #{bottleneck_decoder_forward.7} parent=5 // pred_check
      _
    $region42: #{bottleneck_decoder_forward.7} parent=5 // pred_check_branch
      %294 = sbr.rel (%p291) target = $region44
    $region43: #{bottleneck_decoder_forward.7} parent=5 // pred_region
      %s295 = ssub.s32 %s14, 1
      %s296 = ssub.s32 %s19, 1
      %p297 = scmp.gt.s32.totalorder %s296, 0
      %s298 = scalar_select %p297, %s296, 0
      %s299 = smul.u32 8, %s298
      %p300 = scmp.lt.s32.totalorder %s299, 31
      %s301 = scalar_select %p300, %s299, 31
      %s302 = smul.addr %s301, 2
      %s303 = smul.addr %s302, 8
      %s304 = scalar_lea.vmem %s0, %s303
      %p305 = pneg %p46
      %p306 = pneg %p43
      %s307 = smul.u32 8, %s19
      %p308 = scmp.lt.s32.totalorder %s307, 31
      %s309 = scalar_select %p308, %s307, 31
      %s310 = smul.addr %s309, 2
      %s311 = smul.addr %s310, 8
      %s312 = scalar_lea.vmem %s1, %s311
      %p313 = pneg %p72
      %p314 = pneg %p69
      %s315 = sadd.s32 %s19, 1
      %p316 = scmp.lt.s32.totalorder %s315, 3
      %s317 = scalar_select %p316, %s315, 3
      %s318 = smul.u32 8, %s317
      %p319 = scmp.lt.s32.totalorder %s318, 31
      %s320 = scalar_select %p319, %s318, 31
      %s321 = smul.addr %s320, 2
      %s322 = smul.addr %s321, 8
      %s323 = scalar_lea.vmem %s2, %s322
      %p324 = pneg %p104
      %p325 = pneg %p101
      %p326 = pneg %p125
      %p327 = pneg %p122
      %p328 = pneg %p146
      %p329 = pneg %p143
      %p330 = pneg %p167
      %p331 = pneg %p164
      %p332 = pneg %p193
      %p333 = pneg %p190
      %s334 = smul.u32 8, %s19
      %p335 = scmp.lt.s32.totalorder %s334, 31
      %s336 = scalar_select %p335, %s334, 31
      %s337 = smul.addr %s336, 2
      %s338 = smul.addr %s337, 8
      %s339 = scalar_lea.vmem %s6, %s338
      %p340 = pneg %p219
      %p341 = pneg %p216
      %p342 = scmp.lt.s32.totalorder %s19, 3
      %s343 = scalar_select %p342, %s19, 3
      %s344 = smul.addr %s343, 2
      %s345 = scalar_lea.vmem %s7, %s344
      %s346 = ssub.s32 %s19, 1
      %p347 = scmp.gt.s32.totalorder %s346, 0
      %s348 = scalar_select %p347, %s346, 0
      %s349 = smul.u32 8, %s348
      %p350 = scmp.lt.s32.totalorder %s349, 31
      %s351 = scalar_select %p350, %s349, 31
      %s352 = smul.addr %s351, 2
      %s353 = smul.addr %s352, 8
      %s354 = scalar_lea.vmem %s0, %s353
      %s355 = ssub.s32 %s19, 1
      %p356 = scmp.gt.s32.totalorder %s355, 0
      %s357 = scalar_select %p356, %s355, 0
      %s358 = smul.u32 8, %s357
      %s359 = smul.u32 8, %s19
      %p360 = scmp.lt.s32.totalorder %s359, 31
      %s361 = scalar_select %p360, %s359, 31
      %s362 = smul.addr %s361, 2
      %s363 = smul.addr %s362, 8
      %s364 = scalar_lea.vmem %s1, %s363
      %s365 = smul.u32 8, %s19
      %s366 = sadd.s32 %s19, 1
      %p367 = scmp.lt.s32.totalorder %s366, 3
      %s368 = scalar_select %p367, %s366, 3
      %s369 = smul.u32 8, %s368
      %p370 = scmp.lt.s32.totalorder %s369, 31
      %s371 = scalar_select %p370, %s369, 31
      %s372 = smul.addr %s371, 2
      %s373 = smul.addr %s372, 8
      %s374 = scalar_lea.vmem %s2, %s373
      %s375 = sadd.s32 %s19, 1
      %p376 = scmp.lt.s32.totalorder %s375, 3
      %s377 = scalar_select %p376, %s375, 3
      %s378 = smul.u32 8, %s377
      %s379 = smul.u32 8, %s19
      %p380 = scmp.lt.s32.totalorder %s379, 31
      %s381 = scalar_select %p380, %s379, 31
      %s382 = smul.addr %s381, 2
      %s383 = smul.addr %s382, 8
      %s384 = scalar_lea.vmem %s6, %s383
      %s385 = smul.u32 8, %s19
      %p386 = scmp.lt.s32.totalorder %s19, 3
      %s387 = scalar_select %p386, %s19, 3
      %s388 = smul.addr %s387, 2
      %s389 = scalar_lea.vmem %s7, %s388
      %p390 = scmp.lt.s32.totalorder %s19, 0
      %s391 = ssub.s32 0, %s19
      %s392 = scalar_select %p390, %s391, %s19
      %s393 = sand.u32 %s392, 1
      %s394 = ssub.s32 0, %s393
      %s395 = scalar_select %p390, %s394, %s393
      %p396 = scmp.ne.s32.totalorder %s395, 0
      %p397 = scmp.lt.s32.totalorder %s395, 0
      %p398 = pnand %p397, %p396
      %p399 = pneg %p398
      %s400 = sadd.s32 %s395, 2
      %s401 = scalar_select %p399, %s400, %s395
      %p402 = scmp.ne.s32.totalorder %s401, 0
      %p403 = scmp.ne.s32.totalorder %s401, 1
      %v404 = vld [vmem:[%s4] sm:$0x1]
      %v405 = vld [vmem:[%s5] sm:$0x1]
      %s406 = scalar_lea.vmem %s354, 112
      %v407 = vld [vmem:[%s406] sm:$0xff]
      %v408 = vld [vmem:[%s406 + $0x8] sm:$0xff]
      %v410 = vlaneseq
      %v411 = vshrl.u32 %v410, 7
      %v412 = vsub.s32 0, %v411
      %v413 = vrot.slane %v404, %v412
      %v415 = vmul.f32 %v407, %v413
      %v416 = vmul.f32 %v408, %v413
      %v418 = vlaneseq
      %v419 = vshrl.u32 %v418, 7
      %v420 = vsub.s32 0, %v419
      %v421 = vrot.slane %v405, %v420
      %v423 = vadd.f32 %v415, %v421
      %v424 = vadd.f32 %v416, %v421
      %v425 = vld [vmem:[%s364] sm:$0xff]
      %v426 = vld [vmem:[%s364 + $0x8] sm:$0xff]
      %v427 = vld [vmem:[%s364 + $0x10] sm:$0xff]
      %v428 = vld [vmem:[%s364 + $0x18] sm:$0xff]
      %v429 = vld [vmem:[%s364 + $0x20] sm:$0xff]
      %v430 = vld [vmem:[%s364 + $0x28] sm:$0xff]
      %v431 = vld [vmem:[%s364 + $0x30] sm:$0xff]
      %v432 = vld [vmem:[%s364 + $0x38] sm:$0xff]
      %v433 = vld [vmem:[%s364 + $0x40] sm:$0xff]
      %v434 = vld [vmem:[%s364 + $0x48] sm:$0xff]
      %v435 = vld [vmem:[%s364 + $0x50] sm:$0xff]
      %v436 = vld [vmem:[%s364 + $0x58] sm:$0xff]
      %v437 = vld [vmem:[%s364 + $0x60] sm:$0xff]
      %v438 = vld [vmem:[%s364 + $0x68] sm:$0xff]
      %v439 = vld [vmem:[%s364 + $0x70] sm:$0xff]
      %v440 = vld [vmem:[%s364 + $0x78] sm:$0xff]
      %v441 = vmul.f32 %v425, %v413
      %v442 = vmul.f32 %v426, %v413
      %v443 = vmul.f32 %v427, %v413
      %v444 = vmul.f32 %v428, %v413
      %v445 = vmul.f32 %v429, %v413
      %v446 = vmul.f32 %v430, %v413
      %v447 = vmul.f32 %v431, %v413
      %v448 = vmul.f32 %v432, %v413
      %v449 = vmul.f32 %v433, %v413
      %v450 = vmul.f32 %v434, %v413
      %v451 = vmul.f32 %v435, %v413
      %v452 = vmul.f32 %v436, %v413
      %v453 = vmul.f32 %v437, %v413
      %v454 = vmul.f32 %v438, %v413
      %v455 = vmul.f32 %v439, %v413
      %v456 = vmul.f32 %v440, %v413
      %v457 = vadd.f32 %v441, %v421
      %v458 = vadd.f32 %v442, %v421
      %v459 = vadd.f32 %v443, %v421
      %v460 = vadd.f32 %v444, %v421
      %v461 = vadd.f32 %v445, %v421
      %v462 = vadd.f32 %v446, %v421
      %v463 = vadd.f32 %v447, %v421
      %v464 = vadd.f32 %v448, %v421
      %v465 = vadd.f32 %v449, %v421
      %v466 = vadd.f32 %v450, %v421
      %v467 = vadd.f32 %v451, %v421
      %v468 = vadd.f32 %v452, %v421
      %v469 = vadd.f32 %v453, %v421
      %v470 = vadd.f32 %v454, %v421
      %v471 = vadd.f32 %v455, %v421
      %v472 = vadd.f32 %v456, %v421
      %v473 = vld [vmem:[%s374] sm:$0xff]
      %v474 = vld [vmem:[%s374 + $0x8] sm:$0xff]
      %v475 = vmul.f32 %v473, %v413
      %v476 = vmul.f32 %v474, %v413
      %v477 = vadd.f32 %v475, %v421
      %v478 = vadd.f32 %v476, %v421
      %s479 = scalar_select %p402, 1, 0
      %v480 = vstv %s479
      %vm481 = vcmp.eq.s32.totalorder %v480, 1
      %v482 = vsel %vm481, %v423, 0.0
      %v483 = vsel %vm481, %v424, 0.0
      %s484 = scalar_select %p403, 1, 0
      %v485 = vstv %s484
      %vm486 = vcmp.eq.s32.totalorder %v485, 1
      %v487 = vsel %vm486, %v477, 0.0
      %v488 = vsel %vm486, %v478, 0.0
      %v489 = vmax.f32 %v482, 0.0
      %v490 = vmax.f32 %v483, 0.0
      %v491 = vmax.f32 %v457, 0.0
      %v492 = vmax.f32 %v458, 0.0
      %v493 = vmax.f32 %v459, 0.0
      %v494 = vmax.f32 %v460, 0.0
      %v495 = vmax.f32 %v461, 0.0
      %v496 = vmax.f32 %v462, 0.0
      %v497 = vmax.f32 %v463, 0.0
      %v498 = vmax.f32 %v464, 0.0
      %v499 = vmax.f32 %v465, 0.0
      %v500 = vmax.f32 %v466, 0.0
      %v501 = vmax.f32 %v467, 0.0
      %v502 = vmax.f32 %v468, 0.0
      %v503 = vmax.f32 %v469, 0.0
      %v504 = vmax.f32 %v470, 0.0
      %v505 = vmax.f32 %v471, 0.0
      %v506 = vmax.f32 %v472, 0.0
      %v507 = vmax.f32 %v487, 0.0
      %v508 = vmax.f32 %v488, 0.0
      %vm529 = vcmask 1040384
      %v530 = vrot.slane %v489, 7
      %v531 = vrot.slane %v490, 7
      %v532 = vsel %vm529, %v530, %v531
      %v533 = vrot.slane %v491, 7
      %v534 = vrot.slane %v492, 7
      %v535 = vsel %vm529, %v533, %v534
      %v536 = vrot.slane %v493, 7
      %v537 = vrot.slane %v494, 7
      %v538 = vsel %vm529, %v536, %v537
      %v539 = vrot.slane %v495, 7
      %v540 = vrot.slane %v496, 7
      %v541 = vsel %vm529, %v539, %v540
      %v542 = vrot.slane %v497, 7
      %v543 = vrot.slane %v498, 7
      %v544 = vsel %vm529, %v542, %v543
      %v545 = vrot.slane %v499, 7
      %v546 = vrot.slane %v500, 7
      %v547 = vsel %vm529, %v545, %v546
      %v548 = vrot.slane %v501, 7
      %v549 = vrot.slane %v502, 7
      %v550 = vsel %vm529, %v548, %v549
      %v551 = vrot.slane %v503, 7
      %v552 = vrot.slane %v504, 7
      %v553 = vsel %vm529, %v551, %v552
      %v554 = vrot.slane %v505, 7
      %v555 = vrot.slane %v506, 7
      %v556 = vsel %vm529, %v554, %v555
      %v557 = vrot.slane %v507, 7
      %v558 = vrot.slane %v508, 7
      %v559 = vsel %vm529, %v557, %v558
      %v580 = vsel %vm529, 0.0, %v530
      %v581 = vsel %vm529, 0.0, %v533
      %v582 = vsel %vm529, 0.0, %v536
      %v583 = vsel %vm529, 0.0, %v539
      %v584 = vsel %vm529, 0.0, %v542
      %v585 = vsel %vm529, 0.0, %v545
      %v586 = vsel %vm529, 0.0, %v548
      %v587 = vsel %vm529, 0.0, %v551
      %v588 = vsel %vm529, 0.0, %v554
      %v589 = vsel %vm529, 0.0, %v557
      %v590 = vsel %vm529, %v531, 0.0
      %v591 = vsel %vm529, %v534, 0.0
      %v592 = vsel %vm529, %v537, 0.0
      %v593 = vsel %vm529, %v540, 0.0
      %v594 = vsel %vm529, %v543, 0.0
      %v595 = vsel %vm529, %v546, 0.0
      %v596 = vsel %vm529, %v549, 0.0
      %v597 = vsel %vm529, %v552, 0.0
      %v598 = vsel %vm529, %v555, 0.0
      %v599 = vsel %vm529, %v558, 0.0
      %v600 = vld [vmem:[%s3] sm:$0xff]
      %vm617 = vcmask 1046528
      %v618 = vrot.slane %v580, 1
      %v619 = vrot.slane %v532, 1
      %v620 = vsel %vm617, %v618, %v619
      %v621 = vrot.slane %v590, 1
      %v622 = vsel %vm617, %v619, %v621
      %v623 = vrot.slane %v581, 1
      %v624 = vrot.slane %v535, 1
      %v625 = vsel %vm617, %v623, %v624
      %v626 = vrot.slane %v591, 1
      %v627 = vsel %vm617, %v624, %v626
      %v628 = vrot.slane %v582, 1
      %v629 = vrot.slane %v538, 1
      %v630 = vsel %vm617, %v628, %v629
      %v631 = vrot.slane %v592, 1
      %v632 = vsel %vm617, %v629, %v631
      %v633 = vrot.slane %v583, 1
      %v634 = vrot.slane %v541, 1
      %v635 = vsel %vm617, %v633, %v634
      %v636 = vrot.slane %v593, 1
      %v637 = vsel %vm617, %v634, %v636
      %v638 = vrot.slane %v584, 1
      %v639 = vrot.slane %v544, 1
      %v640 = vsel %vm617, %v638, %v639
      %v641 = vrot.slane %v594, 1
      %v642 = vsel %vm617, %v639, %v641
      %v643 = vrot.slane %v585, 1
      %v644 = vrot.slane %v547, 1
      %v645 = vsel %vm617, %v643, %v644
      %v646 = vrot.slane %v595, 1
      %v647 = vsel %vm617, %v644, %v646
      %v648 = vrot.slane %v586, 1
      %v649 = vrot.slane %v550, 1
      %v650 = vsel %vm617, %v648, %v649
      %v651 = vrot.slane %v596, 1
      %v652 = vsel %vm617, %v649, %v651
      %v653 = vrot.slane %v587, 1
      %v654 = vrot.slane %v553, 1
      %v655 = vsel %vm617, %v653, %v654
      %v656 = vrot.slane %v597, 1
      %v657 = vsel %vm617, %v654, %v656
      %s658 = scalar_lea.vmem %s3, 8
      %v659 = vld [vmem:[%s658] sm:$0xff]
      %vm660 = vcmask 64512
      %v661 = vsel %vm660, %v620, 0
      %v663 = vsel %vm660, %v622, 0
      %v665 = vsel %vm660, %v625, 0
      %v667 = vsel %vm660, %v627, 0
      %v669 = vsel %vm660, %v630, 0
      %v671 = vsel %vm660, %v632, 0
      %v673 = vsel %vm660, %v635, 0
      %v675 = vsel %vm660, %v637, 0
      %v677 = vsel %vm660, %v640, 0
      %v679 = vsel %vm660, %v642, 0
      %v681 = vsel %vm660, %v645, 0
      %v683 = vsel %vm660, %v647, 0
      %v685 = vsel %vm660, %v650, 0
      %v687 = vsel %vm660, %v652, 0
      %v689 = vsel %vm660, %v655, 0
      %v691 = vsel %vm660, %v657, 0
      %693 = vmatprep.subr.mxu0 0.0
      %694 = vmatpush1.msra.mxu0 %v659
      %695 = vmatprep.subr.mxu0 0.0
      %696 = vmatpush1.msra.mxu0 0.0
      %697 = vmatprep.subr.mxu0 0.0
      %698 = vmatpush1.msra.mxu0 0.0
      %699 = vmatprep.subr.mxu0 0.0
      %700 = vmatpush1.msra.mxu0 0.0
      %701 = vmatprep.subr.mxu0 0.0
      %702 = vmatpush1.msra.mxu0 0.0
      %703 = vmatprep.subr.mxu0 0.0
      %704 = vmatpush1.msra.mxu0 0.0
      %705 = vmatprep.subr.mxu0 0.0
      %706 = vmatpush1.msra.mxu0 0.0
      %707 = vmatprep.subr.mxu0 0.0
      %708 = vmatpush1.msra.mxu0 0.0
      %709 = vmatprep.subr.mxu0 0.0
      %710 = vmatpush1.msra.mxu0 0.0
      %711 = vmatprep.subr.mxu0 0.0
      %712 = vmatpush1.msra.mxu0 0.0
      %713 = vmatprep.subr.mxu0 0.0
      %714 = vmatpush1.msra.mxu0 0.0
      %715 = vmatprep.subr.mxu0 0.0
      %716 = vmatpush1.msra.mxu0 0.0
      %717 = vmatprep.subr.mxu0 0.0
      %718 = vmatpush1.msra.mxu0 0.0
      %719 = vmatprep.subr.mxu0 0.0
      %720 = vmatpush1.msra.mxu0 0.0
      %721 = vmatprep.subr.mxu0 0.0
      %722 = vmatpush1.msra.mxu0 0.0
      %723 = vmatprep.subr.mxu0 0.0
      %724 = vmatpush1.msra.mxu0 0.0
      %725 = vmatprep.subr.mxu0 0.0
      %726 = vmatpush1.msra.mxu0 0.0
      %727 = vmatprep.subr.mxu0 0.0
      %728 = vmatpush1.msra.mxu0 0.0
      %729 = vmatprep.subr.mxu0 0.0
      %730 = vmatpush1.msra.mxu0 0.0
      %731 = vmatprep.subr.mxu0 0.0
      %732 = vmatpush1.msra.mxu0 0.0
      %733 = vmatprep.subr.mxu0 0.0
      %734 = vmatpush1.msra.mxu0 0.0
      %735 = vmatprep.subr.mxu0 0.0
      %736 = vmatpush1.msra.mxu0 0.0
      %737 = vmatprep.subr.mxu0 0.0
      %738 = vmatpush1.msra.mxu0 0.0
      %739 = vmatprep.subr.mxu0 0.0
      %740 = vmatpush1.msra.mxu0 0.0
      %741 = vmatprep.subr.mxu0 0.0
      %742 = vmatpush1.msra.mxu0 0.0
      %743 = vmatprep.subr.mxu0 0.0
      %744 = vmatpush1.msra.mxu0 0.0
      %745 = vmatprep.subr.mxu0 0.0
      %746 = vmatpush1.msra.mxu0 0.0
      %747 = vmatprep.subr.mxu0 0.0
      %748 = vmatpush1.msra.mxu0 0.0
      %749 = vmatprep.subr.mxu0 0.0
      %750 = vmatpush1.msra.mxu0 0.0
      %751 = vmatprep.subr.mxu0 0.0
      %752 = vmatpush1.msra.mxu0 0.0
      %753 = vmatprep.subr.mxu0 0.0
      %754 = vmatpush1.msra.mxu0 0.0
      %755 = vmatprep.subr.mxu0 0.0
      %756 = vmatpush1.msra.mxu0 0.0
      %757 = vmatprep.mubr.f32.mxu0 0.0
      %758 = vmatmul.mubr.f32.gmra.mrb[0].mxu0 %v661
      %v759 = vpop.f32.mrb[0].mxu0
      %v760 = vadd.f32 0.0, %v759
      %v761 = vpop.f32.mrb[0].mxu0
      %762 = vmatprep.mubr.f32.mxu0 0.0
      %763 = vmatmul.mubr.f32.gmra.mrb[0].mxu0 %v663
      %v764 = vpop.f32.mrb[0].mxu0
      %v765 = vadd.f32 0.0, %v764
      %v766 = vpop.f32.mrb[0].mxu0
      %767 = vmatprep.mubr.f32.mxu0 0.0
      %768 = vmatmul.mubr.f32.gmra.mrb[0].mxu0 %v665
      %v769 = vpop.f32.mrb[0].mxu0
      %v770 = vadd.f32 0.0, %v769
      %v771 = vpop.f32.mrb[0].mxu0
      %772 = vmatprep.mubr.f32.mxu0 0.0
      %773 = vmatmul.mubr.f32.gmra.mrb[0].mxu0 %v667
      %v774 = vpop.f32.mrb[0].mxu0
      %v775 = vadd.f32 0.0, %v774
      %v776 = vpop.f32.mrb[0].mxu0
      %777 = vmatprep.mubr.f32.mxu0 0.0
      %778 = vmatmul.mubr.f32.gmra.mrb[0].mxu0 %v669
      %v779 = vpop.f32.mrb[0].mxu0
      %v780 = vadd.f32 0.0, %v779
      %v781 = vpop.f32.mrb[0].mxu0
      %782 = vmatprep.mubr.f32.mxu0 0.0
      %783 = vmatmul.mubr.f32.gmra.mrb[0].mxu0 %v671
      %v784 = vpop.f32.mrb[0].mxu0
      %v785 = vadd.f32 0.0, %v784
      %v786 = vpop.f32.mrb[0].mxu0
      %787 = vmatprep.mubr.f32.mxu0 0.0
      %788 = vmatmul.mubr.f32.gmra.mrb[0].mxu0 %v673
      %v789 = vpop.f32.mrb[0].mxu0
      %v790 = vadd.f32 0.0, %v789
      %v791 = vpop.f32.mrb[0].mxu0
      %792 = vmatprep.mubr.f32.mxu0 0.0
      %793 = vmatmul.mubr.f32.gmra.mrb[0].mxu0 %v675
      %v794 = vpop.f32.mrb[0].mxu0
      %v795 = vadd.f32 0.0, %v794
      %v796 = vpop.f32.mrb[0].mxu0
      %797 = vmatprep.mubr.f32.mxu0 0.0
      %798 = vmatmul.mubr.f32.gmra.mrb[0].mxu0 %v677
      %v799 = vpop.f32.mrb[0].mxu0
      %v800 = vadd.f32 0.0, %v799
      %v801 = vpop.f32.mrb[0].mxu0
      %802 = vmatprep.mubr.f32.mxu0 0.0
      %803 = vmatmul.mubr.f32.gmra.mrb[0].mxu0 %v679
      %v804 = vpop.f32.mrb[0].mxu0
      %v805 = vadd.f32 0.0, %v804
      %v806 = vpop.f32.mrb[0].mxu0
      %807 = vmatprep.mubr.f32.mxu0 0.0
      %808 = vmatmul.mubr.f32.gmra.mrb[0].mxu0 %v681
      %v809 = vpop.f32.mrb[0].mxu0
      %v810 = vadd.f32 0.0, %v809
      %v811 = vpop.f32.mrb[0].mxu0
      %812 = vmatprep.mubr.f32.mxu0 0.0
      %813 = vmatmul.mubr.f32.gmra.mrb[0].mxu0 %v683
      %v814 = vpop.f32.mrb[0].mxu0
      %v815 = vadd.f32 0.0, %v814
      %v816 = vpop.f32.mrb[0].mxu0
      %817 = vmatprep.mubr.f32.mxu0 0.0
      %818 = vmatmul.mubr.f32.gmra.mrb[0].mxu0 %v685
      %v819 = vpop.f32.mrb[0].mxu0
      %v820 = vadd.f32 0.0, %v819
      %v821 = vpop.f32.mrb[0].mxu0
      %822 = vmatprep.mubr.f32.mxu0 0.0
      %823 = vmatmul.mubr.f32.gmra.mrb[0].mxu0 %v687
      %v824 = vpop.f32.mrb[0].mxu0
      %v825 = vadd.f32 0.0, %v824
      %v826 = vpop.f32.mrb[0].mxu0
      %827 = vmatprep.mubr.f32.mxu0 0.0
      %828 = vmatmul.mubr.f32.gmra.mrb[0].mxu0 %v689
      %v829 = vpop.f32.mrb[0].mxu0
      %v830 = vadd.f32 0.0, %v829
      %v831 = vpop.f32.mrb[0].mxu0
      %832 = vmatprep.mubr.f32.mxu0 0.0
      %833 = vmatmul.mubr.f32.gmra.mrb[0].mxu0 %v691
      %v834 = vpop.f32.mrb[0].mxu0
      %v835 = vadd.f32 0.0, %v834
      %v836 = vpop.f32.mrb[0].mxu0
      %837 = vdwg.mxu0
      %v838 = vsel %vm660, %v580, 0
      %v840 = vsel %vm660, %v532, 0
      %v842 = vsel %vm660, %v581, 0
      %v844 = vsel %vm660, %v535, 0
      %v846 = vsel %vm660, %v582, 0
      %v848 = vsel %vm660, %v538, 0
      %v850 = vsel %vm660, %v583, 0
      %v852 = vsel %vm660, %v541, 0
      %v854 = vsel %vm660, %v584, 0
      %v856 = vsel %vm660, %v544, 0
      %v858 = vsel %vm660, %v585, 0
      %v860 = vsel %vm660, %v547, 0
      %v862 = vsel %vm660, %v586, 0
      %v864 = vsel %vm660, %v550, 0
      %v866 = vsel %vm660, %v587, 0
      %v868 = vsel %vm660, %v553, 0
      %870 = vmatprep.subr.mxu0 0.0
      %871 = vmatpush1.msra.mxu0 %v600
      %872 = vmatprep.subr.mxu0 0.0
      %873 = vmatpush1.msra.mxu0 0.0
      %874 = vmatprep.subr.mxu0 0.0
      %875 = vmatpush1.msra.mxu0 0.0
      %876 = vmatprep.subr.mxu0 0.0
      %877 = vmatpush1.msra.mxu0 0.0
      %878 = vmatprep.subr.mxu0 0.0
      %879 = vmatpush1.msra.mxu0 0.0
      %880 = vmatprep.subr.mxu0 0.0
      %881 = vmatpush1.msra.mxu0 0.0
      %882 = vmatprep.subr.mxu0 0.0
      %883 = vmatpush1.msra.mxu0 0.0
      %884 = vmatprep.subr.mxu0 0.0
      %885 = vmatpush1.msra.mxu0 0.0
      %886 = vmatprep.subr.mxu0 0.0
      %887 = vmatpush1.msra.mxu0 0.0
      %888 = vmatprep.subr.mxu0 0.0
      %889 = vmatpush1.msra.mxu0 0.0
      %890 = vmatprep.subr.mxu0 0.0
      %891 = vmatpush1.msra.mxu0 0.0
      %892 = vmatprep.subr.mxu0 0.0
      %893 = vmatpush1.msra.mxu0 0.0
      %894 = vmatprep.subr.mxu0 0.0
      %895 = vmatpush1.msra.mxu0 0.0
      %896 = vmatprep.subr.mxu0 0.0
      %897 = vmatpush1.msra.mxu0 0.0
      %898 = vmatprep.subr.mxu0 0.0
      %899 = vmatpush1.msra.mxu0 0.0
      %900 = vmatprep.subr.mxu0 0.0
      %901 = vmatpush1.msra.mxu0 0.0
      %902 = vmatprep.subr.mxu0 0.0
      %903 = vmatpush1.msra.mxu0 0.0
      %904 = vmatprep.subr.mxu0 0.0
      %905 = vmatpush1.msra.mxu0 0.0
      %906 = vmatprep.subr.mxu0 0.0
      %907 = vmatpush1.msra.mxu0 0.0
      %908 = vmatprep.subr.mxu0 0.0
      %909 = vmatpush1.msra.mxu0 0.0
      %910 = vmatprep.subr.mxu0 0.0
      %911 = vmatpush1.msra.mxu0 0.0
      %912 = vmatprep.subr.mxu0 0.0
      %913 = vmatpush1.msra.mxu0 0.0
      %914 = vmatprep.subr.mxu0 0.0
      %915 = vmatpush1.msra.mxu0 0.0
      %916 = vmatprep.subr.mxu0 0.0
      %917 = vmatpush1.msra.mxu0 0.0
      %918 = vmatprep.subr.mxu0 0.0
      %919 = vmatpush1.msra.mxu0 0.0
      %920 = vmatprep.subr.mxu0 0.0
      %921 = vmatpush1.msra.mxu0 0.0
      %922 = vmatprep.subr.mxu0 0.0
      %923 = vmatpush1.msra.mxu0 0.0
      %924 = vmatprep.subr.mxu0 0.0
      %925 = vmatpush1.msra.mxu0 0.0
      %926 = vmatprep.subr.mxu0 0.0
      %927 = vmatpush1.msra.mxu0 0.0
      %928 = vmatprep.subr.mxu0 0.0
      %929 = vmatpush1.msra.mxu0 0.0
      %930 = vmatprep.subr.mxu0 0.0
      %931 = vmatpush1.msra.mxu0 0.0
      %932 = vmatprep.subr.mxu0 0.0
      %933 = vmatpush1.msra.mxu0 0.0
      %934 = vmatprep.mubr.f32.mxu0 0.0
      %935 = vmatmul.mubr.f32.gmra.mrb[0].mxu0 %v838
      %v936 = vpop.f32.mrb[0].mxu0
      %v937 = vadd.f32 %v760, %v936
      %v938 = vpop.f32.mrb[0].mxu0
      %939 = vmatprep.mubr.f32.mxu0 0.0
      %940 = vmatmul.mubr.f32.gmra.mrb[0].mxu0 %v840
      %v941 = vpop.f32.mrb[0].mxu0
      %v942 = vadd.f32 %v765, %v941
      %v943 = vpop.f32.mrb[0].mxu0
      %944 = vmatprep.mubr.f32.mxu0 0.0
      %945 = vmatmul.mubr.f32.gmra.mrb[0].mxu0 %v842
      %v946 = vpop.f32.mrb[0].mxu0
      %v947 = vadd.f32 %v770, %v946
      %v948 = vpop.f32.mrb[0].mxu0
      %949 = vmatprep.mubr.f32.mxu0 0.0
      %950 = vmatmul.mubr.f32.gmra.mrb[0].mxu0 %v844
      %v951 = vpop.f32.mrb[0].mxu0
      %v952 = vadd.f32 %v775, %v951
      %v953 = vpop.f32.mrb[0].mxu0
      %954 = vmatprep.mubr.f32.mxu0 0.0
      %955 = vmatmul.mubr.f32.gmra.mrb[0].mxu0 %v846
      %v956 = vpop.f32.mrb[0].mxu0
      %v957 = vadd.f32 %v780, %v956
      %v958 = vpop.f32.mrb[0].mxu0
      %959 = vmatprep.mubr.f32.mxu0 0.0
      %960 = vmatmul.mubr.f32.gmra.mrb[0].mxu0 %v848
      %v961 = vpop.f32.mrb[0].mxu0
      %v962 = vadd.f32 %v785, %v961
      %v963 = vpop.f32.mrb[0].mxu0
      %964 = vmatprep.mubr.f32.mxu0 0.0
      %965 = vmatmul.mubr.f32.gmra.mrb[0].mxu0 %v850
      %v966 = vpop.f32.mrb[0].mxu0
      %v967 = vadd.f32 %v790, %v966
      %v968 = vpop.f32.mrb[0].mxu0
      %969 = vmatprep.mubr.f32.mxu0 0.0
      %970 = vmatmul.mubr.f32.gmra.mrb[0].mxu0 %v852
      %v971 = vpop.f32.mrb[0].mxu0
      %v972 = vadd.f32 %v795, %v971
      %v973 = vpop.f32.mrb[0].mxu0
      %974 = vmatprep.mubr.f32.mxu0 0.0
      %975 = vmatmul.mubr.f32.gmra.mrb[0].mxu0 %v854
      %v976 = vpop.f32.mrb[0].mxu0
      %v977 = vadd.f32 %v800, %v976
      %v978 = vpop.f32.mrb[0].mxu0
      %979 = vmatprep.mubr.f32.mxu0 0.0
      %980 = vmatmul.mubr.f32.gmra.mrb[0].mxu0 %v856
      %v981 = vpop.f32.mrb[0].mxu0
      %v982 = vadd.f32 %v805, %v981
      %v983 = vpop.f32.mrb[0].mxu0
      %984 = vmatprep.mubr.f32.mxu0 0.0
      %985 = vmatmul.mubr.f32.gmra.mrb[0].mxu0 %v858
      %v986 = vpop.f32.mrb[0].mxu0
      %v987 = vadd.f32 %v810, %v986
      %v988 = vpop.f32.mrb[0].mxu0
      %989 = vmatprep.mubr.f32.mxu0 0.0
      %990 = vmatmul.mubr.f32.gmra.mrb[0].mxu0 %v860
      %v991 = vpop.f32.mrb[0].mxu0
      %v992 = vadd.f32 %v815, %v991
      %v993 = vpop.f32.mrb[0].mxu0
      %994 = vmatprep.mubr.f32.mxu0 0.0
      %995 = vmatmul.mubr.f32.gmra.mrb[0].mxu0 %v862
      %v996 = vpop.f32.mrb[0].mxu0
      %v997 = vadd.f32 %v820, %v996
      %v998 = vpop.f32.mrb[0].mxu0
      %999 = vmatprep.mubr.f32.mxu0 0.0
      %1000 = vmatmul.mubr.f32.gmra.mrb[0].mxu0 %v864
      %v1001 = vpop.f32.mrb[0].mxu0
      %v1002 = vadd.f32 %v825, %v1001
      %v1003 = vpop.f32.mrb[0].mxu0
      %1004 = vmatprep.mubr.f32.mxu0 0.0
      %1005 = vmatmul.mubr.f32.gmra.mrb[0].mxu0 %v866
      %v1006 = vpop.f32.mrb[0].mxu0
      %v1007 = vadd.f32 %v830, %v1006
      %v1008 = vpop.f32.mrb[0].mxu0
      %1009 = vmatprep.mubr.f32.mxu0 0.0
      %1010 = vmatmul.mubr.f32.gmra.mrb[0].mxu0 %v868
      %v1011 = vpop.f32.mrb[0].mxu0
      %v1012 = vadd.f32 %v835, %v1011
      %v1013 = vpop.f32.mrb[0].mxu0
      %1014 = vdwg.mxu0
      %vm1015 = vcmask 1045504
      %v1016 = vrot.slane %v580, 2
      %v1017 = vrot.slane %v532, 2
      %v1018 = vsel %vm1015, %v1016, %v1017
      %v1019 = vrot.slane %v590, 2
      %v1020 = vsel %vm1015, %v1017, %v1019
      %v1021 = vrot.slane %v581, 2
      %v1022 = vrot.slane %v535, 2
      %v1023 = vsel %vm1015, %v1021, %v1022
      %v1024 = vrot.slane %v591, 2
      %v1025 = vsel %vm1015, %v1022, %v1024
      %v1026 = vrot.slane %v582, 2
      %v1027 = vrot.slane %v538, 2
      %v1028 = vsel %vm1015, %v1026, %v1027
      %v1029 = vrot.slane %v592, 2
      %v1030 = vsel %vm1015, %v1027, %v1029
      %v1031 = vrot.slane %v583, 2
      %v1032 = vrot.slane %v541, 2
      %v1033 = vsel %vm1015, %v1031, %v1032
      %v1034 = vrot.slane %v593, 2
      %v1035 = vsel %vm1015, %v1032, %v1034
      %v1036 = vrot.slane %v584, 2
      %v1037 = vrot.slane %v544, 2
      %v1038 = vsel %vm1015, %v1036, %v1037
      %v1039 = vrot.slane %v594, 2
      %v1040 = vsel %vm1015, %v1037, %v1039
      %v1041 = vrot.slane %v585, 2
      %v1042 = vrot.slane %v547, 2
      %v1043 = vsel %vm1015, %v1041, %v1042
      %v1044 = vrot.slane %v595, 2
      %v1045 = vsel %vm1015, %v1042, %v1044
      %v1046 = vrot.slane %v586, 2
      %v1047 = vrot.slane %v550, 2
      %v1048 = vsel %vm1015, %v1046, %v1047
      %v1049 = vrot.slane %v596, 2
      %v1050 = vsel %vm1015, %v1047, %v1049
      %v1051 = vrot.slane %v587, 2
      %v1052 = vrot.slane %v553, 2
      %v1053 = vsel %vm1015, %v1051, %v1052
      %v1054 = vrot.slane %v597, 2
      %v1055 = vsel %vm1015, %v1052, %v1054
      %s1056 = scalar_lea.vmem %s3, 16
      %v1057 = vld [vmem:[%s1056] sm:$0xff]
      %v1058 = vsel %vm660, %v1018, 0
      %v1060 = vsel %vm660, %v1020, 0
      %v1062 = vsel %vm660, %v1023, 0
      %v1064 = vsel %vm660, %v1025, 0
      %v1066 = vsel %vm660, %v1028, 0
      %v1068 = vsel %vm660, %v1030, 0
      %v1070 = vsel %vm660, %v1033, 0
      %v1072 = vsel %vm660, %v1035, 0
      %v1074 = vsel %vm660, %v1038, 0
      %v1076 = vsel %vm660, %v1040, 0
      %v1078 = vsel %vm660, %v1043, 0
      %v1080 = vsel %vm660, %v1045, 0
      %v1082 = vsel %vm660, %v1048, 0
      %v1084 = vsel %vm660, %v1050, 0
      %v1086 = vsel %vm660, %v1053, 0
      %v1088 = vsel %vm660, %v1055, 0
      %1090 = vmatprep.subr.mxu0 0.0
      %1091 = vmatpush1.msra.mxu0 %v1057
      %1092 = vmatprep.subr.mxu0 0.0
      %1093 = vmatpush1.msra.mxu0 0.0
      %1094 = vmatprep.subr.mxu0 0.0
      %1095 = vmatpush1.msra.mxu0 0.0
      %1096 = vmatprep.subr.mxu0 0.0
      %1097 = vmatpush1.msra.mxu0 0.0
      %1098 = vmatprep.subr.mxu0 0.0
      %1099 = vmatpush1.msra.mxu0 0.0
      %1100 = vmatprep.subr.mxu0 0.0
      %1101 = vmatpush1.msra.mxu0 0.0
      %1102 = vmatprep.subr.mxu0 0.0
      %1103 = vmatpush1.msra.mxu0 0.0
      %1104 = vmatprep.subr.mxu0 0.0
      %1105 = vmatpush1.msra.mxu0 0.0
      %1106 = vmatprep.subr.mxu0 0.0
      %1107 = vmatpush1.msra.mxu0 0.0
      %1108 = vmatprep.subr.mxu0 0.0
      %1109 = vmatpush1.msra.mxu0 0.0
      %1110 = vmatprep.subr.mxu0 0.0
      %1111 = vmatpush1.msra.mxu0 0.0
      %1112 = vmatprep.subr.mxu0 0.0
      %1113 = vmatpush1.msra.mxu0 0.0
      %1114 = vmatprep.subr.mxu0 0.0
      %1115 = vmatpush1.msra.mxu0 0.0
      %1116 = vmatprep.subr.mxu0 0.0
      %1117 = vmatpush1.msra.mxu0 0.0
      %1118 = vmatprep.subr.mxu0 0.0
      %1119 = vmatpush1.msra.mxu0 0.0
      %1120 = vmatprep.subr.mxu0 0.0
      %1121 = vmatpush1.msra.mxu0 0.0
      %1122 = vmatprep.subr.mxu0 0.0
      %1123 = vmatpush1.msra.mxu0 0.0
      %1124 = vmatprep.subr.mxu0 0.0
      %1125 = vmatpush1.msra.mxu0 0.0
      %1126 = vmatprep.subr.mxu0 0.0
      %1127 = vmatpush1.msra.mxu0 0.0
      %1128 = vmatprep.subr.mxu0 0.0
      %1129 = vmatpush1.msra.mxu0 0.0
      %1130 = vmatprep.subr.mxu0 0.0
      %1131 = vmatpush1.msra.mxu0 0.0
      %1132 = vmatprep.subr.mxu0 0.0
      %1133 = vmatpush1.msra.mxu0 0.0
      %1134 = vmatprep.subr.mxu0 0.0
      %1135 = vmatpush1.msra.mxu0 0.0
      %1136 = vmatprep.subr.mxu0 0.0
      %1137 = vmatpush1.msra.mxu0 0.0
      %1138 = vmatprep.subr.mxu0 0.0
      %1139 = vmatpush1.msra.mxu0 0.0
      %1140 = vmatprep.subr.mxu0 0.0
      %1141 = vmatpush1.msra.mxu0 0.0
      %1142 = vmatprep.subr.mxu0 0.0
      %1143 = vmatpush1.msra.mxu0 0.0
      %1144 = vmatprep.subr.mxu0 0.0
      %1145 = vmatpush1.msra.mxu0 0.0
      %1146 = vmatprep.subr.mxu0 0.0
      %1147 = vmatpush1.msra.mxu0 0.0
      %1148 = vmatprep.subr.mxu0 0.0
      %1149 = vmatpush1.msra.mxu0 0.0
      %1150 = vmatprep.subr.mxu0 0.0
      %1151 = vmatpush1.msra.mxu0 0.0
      %1152 = vmatprep.subr.mxu0 0.0
      %1153 = vmatpush1.msra.mxu0 0.0
      %1154 = vmatprep.mubr.f32.mxu0 0.0
      %1155 = vmatmul.mubr.f32.gmra.mrb[0].mxu0 %v1058
      %v1156 = vpop.f32.mrb[0].mxu0
      %v1157 = vadd.f32 0.0, %v1156
      %v1158 = vpop.f32.mrb[0].mxu0
      %1159 = vmatprep.mubr.f32.mxu0 0.0
      %1160 = vmatmul.mubr.f32.gmra.mrb[0].mxu0 %v1060
      %v1161 = vpop.f32.mrb[0].mxu0
      %v1162 = vadd.f32 0.0, %v1161
      %v1163 = vpop.f32.mrb[0].mxu0
      %1164 = vmatprep.mubr.f32.mxu0 0.0
      %1165 = vmatmul.mubr.f32.gmra.mrb[0].mxu0 %v1062
      %v1166 = vpop.f32.mrb[0].mxu0
      %v1167 = vadd.f32 0.0, %v1166
      %v1168 = vpop.f32.mrb[0].mxu0
      %1169 = vmatprep.mubr.f32.mxu0 0.0
      %1170 = vmatmul.mubr.f32.gmra.mrb[0].mxu0 %v1064
      %v1171 = vpop.f32.mrb[0].mxu0
      %v1172 = vadd.f32 0.0, %v1171
      %v1173 = vpop.f32.mrb[0].mxu0
      %1174 = vmatprep.mubr.f32.mxu0 0.0
      %1175 = vmatmul.mubr.f32.gmra.mrb[0].mxu0 %v1066
      %v1176 = vpop.f32.mrb[0].mxu0
      %v1177 = vadd.f32 0.0, %v1176
      %v1178 = vpop.f32.mrb[0].mxu0
      %1179 = vmatprep.mubr.f32.mxu0 0.0
      %1180 = vmatmul.mubr.f32.gmra.mrb[0].mxu0 %v1068
      %v1181 = vpop.f32.mrb[0].mxu0
      %v1182 = vadd.f32 0.0, %v1181
      %v1183 = vpop.f32.mrb[0].mxu0
      %1184 = vmatprep.mubr.f32.mxu0 0.0
      %1185 = vmatmul.mubr.f32.gmra.mrb[0].mxu0 %v1070
      %v1186 = vpop.f32.mrb[0].mxu0
      %v1187 = vadd.f32 0.0, %v1186
      %v1188 = vpop.f32.mrb[0].mxu0
      %1189 = vmatprep.mubr.f32.mxu0 0.0
      %1190 = vmatmul.mubr.f32.gmra.mrb[0].mxu0 %v1072
      %v1191 = vpop.f32.mrb[0].mxu0
      %v1192 = vadd.f32 0.0, %v1191
      %v1193 = vpop.f32.mrb[0].mxu0
      %1194 = vmatprep.mubr.f32.mxu0 0.0
      %1195 = vmatmul.mubr.f32.gmra.mrb[0].mxu0 %v1074
      %v1196 = vpop.f32.mrb[0].mxu0
      %v1197 = vadd.f32 0.0, %v1196
      %v1198 = vpop.f32.mrb[0].mxu0
      %1199 = vmatprep.mubr.f32.mxu0 0.0
      %1200 = vmatmul.mubr.f32.gmra.mrb[0].mxu0 %v1076
      %v1201 = vpop.f32.mrb[0].mxu0
      %v1202 = vadd.f32 0.0, %v1201
      %v1203 = vpop.f32.mrb[0].mxu0
      %1204 = vmatprep.mubr.f32.mxu0 0.0
      %1205 = vmatmul.mubr.f32.gmra.mrb[0].mxu0 %v1078
      %v1206 = vpop.f32.mrb[0].mxu0
      %v1207 = vadd.f32 0.0, %v1206
      %v1208 = vpop.f32.mrb[0].mxu0
      %1209 = vmatprep.mubr.f32.mxu0 0.0
      %1210 = vmatmul.mubr.f32.gmra.mrb[0].mxu0 %v1080
      %v1211 = vpop.f32.mrb[0].mxu0
      %v1212 = vadd.f32 0.0, %v1211
      %v1213 = vpop.f32.mrb[0].mxu0
      %1214 = vmatprep.mubr.f32.mxu0 0.0
      %1215 = vmatmul.mubr.f32.gmra.mrb[0].mxu0 %v1082
      %v1216 = vpop.f32.mrb[0].mxu0
      %v1217 = vadd.f32 0.0, %v1216
      %v1218 = vpop.f32.mrb[0].mxu0
      %1219 = vmatprep.mubr.f32.mxu0 0.0
      %1220 = vmatmul.mubr.f32.gmra.mrb[0].mxu0 %v1084
      %v1221 = vpop.f32.mrb[0].mxu0
      %v1222 = vadd.f32 0.0, %v1221
      %v1223 = vpop.f32.mrb[0].mxu0
      %1224 = vmatprep.mubr.f32.mxu0 0.0
      %1225 = vmatmul.mubr.f32.gmra.mrb[0].mxu0 %v1086
      %v1226 = vpop.f32.mrb[0].mxu0
      %v1227 = vadd.f32 0.0, %v1226
      %v1228 = vpop.f32.mrb[0].mxu0
      %1229 = vmatprep.mubr.f32.mxu0 0.0
      %1230 = vmatmul.mubr.f32.gmra.mrb[0].mxu0 %v1088
      %v1231 = vpop.f32.mrb[0].mxu0
      %v1232 = vadd.f32 0.0, %v1231
      %v1233 = vpop.f32.mrb[0].mxu0
      %1234 = vdwg.mxu0
      %v1235 = vadd.f32 %v937, %v1157
      %v1236 = vadd.f32 %v942, %v1162
      %v1237 = vadd.f32 %v947, %v1167
      %v1238 = vadd.f32 %v952, %v1172
      %v1239 = vadd.f32 %v957, %v1177
      %v1240 = vadd.f32 %v962, %v1182
      %v1241 = vadd.f32 %v967, %v1187
      %v1242 = vadd.f32 %v972, %v1192
      %v1243 = vadd.f32 %v977, %v1197
      %v1244 = vadd.f32 %v982, %v1202
      %v1245 = vadd.f32 %v987, %v1207
      %v1246 = vadd.f32 %v992, %v1212
      %v1247 = vadd.f32 %v997, %v1217
      %v1248 = vadd.f32 %v1002, %v1222
      %v1249 = vadd.f32 %v1007, %v1227
      %v1250 = vadd.f32 %v1012, %v1232
      %s1251 = scalar_lea.vmem %s3, 24
      %v1252 = vld [vmem:[%s1251] sm:$0xff]
      %v1254 = vsel %vm660, %v588, 0
      %v1256 = vsel %vm660, %v556, 0
      %1258 = vmatprep.subr.mxu0 0.0
      %1259 = vmatpush1.msra.mxu0 %v1252
      %1260 = vmatprep.subr.mxu0 0.0
      %1261 = vmatpush1.msra.mxu0 0.0
      %1262 = vmatprep.subr.mxu0 0.0
      %1263 = vmatpush1.msra.mxu0 0.0
      %1264 = vmatprep.subr.mxu0 0.0
      %1265 = vmatpush1.msra.mxu0 0.0
      %1266 = vmatprep.subr.mxu0 0.0
      %1267 = vmatpush1.msra.mxu0 0.0
      %1268 = vmatprep.subr.mxu0 0.0
      %1269 = vmatpush1.msra.mxu0 0.0
      %1270 = vmatprep.subr.mxu0 0.0
      %1271 = vmatpush1.msra.mxu0 0.0
      %1272 = vmatprep.subr.mxu0 0.0
      %1273 = vmatpush1.msra.mxu0 0.0
      %1274 = vmatprep.subr.mxu0 0.0
      %1275 = vmatpush1.msra.mxu0 0.0
      %1276 = vmatprep.subr.mxu0 0.0
      %1277 = vmatpush1.msra.mxu0 0.0
      %1278 = vmatprep.subr.mxu0 0.0
      %1279 = vmatpush1.msra.mxu0 0.0
      %1280 = vmatprep.subr.mxu0 0.0
      %1281 = vmatpush1.msra.mxu0 0.0
      %1282 = vmatprep.subr.mxu0 0.0
      %1283 = vmatpush1.msra.mxu0 0.0
      %1284 = vmatprep.subr.mxu0 0.0
      %1285 = vmatpush1.msra.mxu0 0.0
      %1286 = vmatprep.subr.mxu0 0.0
      %1287 = vmatpush1.msra.mxu0 0.0
      %1288 = vmatprep.subr.mxu0 0.0
      %1289 = vmatpush1.msra.mxu0 0.0
      %1290 = vmatprep.subr.mxu0 0.0
      %1291 = vmatpush1.msra.mxu0 0.0
      %1292 = vmatprep.subr.mxu0 0.0
      %1293 = vmatpush1.msra.mxu0 0.0
      %1294 = vmatprep.subr.mxu0 0.0
      %1295 = vmatpush1.msra.mxu0 0.0
      %1296 = vmatprep.subr.mxu0 0.0
      %1297 = vmatpush1.msra.mxu0 0.0
      %1298 = vmatprep.subr.mxu0 0.0
      %1299 = vmatpush1.msra.mxu0 0.0
      %1300 = vmatprep.subr.mxu0 0.0
      %1301 = vmatpush1.msra.mxu0 0.0
      %1302 = vmatprep.subr.mxu0 0.0
      %1303 = vmatpush1.msra.mxu0 0.0
      %1304 = vmatprep.subr.mxu0 0.0
      %1305 = vmatpush1.msra.mxu0 0.0
      %1306 = vmatprep.subr.mxu0 0.0
      %1307 = vmatpush1.msra.mxu0 0.0
      %1308 = vmatprep.subr.mxu0 0.0
      %1309 = vmatpush1.msra.mxu0 0.0
      %1310 = vmatprep.subr.mxu0 0.0
      %1311 = vmatpush1.msra.mxu0 0.0
      %1312 = vmatprep.subr.mxu0 0.0
      %1313 = vmatpush1.msra.mxu0 0.0
      %1314 = vmatprep.subr.mxu0 0.0
      %1315 = vmatpush1.msra.mxu0 0.0
      %1316 = vmatprep.subr.mxu0 0.0
      %1317 = vmatpush1.msra.mxu0 0.0
      %1318 = vmatprep.subr.mxu0 0.0
      %1319 = vmatpush1.msra.mxu0 0.0
      %1320 = vmatprep.subr.mxu0 0.0
      %1321 = vmatpush1.msra.mxu0 0.0
      %1322 = vmatprep.mubr.f32.mxu0 0.0
      %1323 = vmatmul.mubr.f32.gmra.mrb[0].mxu0 %v842
      %v1324 = vpop.f32.mrb[0].mxu0
      %v1325 = vadd.f32 0.0, %v1324
      %v1326 = vpop.f32.mrb[0].mxu0
      %1327 = vmatprep.mubr.f32.mxu0 0.0
      %1328 = vmatmul.mubr.f32.gmra.mrb[0].mxu0 %v844
      %v1329 = vpop.f32.mrb[0].mxu0
      %v1330 = vadd.f32 0.0, %v1329
      %v1331 = vpop.f32.mrb[0].mxu0
      %1332 = vmatprep.mubr.f32.mxu0 0.0
      %1333 = vmatmul.mubr.f32.gmra.mrb[0].mxu0 %v846
      %v1334 = vpop.f32.mrb[0].mxu0
      %v1335 = vadd.f32 0.0, %v1334
      %v1336 = vpop.f32.mrb[0].mxu0
      %1337 = vmatprep.mubr.f32.mxu0 0.0
      %1338 = vmatmul.mubr.f32.gmra.mrb[0].mxu0 %v848
      %v1339 = vpop.f32.mrb[0].mxu0
      %v1340 = vadd.f32 0.0, %v1339
      %v1341 = vpop.f32.mrb[0].mxu0
      %1342 = vmatprep.mubr.f32.mxu0 0.0
      %1343 = vmatmul.mubr.f32.gmra.mrb[0].mxu0 %v850
      %v1344 = vpop.f32.mrb[0].mxu0
      %v1345 = vadd.f32 0.0, %v1344
      %v1346 = vpop.f32.mrb[0].mxu0
      %1347 = vmatprep.mubr.f32.mxu0 0.0
      %1348 = vmatmul.mubr.f32.gmra.mrb[0].mxu0 %v852
      %v1349 = vpop.f32.mrb[0].mxu0
      %v1350 = vadd.f32 0.0, %v1349
      %v1351 = vpop.f32.mrb[0].mxu0
      %1352 = vmatprep.mubr.f32.mxu0 0.0
      %1353 = vmatmul.mubr.f32.gmra.mrb[0].mxu0 %v854
      %v1354 = vpop.f32.mrb[0].mxu0
      %v1355 = vadd.f32 0.0, %v1354
      %v1356 = vpop.f32.mrb[0].mxu0
      %1357 = vmatprep.mubr.f32.mxu0 0.0
      %1358 = vmatmul.mubr.f32.gmra.mrb[0].mxu0 %v856
      %v1359 = vpop.f32.mrb[0].mxu0
      %v1360 = vadd.f32 0.0, %v1359
      %v1361 = vpop.f32.mrb[0].mxu0
      %1362 = vmatprep.mubr.f32.mxu0 0.0
      %1363 = vmatmul.mubr.f32.gmra.mrb[0].mxu0 %v858
      %v1364 = vpop.f32.mrb[0].mxu0
      %v1365 = vadd.f32 0.0, %v1364
      %v1366 = vpop.f32.mrb[0].mxu0
      %1367 = vmatprep.mubr.f32.mxu0 0.0
      %1368 = vmatmul.mubr.f32.gmra.mrb[0].mxu0 %v860
      %v1369 = vpop.f32.mrb[0].mxu0
      %v1370 = vadd.f32 0.0, %v1369
      %v1371 = vpop.f32.mrb[0].mxu0
      %1372 = vmatprep.mubr.f32.mxu0 0.0
      %1373 = vmatmul.mubr.f32.gmra.mrb[0].mxu0 %v862
      %v1374 = vpop.f32.mrb[0].mxu0
      %v1375 = vadd.f32 0.0, %v1374
      %v1376 = vpop.f32.mrb[0].mxu0
      %1377 = vmatprep.mubr.f32.mxu0 0.0
      %1378 = vmatmul.mubr.f32.gmra.mrb[0].mxu0 %v864
      %v1379 = vpop.f32.mrb[0].mxu0
      %v1380 = vadd.f32 0.0, %v1379
      %v1381 = vpop.f32.mrb[0].mxu0
      %1382 = vmatprep.mubr.f32.mxu0 0.0
      %1383 = vmatmul.mubr.f32.gmra.mrb[0].mxu0 %v866
      %v1384 = vpop.f32.mrb[0].mxu0
      %v1385 = vadd.f32 0.0, %v1384
      %v1386 = vpop.f32.mrb[0].mxu0
      %1387 = vmatprep.mubr.f32.mxu0 0.0
      %1388 = vmatmul.mubr.f32.gmra.mrb[0].mxu0 %v868
      %v1389 = vpop.f32.mrb[0].mxu0
      %v1390 = vadd.f32 0.0, %v1389
      %v1391 = vpop.f32.mrb[0].mxu0
      %1392 = vmatprep.mubr.f32.mxu0 0.0
      %1393 = vmatmul.mubr.f32.gmra.mrb[0].mxu0 %v1254
      %v1394 = vpop.f32.mrb[0].mxu0
      %v1395 = vadd.f32 0.0, %v1394
      %v1396 = vpop.f32.mrb[0].mxu0
      %1397 = vmatprep.mubr.f32.mxu0 0.0
      %1398 = vmatmul.mubr.f32.gmra.mrb[0].mxu0 %v1256
      %v1399 = vpop.f32.mrb[0].mxu0
      %v1400 = vadd.f32 0.0, %v1399
      %v1401 = vpop.f32.mrb[0].mxu0
      %1402 = vdwg.mxu0
      %v1403 = vadd.f32 %v1235, %v1325
      %v1404 = vadd.f32 %v1236, %v1330
      %v1405 = vadd.f32 %v1237, %v1335
      %v1406 = vadd.f32 %v1238, %v1340
      %v1407 = vadd.f32 %v1239, %v1345
      %v1408 = vadd.f32 %v1240, %v1350
      %v1409 = vadd.f32 %v1241, %v1355
      %v1410 = vadd.f32 %v1242, %v1360
      %v1411 = vadd.f32 %v1243, %v1365
      %v1412 = vadd.f32 %v1244, %v1370
      %v1413 = vadd.f32 %v1245, %v1375
      %v1414 = vadd.f32 %v1246, %v1380
      %v1415 = vadd.f32 %v1247, %v1385
      %v1416 = vadd.f32 %v1248, %v1390
      %v1417 = vadd.f32 %v1249, %v1395
      %v1418 = vadd.f32 %v1250, %v1400
      %v1420 = vrot.slane %v588, 1
      %v1421 = vrot.slane %v556, 1
      %v1422 = vsel %vm617, %v1420, %v1421
      %v1423 = vrot.slane %v598, 1
      %v1424 = vsel %vm617, %v1421, %v1423
      %s1425 = scalar_lea.vmem %s3, 32
      %v1426 = vld [vmem:[%s1425] sm:$0xff]
      %v1427 = vsel %vm660, %v1422, 0
      %v1429 = vsel %vm660, %v1424, 0
      %1431 = vmatprep.subr.mxu0 0.0
      %1432 = vmatpush1.msra.mxu0 %v1426
      %1433 = vmatprep.subr.mxu0 0.0
      %1434 = vmatpush1.msra.mxu0 0.0
      %1435 = vmatprep.subr.mxu0 0.0
      %1436 = vmatpush1.msra.mxu0 0.0
      %1437 = vmatprep.subr.mxu0 0.0
      %1438 = vmatpush1.msra.mxu0 0.0
      %1439 = vmatprep.subr.mxu0 0.0
      %1440 = vmatpush1.msra.mxu0 0.0
      %1441 = vmatprep.subr.mxu0 0.0
      %1442 = vmatpush1.msra.mxu0 0.0
      %1443 = vmatprep.subr.mxu0 0.0
      %1444 = vmatpush1.msra.mxu0 0.0
      %1445 = vmatprep.subr.mxu0 0.0
      %1446 = vmatpush1.msra.mxu0 0.0
      %1447 = vmatprep.subr.mxu0 0.0
      %1448 = vmatpush1.msra.mxu0 0.0
      %1449 = vmatprep.subr.mxu0 0.0
      %1450 = vmatpush1.msra.mxu0 0.0
      %1451 = vmatprep.subr.mxu0 0.0
      %1452 = vmatpush1.msra.mxu0 0.0
      %1453 = vmatprep.subr.mxu0 0.0
      %1454 = vmatpush1.msra.mxu0 0.0
      %1455 = vmatprep.subr.mxu0 0.0
      %1456 = vmatpush1.msra.mxu0 0.0
      %1457 = vmatprep.subr.mxu0 0.0
      %1458 = vmatpush1.msra.mxu0 0.0
      %1459 = vmatprep.subr.mxu0 0.0
      %1460 = vmatpush1.msra.mxu0 0.0
      %1461 = vmatprep.subr.mxu0 0.0
      %1462 = vmatpush1.msra.mxu0 0.0
      %1463 = vmatprep.subr.mxu0 0.0
      %1464 = vmatpush1.msra.mxu0 0.0
      %1465 = vmatprep.subr.mxu0 0.0
      %1466 = vmatpush1.msra.mxu0 0.0
      %1467 = vmatprep.subr.mxu0 0.0
      %1468 = vmatpush1.msra.mxu0 0.0
      %1469 = vmatprep.subr.mxu0 0.0
      %1470 = vmatpush1.msra.mxu0 0.0
      %1471 = vmatprep.subr.mxu0 0.0
      %1472 = vmatpush1.msra.mxu0 0.0
      %1473 = vmatprep.subr.mxu0 0.0
      %1474 = vmatpush1.msra.mxu0 0.0
      %1475 = vmatprep.subr.mxu0 0.0
      %1476 = vmatpush1.msra.mxu0 0.0
      %1477 = vmatprep.subr.mxu0 0.0
      %1478 = vmatpush1.msra.mxu0 0.0
      %1479 = vmatprep.subr.mxu0 0.0
      %1480 = vmatpush1.msra.mxu0 0.0
      %1481 = vmatprep.subr.mxu0 0.0
      %1482 = vmatpush1.msra.mxu0 0.0
      %1483 = vmatprep.subr.mxu0 0.0
      %1484 = vmatpush1.msra.mxu0 0.0
      %1485 = vmatprep.subr.mxu0 0.0
      %1486 = vmatpush1.msra.mxu0 0.0
      %1487 = vmatprep.subr.mxu0 0.0
      %1488 = vmatpush1.msra.mxu0 0.0
      %1489 = vmatprep.subr.mxu0 0.0
      %1490 = vmatpush1.msra.mxu0 0.0
      %1491 = vmatprep.subr.mxu0 0.0
      %1492 = vmatpush1.msra.mxu0 0.0
      %1493 = vmatprep.subr.mxu0 0.0
      %1494 = vmatpush1.msra.mxu0 0.0
      %1495 = vmatprep.mubr.f32.mxu0 0.0
      %1496 = vmatmul.mubr.f32.gmra.mrb[0].mxu0 %v665
      %v1497 = vpop.f32.mrb[0].mxu0
      %v1498 = vadd.f32 0.0, %v1497
      %v1499 = vpop.f32.mrb[0].mxu0
      %1500 = vmatprep.mubr.f32.mxu0 0.0
      %1501 = vmatmul.mubr.f32.gmra.mrb[0].mxu0 %v667
      %v1502 = vpop.f32.mrb[0].mxu0
      %v1503 = vadd.f32 0.0, %v1502
      %v1504 = vpop.f32.mrb[0].mxu0
      %1505 = vmatprep.mubr.f32.mxu0 0.0
      %1506 = vmatmul.mubr.f32.gmra.mrb[0].mxu0 %v669
      %v1507 = vpop.f32.mrb[0].mxu0
      %v1508 = vadd.f32 0.0, %v1507
      %v1509 = vpop.f32.mrb[0].mxu0
      %1510 = vmatprep.mubr.f32.mxu0 0.0
      %1511 = vmatmul.mubr.f32.gmra.mrb[0].mxu0 %v671
      %v1512 = vpop.f32.mrb[0].mxu0
      %v1513 = vadd.f32 0.0, %v1512
      %v1514 = vpop.f32.mrb[0].mxu0
      %1515 = vmatprep.mubr.f32.mxu0 0.0
      %1516 = vmatmul.mubr.f32.gmra.mrb[0].mxu0 %v673
      %v1517 = vpop.f32.mrb[0].mxu0
      %v1518 = vadd.f32 0.0, %v1517
      %v1519 = vpop.f32.mrb[0].mxu0
      %1520 = vmatprep.mubr.f32.mxu0 0.0
      %1521 = vmatmul.mubr.f32.gmra.mrb[0].mxu0 %v675
      %v1522 = vpop.f32.mrb[0].mxu0
      %v1523 = vadd.f32 0.0, %v1522
      %v1524 = vpop.f32.mrb[0].mxu0
      %1525 = vmatprep.mubr.f32.mxu0 0.0
      %1526 = vmatmul.mubr.f32.gmra.mrb[0].mxu0 %v677
      %v1527 = vpop.f32.mrb[0].mxu0
      %v1528 = vadd.f32 0.0, %v1527
      %v1529 = vpop.f32.mrb[0].mxu0
      %1530 = vmatprep.mubr.f32.mxu0 0.0
      %1531 = vmatmul.mubr.f32.gmra.mrb[0].mxu0 %v679
      %v1532 = vpop.f32.mrb[0].mxu0
      %v1533 = vadd.f32 0.0, %v1532
      %v1534 = vpop.f32.mrb[0].mxu0
      %1535 = vmatprep.mubr.f32.mxu0 0.0
      %1536 = vmatmul.mubr.f32.gmra.mrb[0].mxu0 %v681
      %v1537 = vpop.f32.mrb[0].mxu0
      %v1538 = vadd.f32 0.0, %v1537
      %v1539 = vpop.f32.mrb[0].mxu0
      %1540 = vmatprep.mubr.f32.mxu0 0.0
      %1541 = vmatmul.mubr.f32.gmra.mrb[0].mxu0 %v683
      %v1542 = vpop.f32.mrb[0].mxu0
      %v1543 = vadd.f32 0.0, %v1542
      %v1544 = vpop.f32.mrb[0].mxu0
      %1545 = vmatprep.mubr.f32.mxu0 0.0
      %1546 = vmatmul.mubr.f32.gmra.mrb[0].mxu0 %v685
      %v1547 = vpop.f32.mrb[0].mxu0
      %v1548 = vadd.f32 0.0, %v1547
      %v1549 = vpop.f32.mrb[0].mxu0
      %1550 = vmatprep.mubr.f32.mxu0 0.0
      %1551 = vmatmul.mubr.f32.gmra.mrb[0].mxu0 %v687
      %v1552 = vpop.f32.mrb[0].mxu0
      %v1553 = vadd.f32 0.0, %v1552
      %v1554 = vpop.f32.mrb[0].mxu0
      %1555 = vmatprep.mubr.f32.mxu0 0.0
      %1556 = vmatmul.mubr.f32.gmra.mrb[0].mxu0 %v689
      %v1557 = vpop.f32.mrb[0].mxu0
      %v1558 = vadd.f32 0.0, %v1557
      %v1559 = vpop.f32.mrb[0].mxu0
      %1560 = vmatprep.mubr.f32.mxu0 0.0
      %1561 = vmatmul.mubr.f32.gmra.mrb[0].mxu0 %v691
      %v1562 = vpop.f32.mrb[0].mxu0
      %v1563 = vadd.f32 0.0, %v1562
      %v1564 = vpop.f32.mrb[0].mxu0
      %1565 = vmatprep.mubr.f32.mxu0 0.0
      %1566 = vmatmul.mubr.f32.gmra.mrb[0].mxu0 %v1427
      %v1567 = vpop.f32.mrb[0].mxu0
      %v1568 = vadd.f32 0.0, %v1567
      %v1569 = vpop.f32.mrb[0].mxu0
      %1570 = vmatprep.mubr.f32.mxu0 0.0
      %1571 = vmatmul.mubr.f32.gmra.mrb[0].mxu0 %v1429
      %v1572 = vpop.f32.mrb[0].mxu0
      %v1573 = vadd.f32 0.0, %v1572
      %v1574 = vpop.f32.mrb[0].mxu0
      %1575 = vdwg.mxu0
      %v1576 = vadd.f32 %v1403, %v1498
      %v1577 = vadd.f32 %v1404, %v1503
      %v1578 = vadd.f32 %v1405, %v1508
      %v1579 = vadd.f32 %v1406, %v1513
      %v1580 = vadd.f32 %v1407, %v1518
      %v1581 = vadd.f32 %v1408, %v1523
      %v1582 = vadd.f32 %v1409, %v1528
      %v1583 = vadd.f32 %v1410, %v1533
      %v1584 = vadd.f32 %v1411, %v1538
      %v1585 = vadd.f32 %v1412, %v1543
      %v1586 = vadd.f32 %v1413, %v1548
      %v1587 = vadd.f32 %v1414, %v1553
      %v1588 = vadd.f32 %v1415, %v1558
      %v1589 = vadd.f32 %v1416, %v1563
      %v1590 = vadd.f32 %v1417, %v1568
      %v1591 = vadd.f32 %v1418, %v1573
      %v1592 = vrot.slane %v588, 2
      %v1593 = vrot.slane %v556, 2
      %v1594 = vsel %vm1015, %v1592, %v1593
      %v1595 = vrot.slane %v598, 2
      %v1596 = vsel %vm1015, %v1593, %v1595
      %s1597 = scalar_lea.vmem %s3, 40
      %v1598 = vld [vmem:[%s1597] sm:$0xff]
      %v1599 = vsel %vm660, %v1594, 0
      %v1601 = vsel %vm660, %v1596, 0
      %1603 = vmatprep.subr.mxu0 0.0
      %1604 = vmatpush1.msra.mxu0 %v1598
      %1605 = vmatprep.subr.mxu0 0.0
      %1606 = vmatpush1.msra.mxu0 0.0
      %1607 = vmatprep.subr.mxu0 0.0
      %1608 = vmatpush1.msra.mxu0 0.0
      %1609 = vmatprep.subr.mxu0 0.0
      %1610 = vmatpush1.msra.mxu0 0.0
      %1611 = vmatprep.subr.mxu0 0.0
      %1612 = vmatpush1.msra.mxu0 0.0
      %1613 = vmatprep.subr.mxu0 0.0
      %1614 = vmatpush1.msra.mxu0 0.0
      %1615 = vmatprep.subr.mxu0 0.0
      %1616 = vmatpush1.msra.mxu0 0.0
      %1617 = vmatprep.subr.mxu0 0.0
      %1618 = vmatpush1.msra.mxu0 0.0
      %1619 = vmatprep.subr.mxu0 0.0
      %1620 = vmatpush1.msra.mxu0 0.0
      %1621 = vmatprep.subr.mxu0 0.0
      %1622 = vmatpush1.msra.mxu0 0.0
      %1623 = vmatprep.subr.mxu0 0.0
      %1624 = vmatpush1.msra.mxu0 0.0
      %1625 = vmatprep.subr.mxu0 0.0
      %1626 = vmatpush1.msra.mxu0 0.0
      %1627 = vmatprep.subr.mxu0 0.0
      %1628 = vmatpush1.msra.mxu0 0.0
      %1629 = vmatprep.subr.mxu0 0.0
      %1630 = vmatpush1.msra.mxu0 0.0
      %1631 = vmatprep.subr.mxu0 0.0
      %1632 = vmatpush1.msra.mxu0 0.0
      %1633 = vmatprep.subr.mxu0 0.0
      %1634 = vmatpush1.msra.mxu0 0.0
      %1635 = vmatprep.subr.mxu0 0.0
      %1636 = vmatpush1.msra.mxu0 0.0
      %1637 = vmatprep.subr.mxu0 0.0
      %1638 = vmatpush1.msra.mxu0 0.0
      %1639 = vmatprep.subr.mxu0 0.0
      %1640 = vmatpush1.msra.mxu0 0.0
      %1641 = vmatprep.subr.mxu0 0.0
      %1642 = vmatpush1.msra.mxu0 0.0
      %1643 = vmatprep.subr.mxu0 0.0
      %1644 = vmatpush1.msra.mxu0 0.0
      %1645 = vmatprep.subr.mxu0 0.0
      %1646 = vmatpush1.msra.mxu0 0.0
      %1647 = vmatprep.subr.mxu0 0.0
      %1648 = vmatpush1.msra.mxu0 0.0
      %1649 = vmatprep.subr.mxu0 0.0
      %1650 = vmatpush1.msra.mxu0 0.0
      %1651 = vmatprep.subr.mxu0 0.0
      %1652 = vmatpush1.msra.mxu0 0.0
      %1653 = vmatprep.subr.mxu0 0.0
      %1654 = vmatpush1.msra.mxu0 0.0
      %1655 = vmatprep.subr.mxu0 0.0
      %1656 = vmatpush1.msra.mxu0 0.0
      %1657 = vmatprep.subr.mxu0 0.0
      %1658 = vmatpush1.msra.mxu0 0.0
      %1659 = vmatprep.subr.mxu0 0.0
      %1660 = vmatpush1.msra.mxu0 0.0
      %1661 = vmatprep.subr.mxu0 0.0
      %1662 = vmatpush1.msra.mxu0 0.0
      %1663 = vmatprep.subr.mxu0 0.0
      %1664 = vmatpush1.msra.mxu0 0.0
      %1665 = vmatprep.subr.mxu0 0.0
      %1666 = vmatpush1.msra.mxu0 0.0
      %1667 = vmatprep.mubr.f32.mxu0 0.0
      %1668 = vmatmul.mubr.f32.gmra.mrb[0].mxu0 %v1062
      %v1669 = vpop.f32.mrb[0].mxu0
      %v1670 = vadd.f32 0.0, %v1669
      %v1671 = vpop.f32.mrb[0].mxu0
      %1672 = vmatprep.mubr.f32.mxu0 0.0
      %1673 = vmatmul.mubr.f32.gmra.mrb[0].mxu0 %v1064
      %v1674 = vpop.f32.mrb[0].mxu0
      %v1675 = vadd.f32 0.0, %v1674
      %v1676 = vpop.f32.mrb[0].mxu0
      %1677 = vmatprep.mubr.f32.mxu0 0.0
      %1678 = vmatmul.mubr.f32.gmra.mrb[0].mxu0 %v1066
      %v1679 = vpop.f32.mrb[0].mxu0
      %v1680 = vadd.f32 0.0, %v1679
      %v1681 = vpop.f32.mrb[0].mxu0
      %1682 = vmatprep.mubr.f32.mxu0 0.0
      %1683 = vmatmul.mubr.f32.gmra.mrb[0].mxu0 %v1068
      %v1684 = vpop.f32.mrb[0].mxu0
      %v1685 = vadd.f32 0.0, %v1684
      %v1686 = vpop.f32.mrb[0].mxu0
      %1687 = vmatprep.mubr.f32.mxu0 0.0
      %1688 = vmatmul.mubr.f32.gmra.mrb[0].mxu0 %v1070
      %v1689 = vpop.f32.mrb[0].mxu0
      %v1690 = vadd.f32 0.0, %v1689
      %v1691 = vpop.f32.mrb[0].mxu0
      %1692 = vmatprep.mubr.f32.mxu0 0.0
      %1693 = vmatmul.mubr.f32.gmra.mrb[0].mxu0 %v1072
      %v1694 = vpop.f32.mrb[0].mxu0
      %v1695 = vadd.f32 0.0, %v1694
      %v1696 = vpop.f32.mrb[0].mxu0
      %1697 = vmatprep.mubr.f32.mxu0 0.0
      %1698 = vmatmul.mubr.f32.gmra.mrb[0].mxu0 %v1074
      %v1699 = vpop.f32.mrb[0].mxu0
      %v1700 = vadd.f32 0.0, %v1699
      %v1701 = vpop.f32.mrb[0].mxu0
      %1702 = vmatprep.mubr.f32.mxu0 0.0
      %1703 = vmatmul.mubr.f32.gmra.mrb[0].mxu0 %v1076
      %v1704 = vpop.f32.mrb[0].mxu0
      %v1705 = vadd.f32 0.0, %v1704
      %v1706 = vpop.f32.mrb[0].mxu0
      %1707 = vmatprep.mubr.f32.mxu0 0.0
      %1708 = vmatmul.mubr.f32.gmra.mrb[0].mxu0 %v1078
      %v1709 = vpop.f32.mrb[0].mxu0
      %v1710 = vadd.f32 0.0, %v1709
      %v1711 = vpop.f32.mrb[0].mxu0
      %1712 = vmatprep.mubr.f32.mxu0 0.0
      %1713 = vmatmul.mubr.f32.gmra.mrb[0].mxu0 %v1080
      %v1714 = vpop.f32.mrb[0].mxu0
      %v1715 = vadd.f32 0.0, %v1714
      %v1716 = vpop.f32.mrb[0].mxu0
      %1717 = vmatprep.mubr.f32.mxu0 0.0
      %1718 = vmatmul.mubr.f32.gmra.mrb[0].mxu0 %v1082
      %v1719 = vpop.f32.mrb[0].mxu0
      %v1720 = vadd.f32 0.0, %v1719
      %v1721 = vpop.f32.mrb[0].mxu0
      %1722 = vmatprep.mubr.f32.mxu0 0.0
      %1723 = vmatmul.mubr.f32.gmra.mrb[0].mxu0 %v1084
      %v1724 = vpop.f32.mrb[0].mxu0
      %v1725 = vadd.f32 0.0, %v1724
      %v1726 = vpop.f32.mrb[0].mxu0
      %1727 = vmatprep.mubr.f32.mxu0 0.0
      %1728 = vmatmul.mubr.f32.gmra.mrb[0].mxu0 %v1086
      %v1729 = vpop.f32.mrb[0].mxu0
      %v1730 = vadd.f32 0.0, %v1729
      %v1731 = vpop.f32.mrb[0].mxu0
      %1732 = vmatprep.mubr.f32.mxu0 0.0
      %1733 = vmatmul.mubr.f32.gmra.mrb[0].mxu0 %v1088
      %v1734 = vpop.f32.mrb[0].mxu0
      %v1735 = vadd.f32 0.0, %v1734
      %v1736 = vpop.f32.mrb[0].mxu0
      %1737 = vmatprep.mubr.f32.mxu0 0.0
      %1738 = vmatmul.mubr.f32.gmra.mrb[0].mxu0 %v1599
      %v1739 = vpop.f32.mrb[0].mxu0
      %v1740 = vadd.f32 0.0, %v1739
      %v1741 = vpop.f32.mrb[0].mxu0
      %1742 = vmatprep.mubr.f32.mxu0 0.0
      %1743 = vmatmul.mubr.f32.gmra.mrb[0].mxu0 %v1601
      %v1744 = vpop.f32.mrb[0].mxu0
      %v1745 = vadd.f32 0.0, %v1744
      %v1746 = vpop.f32.mrb[0].mxu0
      %1747 = vdwg.mxu0
      %v1748 = vadd.f32 %v1576, %v1670
      %v1749 = vadd.f32 %v1577, %v1675
      %v1750 = vadd.f32 %v1578, %v1680
      %v1751 = vadd.f32 %v1579, %v1685
      %v1752 = vadd.f32 %v1580, %v1690
      %v1753 = vadd.f32 %v1581, %v1695
      %v1754 = vadd.f32 %v1582, %v1700
      %v1755 = vadd.f32 %v1583, %v1705
      %v1756 = vadd.f32 %v1584, %v1710
      %v1757 = vadd.f32 %v1585, %v1715
      %v1758 = vadd.f32 %v1586, %v1720
      %v1759 = vadd.f32 %v1587, %v1725
      %v1760 = vadd.f32 %v1588, %v1730
      %v1761 = vadd.f32 %v1589, %v1735
      %v1762 = vadd.f32 %v1590, %v1740
      %v1763 = vadd.f32 %v1591, %v1745
      %s1764 = scalar_lea.vmem %s3, 48
      %v1765 = vld [vmem:[%s1764] sm:$0xff]
      %v1767 = vsel %vm660, %v589, 0
      %v1769 = vsel %vm660, %v559, 0
      %1771 = vmatprep.subr.mxu0 0.0
      %1772 = vmatpush1.msra.mxu0 %v1765
      %1773 = vmatprep.subr.mxu0 0.0
      %1774 = vmatpush1.msra.mxu0 0.0
      %1775 = vmatprep.subr.mxu0 0.0
      %1776 = vmatpush1.msra.mxu0 0.0
      %1777 = vmatprep.subr.mxu0 0.0
      %1778 = vmatpush1.msra.mxu0 0.0
      %1779 = vmatprep.subr.mxu0 0.0
      %1780 = vmatpush1.msra.mxu0 0.0
      %1781 = vmatprep.subr.mxu0 0.0
      %1782 = vmatpush1.msra.mxu0 0.0
      %1783 = vmatprep.subr.mxu0 0.0
      %1784 = vmatpush1.msra.mxu0 0.0
      %1785 = vmatprep.subr.mxu0 0.0
      %1786 = vmatpush1.msra.mxu0 0.0
      %1787 = vmatprep.subr.mxu0 0.0
      %1788 = vmatpush1.msra.mxu0 0.0
      %1789 = vmatprep.subr.mxu0 0.0
      %1790 = vmatpush1.msra.mxu0 0.0
      %1791 = vmatprep.subr.mxu0 0.0
      %1792 = vmatpush1.msra.mxu0 0.0
      %1793 = vmatprep.subr.mxu0 0.0
      %1794 = vmatpush1.msra.mxu0 0.0
      %1795 = vmatprep.subr.mxu0 0.0
      %1796 = vmatpush1.msra.mxu0 0.0
      %1797 = vmatprep.subr.mxu0 0.0
      %1798 = vmatpush1.msra.mxu0 0.0
      %1799 = vmatprep.subr.mxu0 0.0
      %1800 = vmatpush1.msra.mxu0 0.0
      %1801 = vmatprep.subr.mxu0 0.0
      %1802 = vmatpush1.msra.mxu0 0.0
      %1803 = vmatprep.subr.mxu0 0.0
      %1804 = vmatpush1.msra.mxu0 0.0
      %1805 = vmatprep.subr.mxu0 0.0
      %1806 = vmatpush1.msra.mxu0 0.0
      %1807 = vmatprep.subr.mxu0 0.0
      %1808 = vmatpush1.msra.mxu0 0.0
      %1809 = vmatprep.subr.mxu0 0.0
      %1810 = vmatpush1.msra.mxu0 0.0
      %1811 = vmatprep.subr.mxu0 0.0
      %1812 = vmatpush1.msra.mxu0 0.0
      %1813 = vmatprep.subr.mxu0 0.0
      %1814 = vmatpush1.msra.mxu0 0.0
      %1815 = vmatprep.subr.mxu0 0.0
      %1816 = vmatpush1.msra.mxu0 0.0
      %1817 = vmatprep.subr.mxu0 0.0
      %1818 = vmatpush1.msra.mxu0 0.0
      %1819 = vmatprep.subr.mxu0 0.0
      %1820 = vmatpush1.msra.mxu0 0.0
      %1821 = vmatprep.subr.mxu0 0.0
      %1822 = vmatpush1.msra.mxu0 0.0
      %1823 = vmatprep.subr.mxu0 0.0
      %1824 = vmatpush1.msra.mxu0 0.0
      %1825 = vmatprep.subr.mxu0 0.0
      %1826 = vmatpush1.msra.mxu0 0.0
      %1827 = vmatprep.subr.mxu0 0.0
      %1828 = vmatpush1.msra.mxu0 0.0
      %1829 = vmatprep.subr.mxu0 0.0
      %1830 = vmatpush1.msra.mxu0 0.0
      %1831 = vmatprep.subr.mxu0 0.0
      %1832 = vmatpush1.msra.mxu0 0.0
      %1833 = vmatprep.subr.mxu0 0.0
      %1834 = vmatpush1.msra.mxu0 0.0
      %1835 = vmatprep.mubr.f32.mxu0 0.0
      %1836 = vmatmul.mubr.f32.gmra.mrb[0].mxu0 %v846
      %v1837 = vpop.f32.mrb[0].mxu0
      %v1838 = vadd.f32 0.0, %v1837
      %v1839 = vpop.f32.mrb[0].mxu0
      %1840 = vmatprep.mubr.f32.mxu0 0.0
      %1841 = vmatmul.mubr.f32.gmra.mrb[0].mxu0 %v848
      %v1842 = vpop.f32.mrb[0].mxu0
      %v1843 = vadd.f32 0.0, %v1842
      %v1844 = vpop.f32.mrb[0].mxu0
      %1845 = vmatprep.mubr.f32.mxu0 0.0
      %1846 = vmatmul.mubr.f32.gmra.mrb[0].mxu0 %v850
      %v1847 = vpop.f32.mrb[0].mxu0
      %v1848 = vadd.f32 0.0, %v1847
      %v1849 = vpop.f32.mrb[0].mxu0
      %1850 = vmatprep.mubr.f32.mxu0 0.0
      %1851 = vmatmul.mubr.f32.gmra.mrb[0].mxu0 %v852
      %v1852 = vpop.f32.mrb[0].mxu0
      %v1853 = vadd.f32 0.0, %v1852
      %v1854 = vpop.f32.mrb[0].mxu0
      %1855 = vmatprep.mubr.f32.mxu0 0.0
      %1856 = vmatmul.mubr.f32.gmra.mrb[0].mxu0 %v854
      %v1857 = vpop.f32.mrb[0].mxu0
      %v1858 = vadd.f32 0.0, %v1857
      %v1859 = vpop.f32.mrb[0].mxu0
      %1860 = vmatprep.mubr.f32.mxu0 0.0
      %1861 = vmatmul.mubr.f32.gmra.mrb[0].mxu0 %v856
      %v1862 = vpop.f32.mrb[0].mxu0
      %v1863 = vadd.f32 0.0, %v1862
      %v1864 = vpop.f32.mrb[0].mxu0
      %1865 = vmatprep.mubr.f32.mxu0 0.0
      %1866 = vmatmul.mubr.f32.gmra.mrb[0].mxu0 %v858
      %v1867 = vpop.f32.mrb[0].mxu0
      %v1868 = vadd.f32 0.0, %v1867
      %v1869 = vpop.f32.mrb[0].mxu0
      %1870 = vmatprep.mubr.f32.mxu0 0.0
      %1871 = vmatmul.mubr.f32.gmra.mrb[0].mxu0 %v860
      %v1872 = vpop.f32.mrb[0].mxu0
      %v1873 = vadd.f32 0.0, %v1872
      %v1874 = vpop.f32.mrb[0].mxu0
      %1875 = vmatprep.mubr.f32.mxu0 0.0
      %1876 = vmatmul.mubr.f32.gmra.mrb[0].mxu0 %v862
      %v1877 = vpop.f32.mrb[0].mxu0
      %v1878 = vadd.f32 0.0, %v1877
      %v1879 = vpop.f32.mrb[0].mxu0
      %1880 = vmatprep.mubr.f32.mxu0 0.0
      %1881 = vmatmul.mubr.f32.gmra.mrb[0].mxu0 %v864
      %v1882 = vpop.f32.mrb[0].mxu0
      %v1883 = vadd.f32 0.0, %v1882
      %v1884 = vpop.f32.mrb[0].mxu0
      %1885 = vmatprep.mubr.f32.mxu0 0.0
      %1886 = vmatmul.mubr.f32.gmra.mrb[0].mxu0 %v866
      %v1887 = vpop.f32.mrb[0].mxu0
      %v1888 = vadd.f32 0.0, %v1887
      %v1889 = vpop.f32.mrb[0].mxu0
      %1890 = vmatprep.mubr.f32.mxu0 0.0
      %1891 = vmatmul.mubr.f32.gmra.mrb[0].mxu0 %v868
      %v1892 = vpop.f32.mrb[0].mxu0
      %v1893 = vadd.f32 0.0, %v1892
      %v1894 = vpop.f32.mrb[0].mxu0
      %1895 = vmatprep.mubr.f32.mxu0 0.0
      %1896 = vmatmul.mubr.f32.gmra.mrb[0].mxu0 %v1254
      %v1897 = vpop.f32.mrb[0].mxu0
      %v1898 = vadd.f32 0.0, %v1897
      %v1899 = vpop.f32.mrb[0].mxu0
      %1900 = vmatprep.mubr.f32.mxu0 0.0
      %1901 = vmatmul.mubr.f32.gmra.mrb[0].mxu0 %v1256
      %v1902 = vpop.f32.mrb[0].mxu0
      %v1903 = vadd.f32 0.0, %v1902
      %v1904 = vpop.f32.mrb[0].mxu0
      %1905 = vmatprep.mubr.f32.mxu0 0.0
      %1906 = vmatmul.mubr.f32.gmra.mrb[0].mxu0 %v1767
      %v1907 = vpop.f32.mrb[0].mxu0
      %v1908 = vadd.f32 0.0, %v1907
      %v1909 = vpop.f32.mrb[0].mxu0
      %1910 = vmatprep.mubr.f32.mxu0 0.0
      %1911 = vmatmul.mubr.f32.gmra.mrb[0].mxu0 %v1769
      %v1912 = vpop.f32.mrb[0].mxu0
      %v1913 = vadd.f32 0.0, %v1912
      %v1914 = vpop.f32.mrb[0].mxu0
      %1915 = vdwg.mxu0
      %v1916 = vadd.f32 %v1748, %v1838
      %v1917 = vadd.f32 %v1749, %v1843
      %v1918 = vadd.f32 %v1750, %v1848
      %v1919 = vadd.f32 %v1751, %v1853
      %v1920 = vadd.f32 %v1752, %v1858
      %v1921 = vadd.f32 %v1753, %v1863
      %v1922 = vadd.f32 %v1754, %v1868
      %v1923 = vadd.f32 %v1755, %v1873
      %v1924 = vadd.f32 %v1756, %v1878
      %v1925 = vadd.f32 %v1757, %v1883
      %v1926 = vadd.f32 %v1758, %v1888
      %v1927 = vadd.f32 %v1759, %v1893
      %v1928 = vadd.f32 %v1760, %v1898
      %v1929 = vadd.f32 %v1761, %v1903
      %v1930 = vadd.f32 %v1762, %v1908
      %v1931 = vadd.f32 %v1763, %v1913
      %v1933 = vrot.slane %v589, 1
      %v1934 = vrot.slane %v559, 1
      %v1935 = vsel %vm617, %v1933, %v1934
      %v1936 = vrot.slane %v599, 1
      %v1937 = vsel %vm617, %v1934, %v1936
      %s1938 = scalar_lea.vmem %s3, 56
      %v1939 = vld [vmem:[%s1938] sm:$0xff]
      %v1940 = vsel %vm660, %v1935, 0
      %v1942 = vsel %vm660, %v1937, 0
      %1944 = vmatprep.subr.mxu0 0.0
      %1945 = vmatpush1.msra.mxu0 %v1939
      %1946 = vmatprep.subr.mxu0 0.0
      %1947 = vmatpush1.msra.mxu0 0.0
      %1948 = vmatprep.subr.mxu0 0.0
      %1949 = vmatpush1.msra.mxu0 0.0
      %1950 = vmatprep.subr.mxu0 0.0
      %1951 = vmatpush1.msra.mxu0 0.0
      %1952 = vmatprep.subr.mxu0 0.0
      %1953 = vmatpush1.msra.mxu0 0.0
      %1954 = vmatprep.subr.mxu0 0.0
      %1955 = vmatpush1.msra.mxu0 0.0
      %1956 = vmatprep.subr.mxu0 0.0
      %1957 = vmatpush1.msra.mxu0 0.0
      %1958 = vmatprep.subr.mxu0 0.0
      %1959 = vmatpush1.msra.mxu0 0.0
      %1960 = vmatprep.subr.mxu0 0.0
      %1961 = vmatpush1.msra.mxu0 0.0
      %1962 = vmatprep.subr.mxu0 0.0
      %1963 = vmatpush1.msra.mxu0 0.0
      %1964 = vmatprep.subr.mxu0 0.0
      %1965 = vmatpush1.msra.mxu0 0.0
      %1966 = vmatprep.subr.mxu0 0.0
      %1967 = vmatpush1.msra.mxu0 0.0
      %1968 = vmatprep.subr.mxu0 0.0
      %1969 = vmatpush1.msra.mxu0 0.0
      %1970 = vmatprep.subr.mxu0 0.0
      %1971 = vmatpush1.msra.mxu0 0.0
      %1972 = vmatprep.subr.mxu0 0.0
      %1973 = vmatpush1.msra.mxu0 0.0
      %1974 = vmatprep.subr.mxu0 0.0
      %1975 = vmatpush1.msra.mxu0 0.0
      %1976 = vmatprep.subr.mxu0 0.0
      %1977 = vmatpush1.msra.mxu0 0.0
      %1978 = vmatprep.subr.mxu0 0.0
      %1979 = vmatpush1.msra.mxu0 0.0
      %1980 = vmatprep.subr.mxu0 0.0
      %1981 = vmatpush1.msra.mxu0 0.0
      %1982 = vmatprep.subr.mxu0 0.0
      %1983 = vmatpush1.msra.mxu0 0.0
      %1984 = vmatprep.subr.mxu0 0.0
      %1985 = vmatpush1.msra.mxu0 0.0
      %1986 = vmatprep.subr.mxu0 0.0
      %1987 = vmatpush1.msra.mxu0 0.0
      %1988 = vmatprep.subr.mxu0 0.0
      %1989 = vmatpush1.msra.mxu0 0.0
      %1990 = vmatprep.subr.mxu0 0.0
      %1991 = vmatpush1.msra.mxu0 0.0
      %1992 = vmatprep.subr.mxu0 0.0
      %1993 = vmatpush1.msra.mxu0 0.0
      %1994 = vmatprep.subr.mxu0 0.0
      %1995 = vmatpush1.msra.mxu0 0.0
      %1996 = vmatprep.subr.mxu0 0.0
      %1997 = vmatpush1.msra.mxu0 0.0
      %1998 = vmatprep.subr.mxu0 0.0
      %1999 = vmatpush1.msra.mxu0 0.0
      %2000 = vmatprep.subr.mxu0 0.0
      %2001 = vmatpush1.msra.mxu0 0.0
      %2002 = vmatprep.subr.mxu0 0.0
      %2003 = vmatpush1.msra.mxu0 0.0
      %2004 = vmatprep.subr.mxu0 0.0
      %2005 = vmatpush1.msra.mxu0 0.0
      %2006 = vmatprep.subr.mxu0 0.0
      %2007 = vmatpush1.msra.mxu0 0.0
      %2008 = vmatprep.mubr.f32.mxu0 0.0
      %2009 = vmatmul.mubr.f32.gmra.mrb[0].mxu0 %v669
      %v2010 = vpop.f32.mrb[0].mxu0
      %v2011 = vadd.f32 0.0, %v2010
      %v2012 = vpop.f32.mrb[0].mxu0
      %2013 = vmatprep.mubr.f32.mxu0 0.0
      %2014 = vmatmul.mubr.f32.gmra.mrb[0].mxu0 %v671
      %v2015 = vpop.f32.mrb[0].mxu0
      %v2016 = vadd.f32 0.0, %v2015
      %v2017 = vpop.f32.mrb[0].mxu0
      %2018 = vmatprep.mubr.f32.mxu0 0.0
      %2019 = vmatmul.mubr.f32.gmra.mrb[0].mxu0 %v673
      %v2020 = vpop.f32.mrb[0].mxu0
      %v2021 = vadd.f32 0.0, %v2020
      %v2022 = vpop.f32.mrb[0].mxu0
      %2023 = vmatprep.mubr.f32.mxu0 0.0
      %2024 = vmatmul.mubr.f32.gmra.mrb[0].mxu0 %v675
      %v2025 = vpop.f32.mrb[0].mxu0
      %v2026 = vadd.f32 0.0, %v2025
      %v2027 = vpop.f32.mrb[0].mxu0
      %2028 = vmatprep.mubr.f32.mxu0 0.0
      %2029 = vmatmul.mubr.f32.gmra.mrb[0].mxu0 %v677
      %v2030 = vpop.f32.mrb[0].mxu0
      %v2031 = vadd.f32 0.0, %v2030
      %v2032 = vpop.f32.mrb[0].mxu0
      %2033 = vmatprep.mubr.f32.mxu0 0.0
      %2034 = vmatmul.mubr.f32.gmra.mrb[0].mxu0 %v679
      %v2035 = vpop.f32.mrb[0].mxu0
      %v2036 = vadd.f32 0.0, %v2035
      %v2037 = vpop.f32.mrb[0].mxu0
      %2038 = vmatprep.mubr.f32.mxu0 0.0
      %2039 = vmatmul.mubr.f32.gmra.mrb[0].mxu0 %v681
      %v2040 = vpop.f32.mrb[0].mxu0
      %v2041 = vadd.f32 0.0, %v2040
      %v2042 = vpop.f32.mrb[0].mxu0
      %2043 = vmatprep.mubr.f32.mxu0 0.0
      %2044 = vmatmul.mubr.f32.gmra.mrb[0].mxu0 %v683
      %v2045 = vpop.f32.mrb[0].mxu0
      %v2046 = vadd.f32 0.0, %v2045
      %v2047 = vpop.f32.mrb[0].mxu0
      %2048 = vmatprep.mubr.f32.mxu0 0.0
      %2049 = vmatmul.mubr.f32.gmra.mrb[0].mxu0 %v685
      %v2050 = vpop.f32.mrb[0].mxu0
      %v2051 = vadd.f32 0.0, %v2050
      %v2052 = vpop.f32.mrb[0].mxu0
      %2053 = vmatprep.mubr.f32.mxu0 0.0
      %2054 = vmatmul.mubr.f32.gmra.mrb[0].mxu0 %v687
      %v2055 = vpop.f32.mrb[0].mxu0
      %v2056 = vadd.f32 0.0, %v2055
      %v2057 = vpop.f32.mrb[0].mxu0
      %2058 = vmatprep.mubr.f32.mxu0 0.0
      %2059 = vmatmul.mubr.f32.gmra.mrb[0].mxu0 %v689
      %v2060 = vpop.f32.mrb[0].mxu0
      %v2061 = vadd.f32 0.0, %v2060
      %v2062 = vpop.f32.mrb[0].mxu0
      %2063 = vmatprep.mubr.f32.mxu0 0.0
      %2064 = vmatmul.mubr.f32.gmra.mrb[0].mxu0 %v691
      %v2065 = vpop.f32.mrb[0].mxu0
      %v2066 = vadd.f32 0.0, %v2065
      %v2067 = vpop.f32.mrb[0].mxu0
      %2068 = vmatprep.mubr.f32.mxu0 0.0
      %2069 = vmatmul.mubr.f32.gmra.mrb[0].mxu0 %v1427
      %v2070 = vpop.f32.mrb[0].mxu0
      %v2071 = vadd.f32 0.0, %v2070
      %v2072 = vpop.f32.mrb[0].mxu0
      %2073 = vmatprep.mubr.f32.mxu0 0.0
      %2074 = vmatmul.mubr.f32.gmra.mrb[0].mxu0 %v1429
      %v2075 = vpop.f32.mrb[0].mxu0
      %v2076 = vadd.f32 0.0, %v2075
      %v2077 = vpop.f32.mrb[0].mxu0
      %2078 = vmatprep.mubr.f32.mxu0 0.0
      %2079 = vmatmul.mubr.f32.gmra.mrb[0].mxu0 %v1940
      %v2080 = vpop.f32.mrb[0].mxu0
      %v2081 = vadd.f32 0.0, %v2080
      %v2082 = vpop.f32.mrb[0].mxu0
      %2083 = vmatprep.mubr.f32.mxu0 0.0
      %2084 = vmatmul.mubr.f32.gmra.mrb[0].mxu0 %v1942
      %v2085 = vpop.f32.mrb[0].mxu0
      %v2086 = vadd.f32 0.0, %v2085
      %v2087 = vpop.f32.mrb[0].mxu0
      %2088 = vdwg.mxu0
      %v2089 = vadd.f32 %v1916, %v2011
      %v2090 = vadd.f32 %v1917, %v2016
      %v2091 = vadd.f32 %v1918, %v2021
      %v2092 = vadd.f32 %v1919, %v2026
      %v2093 = vadd.f32 %v1920, %v2031
      %v2094 = vadd.f32 %v1921, %v2036
      %v2095 = vadd.f32 %v1922, %v2041
      %v2096 = vadd.f32 %v1923, %v2046
      %v2097 = vadd.f32 %v1924, %v2051
      %v2098 = vadd.f32 %v1925, %v2056
      %v2099 = vadd.f32 %v1926, %v2061
      %v2100 = vadd.f32 %v1927, %v2066
      %v2101 = vadd.f32 %v1928, %v2071
      %v2102 = vadd.f32 %v1929, %v2076
      %v2103 = vadd.f32 %v1930, %v2081
      %v2104 = vadd.f32 %v1931, %v2086
      %v2105 = vrot.slane %v589, 2
      %v2106 = vrot.slane %v559, 2
      %v2107 = vsel %vm1015, %v2105, %v2106
      %v2108 = vrot.slane %v599, 2
      %v2109 = vsel %vm1015, %v2106, %v2108
      %s2110 = scalar_lea.vmem %s3, 64
      %v2111 = vld [vmem:[%s2110] sm:$0xff]
      %v2112 = vsel %vm660, %v2107, 0
      %v2114 = vsel %vm660, %v2109, 0
      %2116 = vmatprep.subr.mxu0 0.0
      %2117 = vmatpush1.msra.mxu0 %v2111
      %2118 = vmatprep.subr.mxu0 0.0
      %2119 = vmatpush1.msra.mxu0 0.0
      %2120 = vmatprep.subr.mxu0 0.0
      %2121 = vmatpush1.msra.mxu0 0.0
      %2122 = vmatprep.subr.mxu0 0.0
      %2123 = vmatpush1.msra.mxu0 0.0
      %2124 = vmatprep.subr.mxu0 0.0
      %2125 = vmatpush1.msra.mxu0 0.0
      %2126 = vmatprep.subr.mxu0 0.0
      %2127 = vmatpush1.msra.mxu0 0.0
      %2128 = vmatprep.subr.mxu0 0.0
      %2129 = vmatpush1.msra.mxu0 0.0
      %2130 = vmatprep.subr.mxu0 0.0
      %2131 = vmatpush1.msra.mxu0 0.0
      %2132 = vmatprep.subr.mxu0 0.0
      %2133 = vmatpush1.msra.mxu0 0.0
      %2134 = vmatprep.subr.mxu0 0.0
      %2135 = vmatpush1.msra.mxu0 0.0
      %2136 = vmatprep.subr.mxu0 0.0
      %2137 = vmatpush1.msra.mxu0 0.0
      %2138 = vmatprep.subr.mxu0 0.0
      %2139 = vmatpush1.msra.mxu0 0.0
      %2140 = vmatprep.subr.mxu0 0.0
      %2141 = vmatpush1.msra.mxu0 0.0
      %2142 = vmatprep.subr.mxu0 0.0
      %2143 = vmatpush1.msra.mxu0 0.0
      %2144 = vmatprep.subr.mxu0 0.0
      %2145 = vmatpush1.msra.mxu0 0.0
      %2146 = vmatprep.subr.mxu0 0.0
      %2147 = vmatpush1.msra.mxu0 0.0
      %2148 = vmatprep.subr.mxu0 0.0
      %2149 = vmatpush1.msra.mxu0 0.0
      %2150 = vmatprep.subr.mxu0 0.0
      %2151 = vmatpush1.msra.mxu0 0.0
      %2152 = vmatprep.subr.mxu0 0.0
      %2153 = vmatpush1.msra.mxu0 0.0
      %2154 = vmatprep.subr.mxu0 0.0
      %2155 = vmatpush1.msra.mxu0 0.0
      %2156 = vmatprep.subr.mxu0 0.0
      %2157 = vmatpush1.msra.mxu0 0.0
      %2158 = vmatprep.subr.mxu0 0.0
      %2159 = vmatpush1.msra.mxu0 0.0
      %2160 = vmatprep.subr.mxu0 0.0
      %2161 = vmatpush1.msra.mxu0 0.0
      %2162 = vmatprep.subr.mxu0 0.0
      %2163 = vmatpush1.msra.mxu0 0.0
      %2164 = vmatprep.subr.mxu0 0.0
      %2165 = vmatpush1.msra.mxu0 0.0
      %2166 = vmatprep.subr.mxu0 0.0
      %2167 = vmatpush1.msra.mxu0 0.0
      %2168 = vmatprep.subr.mxu0 0.0
      %2169 = vmatpush1.msra.mxu0 0.0
      %2170 = vmatprep.subr.mxu0 0.0
      %2171 = vmatpush1.msra.mxu0 0.0
      %2172 = vmatprep.subr.mxu0 0.0
      %2173 = vmatpush1.msra.mxu0 0.0
      %2174 = vmatprep.subr.mxu0 0.0
      %2175 = vmatpush1.msra.mxu0 0.0
      %2176 = vmatprep.subr.mxu0 0.0
      %2177 = vmatpush1.msra.mxu0 0.0
      %2178 = vmatprep.subr.mxu0 0.0
      %2179 = vmatpush1.msra.mxu0 0.0
      %2180 = vmatprep.mubr.f32.mxu0 0.0
      %2181 = vmatmul.mubr.f32.gmra.mrb[0].mxu0 %v1066
      %v2182 = vpop.f32.mrb[0].mxu0
      %v2183 = vadd.f32 0.0, %v2182
      %v2184 = vpop.f32.mrb[0].mxu0
      %2185 = vmatprep.mubr.f32.mxu0 0.0
      %2186 = vmatmul.mubr.f32.gmra.mrb[0].mxu0 %v1068
      %v2187 = vpop.f32.mrb[0].mxu0
      %v2188 = vadd.f32 0.0, %v2187
      %v2189 = vpop.f32.mrb[0].mxu0
      %2190 = vmatprep.mubr.f32.mxu0 0.0
      %2191 = vmatmul.mubr.f32.gmra.mrb[0].mxu0 %v1070
      %v2192 = vpop.f32.mrb[0].mxu0
      %v2193 = vadd.f32 0.0, %v2192
      %v2194 = vpop.f32.mrb[0].mxu0
      %2195 = vmatprep.mubr.f32.mxu0 0.0
      %2196 = vmatmul.mubr.f32.gmra.mrb[0].mxu0 %v1072
      %v2197 = vpop.f32.mrb[0].mxu0
      %v2198 = vadd.f32 0.0, %v2197
      %v2199 = vpop.f32.mrb[0].mxu0
      %2200 = vmatprep.mubr.f32.mxu0 0.0
      %2201 = vmatmul.mubr.f32.gmra.mrb[0].mxu0 %v1074
      %v2202 = vpop.f32.mrb[0].mxu0
      %v2203 = vadd.f32 0.0, %v2202
      %v2204 = vpop.f32.mrb[0].mxu0
      %2205 = vmatprep.mubr.f32.mxu0 0.0
      %2206 = vmatmul.mubr.f32.gmra.mrb[0].mxu0 %v1076
      %v2207 = vpop.f32.mrb[0].mxu0
      %v2208 = vadd.f32 0.0, %v2207
      %v2209 = vpop.f32.mrb[0].mxu0
      %2210 = vmatprep.mubr.f32.mxu0 0.0
      %2211 = vmatmul.mubr.f32.gmra.mrb[0].mxu0 %v1078
      %v2212 = vpop.f32.mrb[0].mxu0
      %v2213 = vadd.f32 0.0, %v2212
      %v2214 = vpop.f32.mrb[0].mxu0
      %2215 = vmatprep.mubr.f32.mxu0 0.0
      %2216 = vmatmul.mubr.f32.gmra.mrb[0].mxu0 %v1080
      %v2217 = vpop.f32.mrb[0].mxu0
      %v2218 = vadd.f32 0.0, %v2217
      %v2219 = vpop.f32.mrb[0].mxu0
      %2220 = vmatprep.mubr.f32.mxu0 0.0
      %2221 = vmatmul.mubr.f32.gmra.mrb[0].mxu0 %v1082
      %v2222 = vpop.f32.mrb[0].mxu0
      %v2223 = vadd.f32 0.0, %v2222
      %v2224 = vpop.f32.mrb[0].mxu0
      %2225 = vmatprep.mubr.f32.mxu0 0.0
      %2226 = vmatmul.mubr.f32.gmra.mrb[0].mxu0 %v1084
      %v2227 = vpop.f32.mrb[0].mxu0
      %v2228 = vadd.f32 0.0, %v2227
      %v2229 = vpop.f32.mrb[0].mxu0
      %2230 = vmatprep.mubr.f32.mxu0 0.0
      %2231 = vmatmul.mubr.f32.gmra.mrb[0].mxu0 %v1086
      %v2232 = vpop.f32.mrb[0].mxu0
      %v2233 = vadd.f32 0.0, %v2232
      %v2234 = vpop.f32.mrb[0].mxu0
      %2235 = vmatprep.mubr.f32.mxu0 0.0
      %2236 = vmatmul.mubr.f32.gmra.mrb[0].mxu0 %v1088
      %v2237 = vpop.f32.mrb[0].mxu0
      %v2238 = vadd.f32 0.0, %v2237
      %v2239 = vpop.f32.mrb[0].mxu0
      %2240 = vmatprep.mubr.f32.mxu0 0.0
      %2241 = vmatmul.mubr.f32.gmra.mrb[0].mxu0 %v1599
      %v2242 = vpop.f32.mrb[0].mxu0
      %v2243 = vadd.f32 0.0, %v2242
      %v2244 = vpop.f32.mrb[0].mxu0
      %2245 = vmatprep.mubr.f32.mxu0 0.0
      %2246 = vmatmul.mubr.f32.gmra.mrb[0].mxu0 %v1601
      %v2247 = vpop.f32.mrb[0].mxu0
      %v2248 = vadd.f32 0.0, %v2247
      %v2249 = vpop.f32.mrb[0].mxu0
      %2250 = vmatprep.mubr.f32.mxu0 0.0
      %2251 = vmatmul.mubr.f32.gmra.mrb[0].mxu0 %v2112
      %v2252 = vpop.f32.mrb[0].mxu0
      %v2253 = vadd.f32 0.0, %v2252
      %v2254 = vpop.f32.mrb[0].mxu0
      %2255 = vmatprep.mubr.f32.mxu0 0.0
      %2256 = vmatmul.mubr.f32.gmra.mrb[0].mxu0 %v2114
      %v2257 = vpop.f32.mrb[0].mxu0
      %v2258 = vadd.f32 0.0, %v2257
      %v2259 = vpop.f32.mrb[0].mxu0
      %2260 = vdwg.mxu0
      %v2261 = vadd.f32 %v2089, %v2183
      %v2262 = vadd.f32 %v2090, %v2188
      %v2263 = vadd.f32 %v2091, %v2193
      %v2264 = vadd.f32 %v2092, %v2198
      %v2265 = vadd.f32 %v2093, %v2203
      %v2266 = vadd.f32 %v2094, %v2208
      %v2267 = vadd.f32 %v2095, %v2213
      %v2268 = vadd.f32 %v2096, %v2218
      %v2269 = vadd.f32 %v2097, %v2223
      %v2270 = vadd.f32 %v2098, %v2228
      %v2271 = vadd.f32 %v2099, %v2233
      %v2272 = vadd.f32 %v2100, %v2238
      %v2273 = vadd.f32 %v2101, %v2243
      %v2274 = vadd.f32 %v2102, %v2248
      %v2275 = vadd.f32 %v2103, %v2253
      %v2276 = vadd.f32 %v2104, %v2258
      %2277 = vst.msk [vmem:[%s384] sm:$0xff] %vm660, %v2261
      %2278 = vst.msk [vmem:[%s384 + $0x8] sm:$0xff] %vm660, %v2262
      %2279 = vst.msk [vmem:[%s384 + $0x10] sm:$0xff] %vm660, %v2263
      %2280 = vst.msk [vmem:[%s384 + $0x18] sm:$0xff] %vm660, %v2264
      %2281 = vst.msk [vmem:[%s384 + $0x20] sm:$0xff] %vm660, %v2265
      %2282 = vst.msk [vmem:[%s384 + $0x28] sm:$0xff] %vm660, %v2266
      %2283 = vst.msk [vmem:[%s384 + $0x30] sm:$0xff] %vm660, %v2267
      %2284 = vst.msk [vmem:[%s384 + $0x38] sm:$0xff] %vm660, %v2268
      %2285 = vst.msk [vmem:[%s384 + $0x40] sm:$0xff] %vm660, %v2269
      %2286 = vst.msk [vmem:[%s384 + $0x48] sm:$0xff] %vm660, %v2270
      %2287 = vst.msk [vmem:[%s384 + $0x50] sm:$0xff] %vm660, %v2271
      %2288 = vst.msk [vmem:[%s384 + $0x58] sm:$0xff] %vm660, %v2272
      %2289 = vst.msk [vmem:[%s384 + $0x60] sm:$0xff] %vm660, %v2273
      %2290 = vst.msk [vmem:[%s384 + $0x68] sm:$0xff] %vm660, %v2274
      %2291 = vst.msk [vmem:[%s384 + $0x70] sm:$0xff] %vm660, %v2275
      %2292 = vst.msk [vmem:[%s384 + $0x78] sm:$0xff] %vm660, %v2276
      %v2293 = vsel %vm660, %v2261, 0.0
      %v2294 = vsel %vm660, %v2262, 0.0
      %v2295 = vadd.f32 %v2293, %v2294
      %v2296 = vsel %vm660, %v2263, 0.0
      %v2297 = vadd.f32 %v2295, %v2296
      %v2298 = vsel %vm660, %v2264, 0.0
      %v2299 = vadd.f32 %v2297, %v2298
      %v2300 = vsel %vm660, %v2265, 0.0
      %v2301 = vadd.f32 %v2299, %v2300
      %v2302 = vsel %vm660, %v2266, 0.0
      %v2303 = vadd.f32 %v2301, %v2302
      %v2304 = vsel %vm660, %v2267, 0.0
      %v2305 = vadd.f32 %v2303, %v2304
      %v2306 = vsel %vm660, %v2268, 0.0
      %v2307 = vadd.f32 %v2305, %v2306
      %v2308 = vsel %vm660, %v2269, 0.0
      %v2309 = vadd.f32 %v2307, %v2308
      %v2310 = vsel %vm660, %v2270, 0.0
      %v2311 = vadd.f32 %v2309, %v2310
      %v2312 = vsel %vm660, %v2271, 0.0
      %v2313 = vadd.f32 %v2311, %v2312
      %v2314 = vsel %vm660, %v2272, 0.0
      %v2315 = vadd.f32 %v2313, %v2314
      %v2316 = vsel %vm660, %v2273, 0.0
      %v2317 = vadd.f32 %v2315, %v2316
      %v2318 = vsel %vm660, %v2274, 0.0
      %v2319 = vadd.f32 %v2317, %v2318
      %v2320 = vsel %vm660, %v2275, 0.0
      %v2321 = vadd.f32 %v2319, %v2320
      %v2322 = vsel %vm660, %v2276, 0.0
      %v2323 = vadd.f32 %v2321, %v2322
      %v2324 = vrot.slane %v2323, 4
      %v2325 = vadd.f32 %v2323, %v2324
      %v2326 = vrot.slane %v2325, 2
      %v2327 = vadd.f32 %v2325, %v2326
      %v2328 = vrot.slane %v2327, 1
      %v2329 = vadd.f32 %v2327, %v2328
      %v2330 = vmul.f32 %v2261, %v2261
      %v2331 = vmul.f32 %v2262, %v2262
      %v2332 = vmul.f32 %v2263, %v2263
      %v2333 = vmul.f32 %v2264, %v2264
      %v2334 = vmul.f32 %v2265, %v2265
      %v2335 = vmul.f32 %v2266, %v2266
      %v2336 = vmul.f32 %v2267, %v2267
      %v2337 = vmul.f32 %v2268, %v2268
      %v2338 = vmul.f32 %v2269, %v2269
      %v2339 = vmul.f32 %v2270, %v2270
      %v2340 = vmul.f32 %v2271, %v2271
      %v2341 = vmul.f32 %v2272, %v2272
      %v2342 = vmul.f32 %v2273, %v2273
      %v2343 = vmul.f32 %v2274, %v2274
      %v2344 = vmul.f32 %v2275, %v2275
      %v2345 = vmul.f32 %v2276, %v2276
      %v2346 = vsel %vm660, %v2330, 0.0
      %v2347 = vsel %vm660, %v2331, 0.0
      %v2348 = vadd.f32 %v2346, %v2347
      %v2349 = vsel %vm660, %v2332, 0.0
      %v2350 = vadd.f32 %v2348, %v2349
      %v2351 = vsel %vm660, %v2333, 0.0
      %v2352 = vadd.f32 %v2350, %v2351
      %v2353 = vsel %vm660, %v2334, 0.0
      %v2354 = vadd.f32 %v2352, %v2353
      %v2355 = vsel %vm660, %v2335, 0.0
      %v2356 = vadd.f32 %v2354, %v2355
      %v2357 = vsel %vm660, %v2336, 0.0
      %v2358 = vadd.f32 %v2356, %v2357
      %v2359 = vsel %vm660, %v2337, 0.0
      %v2360 = vadd.f32 %v2358, %v2359
      %v2361 = vsel %vm660, %v2338, 0.0
      %v2362 = vadd.f32 %v2360, %v2361
      %v2363 = vsel %vm660, %v2339, 0.0
      %v2364 = vadd.f32 %v2362, %v2363
      %v2365 = vsel %vm660, %v2340, 0.0
      %v2366 = vadd.f32 %v2364, %v2365
      %v2367 = vsel %vm660, %v2341, 0.0
      %v2368 = vadd.f32 %v2366, %v2367
      %v2369 = vsel %vm660, %v2342, 0.0
      %v2370 = vadd.f32 %v2368, %v2369
      %v2371 = vsel %vm660, %v2343, 0.0
      %v2372 = vadd.f32 %v2370, %v2371
      %v2373 = vsel %vm660, %v2344, 0.0
      %v2374 = vadd.f32 %v2372, %v2373
      %v2375 = vsel %vm660, %v2345, 0.0
      %v2376 = vadd.f32 %v2374, %v2375
      %v2377 = vrot.slane %v2376, 4
      %v2378 = vadd.f32 %v2376, %v2377
      %v2379 = vrot.slane %v2378, 2
      %v2380 = vadd.f32 %v2378, %v2379
      %v2381 = vrot.slane %v2380, 1
      %v2382 = vadd.f32 %v2380, %v2381
      %v2383 = vsel %vm529, %v2329, %v2382
      %vm2384 = vcmask 58368
      %2385 = vst.msk [vmem:[%s389] sm:$0x3] %vm2384, %v2383
      %s2386 = smul.u32 8, %s19
      %p2387 = scmp.lt.s32.totalorder %s2386, 31
      %s2388 = scalar_select %p2387, %s2386, 31
      %s2389 = smul.addr %s2388, 2
      %s2390 = smul.addr %s2389, 8
      %s2391 = scalar_lea.vmem %s6, %s2390
      %p2392 = scmp.lt.s32.totalorder %s19, 3
      %s2393 = scalar_select %p2392, %s19, 3
      %s2394 = smul.addr %s2393, 2
      %s2395 = scalar_lea.vmem %s7, %s2394
      // Predicated region
      $region45: #{bottleneck_decoder_forward.7} parent=43 // pred_check
        %p2396 = pneg %p190
      $region46: #{bottleneck_decoder_forward.7} parent=43 // pred_check_branch
        %2398 = sbr.rel (%p2396) target = $region48
      $region47: #{bottleneck_decoder_forward.7} parent=43 // pred_region
        %s2399 = smul.u32 8, %s19
      $region48: #{bottleneck_decoder_forward.7} parent=43 // pred_fallthru
        _
      // Predicated region
      $region49: #{bottleneck_decoder_forward.7} parent=43 // pred_check
        %p2400 = pneg %p216
      $region50: #{bottleneck_decoder_forward.7} parent=43 // pred_check_branch
        %2402 = sbr.rel (%p2400) target = $region52
      $region51: #{bottleneck_decoder_forward.7} parent=43 // pred_region
        _
      $region52: #{bottleneck_decoder_forward.7} parent=43 // pred_fallthru
        _
    $region44: #{bottleneck_decoder_forward.7} parent=5 // pred_fallthru
      _
    %p2403 = scmp.le.s32.totalorder 2, %s14
    // Predicated region
    $region53: #{bottleneck_decoder_forward.7} parent=5 // pred_check
      %p2404 = pneg %p2403
    $region54: #{bottleneck_decoder_forward.7} parent=5 // pred_check_branch
      %2406 = sbr.rel (%p2404) target = $region56
    $region55: #{bottleneck_decoder_forward.7} parent=5 // pred_region
      %s2407 = ssub.s32 %s14, 2
      // Predicated region
      $region57: #{bottleneck_decoder_forward.7} parent=55 // pred_check
        %p2408 = pneg %p196
      $region58: #{bottleneck_decoder_forward.7} parent=55 // pred_check_branch
        %2410 = sbr.rel (%p2408) target = $region60
      $region59: #{bottleneck_decoder_forward.7} parent=55 // pred_region
        %s2411 = smul.u32 8, %s20
        %p2412 = scmp.lt.s32.totalorder %s2411, 31
        %s2413 = scalar_select %p2412, %s2411, 31
        %s2414 = smul.addr %s2413, 2
        %s2415 = smul.addr %s2414, 8
        %s2416 = scalar_lea.vmem %s6, %s2415
      $region60: #{bottleneck_decoder_forward.7} parent=55 // pred_fallthru
        _
      // Predicated region
      $region61: #{bottleneck_decoder_forward.7} parent=55 // pred_check
        %p2417 = pneg %p222
      $region62: #{bottleneck_decoder_forward.7} parent=55 // pred_check_branch
        %2419 = sbr.rel (%p2417) target = $region64
      $region63: #{bottleneck_decoder_forward.7} parent=55 // pred_region
        %p2420 = scmp.lt.s32.totalorder %s20, 3
        %s2421 = scalar_select %p2420, %s20, 3
        %s2422 = smul.addr %s2421, 2
        %s2423 = scalar_lea.vmem %s7, %s2422
      $region64: #{bottleneck_decoder_forward.7} parent=55 // pred_fallthru
        _
    $region56: #{bottleneck_decoder_forward.7} parent=5 // pred_fallthru
      _
  $region6: #{bottleneck_decoder_forward.7} parent=0 // loop_footer
    %s18 = sadd.s32 1, %s14
  $region7: #{bottleneck_decoder_forward.7} parent=0 // loop_footer_branch
    %13 = sbr.rel target = $region3
  $region8: #{bottleneck_decoder_forward.7} parent=0 // loop_exit
    _

</llo_original>
